<compile_context>
chip_gen: v5e
topology: v5e:2x2
jax: 0.10.0
libtpu: 0.0.40
codegen_flags: <defaults>
</compile_context>

<pallas_src>
import jax
import jax.numpy as jnp
from jax.experimental import pallas as pl
from jax.experimental.pallas import tpu as pltpu

EPS = 1e-5


def _same_pads(k):
    """PyTorch padding='same' (and XLA SAME) low/high pads for kernel size k."""
    total = k - 1
    lo = total // 2
    return lo, total - lo


def _round_up(x, m):
    return (x + m - 1) // m * m


def _padded_bytes(shape, dtype):
    """Bytes of a VMEM buffer after (sublane, 128-lane) layout padding."""
    item = jnp.dtype(dtype).itemsize
    subl = {4: 8, 2: 16, 1: 32}.get(item, 8)
    dims = list(shape)
    if dims:
        dims[-1] = _round_up(dims[-1], 128)
    if len(dims) >= 2:
        dims[-2] = _round_up(dims[-2], subl)
    n = 1
    for d in dims:
        n *= d
    return n * item


def _tpu_env():
    """(physical VMEM bytes, has-2-TensorCores?) with safe fallbacks."""
    vmem_cap = 64 << 20          # conservative default (v7x per-TC VMEM)
    megacore = False
    try:
        vmem_cap = int(pltpu.get_tpu_info().vmem_capacity_bytes)
    except Exception:
        pass
    try:
        kind = jax.devices()[0].device_kind.lower()
        megacore = any(s in kind for s in ("v4", "v5p", "7x", "v7"))
    except Exception:
        pass
    return vmem_cap, megacore


def _tile_vmem_bytes(bt, Hp, Wp, Cin, H, W, K, Cout_pad):
    """Layout-padded VMEM footprint of one grid step with batch tile bt."""
    rows = bt * H * W
    b = 0
    b += 2 * _padded_bytes((bt, Hp, Wp, Cin), jnp.bfloat16)   # input  (double buf)
    b += 2 * _padded_bytes((rows, Cout_pad), jnp.float32)     # output (double buf)
    b += 2 * _padded_bytes((K, Cout_pad), jnp.bfloat16)       # weight (double buf)
    b += 4 * _padded_bytes((1, Cout_pad), jnp.float32)        # scale + shift
    b += _padded_bytes((rows, K), jnp.bfloat16)               # im2col scratch
    b += _padded_bytes((rows, Cout_pad), jnp.float32)         # matmul result temp
    b += _padded_bytes((bt, H, W, Cin), jnp.bfloat16)         # tap-slice temp
    return b


def _pick_batch_tile(batch, bytes_fn, budget, prefer_split):
    """Largest batch divisor whose footprint fits `budget`.  On megacore parts,
    prefer >=2 grid steps (when possible) so the 'parallel' batch axis can shard
    across the two TensorCores; on single-TC chips just take the biggest tile."""
    divisors = [t for t in range(1, batch + 1) if batch % t == 0]
    fitting = [t for t in divisors if bytes_fn(t) <= budget]
    if not fitting:
        return 1
    best = max(fitting)
    if prefer_split and best == batch and batch > 1:
        smaller = [t for t in fitting if t < batch]
        if smaller:
            best = max(smaller)
    return best


def _make_kernel(KH, KW, H, W, Cin):
    """Fused Conv('same') -> folded-BN affine -> ReLU for one batch tile."""

    def kernel(x_ref, w_ref, scale_ref, shift_ref, o_ref, col_ref):
        # x_ref:     (B_TILE, Hp, Wp, Cin)        bf16, spatially pre-padded NHWC
        # w_ref:     (KH*KW*Cin, Cout_pad)        bf16 im2col weight matrix
        # scale_ref: (1, Cout_pad)                f32 gamma * rsqrt(var+eps)
        # shift_ref: (1, Cout_pad)                f32 beta + (b_conv-mean)*scale
        # o_ref:     (B_TILE*H*W, Cout_pad)       f32 output rows, (b,h,w)-major
        # col_ref:   (B_TILE*H*W, KH*KW*Cin)      bf16 im2col scratch (VMEM)
        bt = x_ref.shape[0]
        rows = bt * H * W

        # --- im2col: pack every filter tap into one bf16 LHS slab -------------
        for kh in range(KH):
            for kw in range(KW):
                t = kh * KW + kw
                xs = x_ref[:, kh:kh + H, kw:kw + W, :]        # (bt, H, W, Cin)
                col_ref[:, t * Cin:(t + 1) * Cin] = xs.reshape(rows, Cin)

        # --- single big-K MXU matmul, f32 accumulation -------------------------
        acc = jnp.dot(col_ref[...], w_ref[...],
                      preferred_element_type=jnp.float32)     # (rows, Cout_pad)

        # --- folded conv-bias + BatchNorm affine, then ReLU ---------------------
        y = acc * scale_ref[...] + shift_ref[...]
        o_ref[...] = jnp.maximum(y, 0.0).astype(o_ref.dtype)

    return kernel


@jax.jit
def conv_block(x_nchw, w_oihw, conv_b, gamma, beta, run_mean, run_var):
    """Fused Conv2d(padding='same') + BatchNorm2d(eval) + ReLU.  NCHW in / NCHW out."""
    B, Cin, H, W = x_nchw.shape
    Cout, _, KH, KW = w_oihw.shape
    K = KH * KW * Cin
    Cout_pad = _round_up(Cout, 128)

    # ---- host-side (XLA) prep: layout, 'same' pad, bf16 cast, BN folding ----
    ph = _same_pads(KH)
    pw = _same_pads(KW)
    x_nhwc = jnp.transpose(x_nchw, (0, 2, 3, 1))
    x_pad = jnp.pad(x_nhwc, ((0, 0), ph, pw, (0, 0))).astype(jnp.bfloat16)

    # HWIO weight flattened to the im2col contraction layout, Cout lane-padded.
    w_mat = jnp.transpose(w_oihw, (2, 3, 1, 0)).reshape(K, Cout)
    w_mat = jnp.pad(w_mat, ((0, 0), (0, Cout_pad - Cout))).astype(jnp.bfloat16)

    inv_std = jax.lax.rsqrt(run_var.astype(jnp.float32) + EPS)
    scale = gamma.astype(jnp.float32) * inv_std
    shift = (beta.astype(jnp.float32)
             + (conv_b.astype(jnp.float32) - run_mean.astype(jnp.float32)) * scale)
    scale2 = jnp.pad(scale, (0, Cout_pad - Cout)).reshape(1, Cout_pad)
    shift2 = jnp.pad(shift, (0, Cout_pad - Cout)).reshape(1, Cout_pad)

    Hp, Wp = H + KH - 1, W + KW - 1

    # ---- generation-aware VMEM budgeting & batch-tile selection -------------
    vmem_cap, megacore = _tpu_env()
    budget = (45 * vmem_cap) // 100
    bytes_fn = lambda t: _tile_vmem_bytes(t, Hp, Wp, Cin, H, W, K, Cout_pad)
    b_tile = _pick_batch_tile(B, bytes_fn, budget, prefer_split=megacore)
    grid = (B // b_tile,)
    rows_tile = b_tile * H * W

    kernel = _make_kernel(KH, KW, H, W, Cin)

    out_flat = pl.pallas_call(
        kernel,
        out_shape=jax.ShapeDtypeStruct((B * H * W, Cout_pad), jnp.float32),
        grid=grid,
        in_specs=[
            pl.BlockSpec((b_tile, Hp, Wp, Cin), lambda i: (i, 0, 0, 0)),
            pl.BlockSpec((K, Cout_pad), lambda i: (0, 0)),
            pl.BlockSpec((1, Cout_pad), lambda i: (0, 0)),
            pl.BlockSpec((1, Cout_pad), lambda i: (0, 0)),
        ],
        out_specs=pl.BlockSpec((rows_tile, Cout_pad), lambda i: (i, 0)),
        scratch_shapes=[pltpu.VMEM((rows_tile, K), jnp.bfloat16)],
        compiler_params=pltpu.CompilerParams(
            dimension_semantics=("parallel",),
            vmem_limit_bytes=int(0.85 * vmem_cap)),
    )(x_pad, w_mat, scale2, shift2)

    out_nhwc = out_flat[:, :Cout].reshape(B, H, W, Cout)
    return jnp.transpose(out_nhwc, (0, 3, 1, 2))


def reference(x_nchw, w_oihw, conv_b, gamma, beta, run_mean, run_var,
              cast_bf16=False):
    """Pure-JAX reference of the PyTorch forward (eval-mode BatchNorm)."""
    x = x_nchw.astype(jnp.float32)
    w = w_oihw.astype(jnp.float32)
    if cast_bf16:  # mimic the kernel's bf16 MXU operands (f32 accumulation)
        x = x.astype(jnp.bfloat16).astype(jnp.float32)
        w = w.astype(jnp.bfloat16).astype(jnp.float32)
    KH, KW = w.shape[2], w.shape[3]
    pads = (_same_pads(KH), _same_pads(KW))
    y = jax.lax.conv_general_dilated(
        x, w, window_strides=(1, 1), padding=pads,
        dimension_numbers=('NCHW', 'OIHW', 'NCHW'))
    y = y + conv_b[None, :, None, None]
    inv_std = jax.lax.rsqrt(run_var.astype(jnp.float32) + EPS)
    y = ((y - run_mean[None, :, None, None])
         * (gamma * inv_std)[None, :, None, None]
         + beta[None, :, None, None])
    return jnp.maximum(y, 0.0)


if __name__ == "__main__":
    key = jax.random.PRNGKey(0)
    k = jax.random.split(key, 7)

    B, Cin, Cout, H, W, KH, KW = 2, 4, 8, 16, 16, 3, 3

    x = jax.random.normal(k[0], (B, Cin, H, W), jnp.float32)

    fan_in = Cin * KH * KW
    bound = 1.0 / (fan_in ** 0.5)
    w_oihw = jax.random.uniform(k[1], (Cout, Cin, KH, KW), jnp.float32, -bound, bound)
    conv_b = jax.random.uniform(k[2], (Cout,), jnp.float32, -bound, bound)

    gamma = 1.0 + 0.1 * jax.random.normal(k[3], (Cout,), jnp.float32)
    beta = 0.1 * jax.random.normal(k[4], (Cout,), jnp.float32)
    run_mean = 0.1 * jax.random.normal(k[5], (Cout,), jnp.float32)
    run_var = jax.random.uniform(k[6], (Cout,), jnp.float32, 0.5, 1.5)

    out = conv_block(x, w_oihw, conv_b, gamma, beta, run_mean, run_var)
    jax.block_until_ready(out)
    assert out.shape == (B, Cout, H, W)

    ref_bf16 = reference(x, w_oihw, conv_b, gamma, beta, run_mean, run_var,
                         cast_bf16=True)
    ref_f32 = reference(x, w_oihw, conv_b, gamma, beta, run_mean, run_var)
    assert jnp.allclose(out, ref_bf16, atol=5e-3, rtol=5e-3), \
        "mismatch vs bf16-operand reference"
    assert jnp.allclose(out, ref_f32, atol=5e-2, rtol=5e-2), \
        "mismatch vs f32 reference"

    print("KERNEL_OK")
</pallas_src>

<mosaic_0001>
module attributes {stable_mosaic.version = 11 : i64} {
  func.func @kernel(%arg0: i32, %arg1: memref<2x18x18x4xbf16, #tpu.memory_space<vmem>>, %arg2: memref<36x128xbf16, #tpu.memory_space<vmem>>, %arg3: memref<1x128xf32, #tpu.memory_space<vmem>>, %arg4: memref<1x128xf32, #tpu.memory_space<vmem>>, %arg5: memref<512x128xf32, #tpu.memory_space<vmem>>, %arg6: memref<512x36xbf16, #tpu.memory_space<vmem>>) attributes {dimension_semantics = [#tpu.dimension_semantics<parallel>], iteration_bounds = array<i64: 1>, scalar_prefetch = 0 : i64, scratch_operands = 1 : i64, tpu.core_type = #tpu.core_type<tc>, window_params = [{transform_indices = @transform_0, window_bounds = array<i64: 2, 18, 18, 4>}, {pipeline_mode = #tpu.pipeline_mode<synchronous>, transform_indices = @transform_1, window_bounds = array<i64: 36, 128>}, {pipeline_mode = #tpu.pipeline_mode<synchronous>, transform_indices = @transform_2, window_bounds = array<i64: 1, 128>}, {pipeline_mode = #tpu.pipeline_mode<synchronous>, transform_indices = @transform_3, window_bounds = array<i64: 1, 128>}, {transform_indices = @transform_4, window_bounds = array<i64: 512, 128>}]} {
    %c0 = arith.constant 0 : index
    %c0_0 = arith.constant 0 : index
    %c0_1 = arith.constant 0 : index
    %c0_2 = arith.constant 0 : index
    %0 = vector.load %arg1[%c0, %c0_0, %c0_1, %c0_2] : memref<2x18x18x4xbf16, #tpu.memory_space<vmem>>, vector<2x16x16x4xbf16>
    %1 = vector.shape_cast %0 : vector<2x16x16x4xbf16> to vector<512x4xbf16>
    %c0_3 = arith.constant 0 : index
    %c0_4 = arith.constant 0 : index
    %2 = vector.load %arg6[%c0_3, %c0_4] : memref<512x36xbf16, #tpu.memory_space<vmem>>, vector<512x4xbf16>
    tpu.vector_store %arg6[%c0_3, %c0_4], %1 {strides = array<i32>} : memref<512x36xbf16, #tpu.memory_space<vmem>>, vector<512x4xbf16>,
    %c0_5 = arith.constant 0 : index
    %c0_6 = arith.constant 0 : index
    %c1 = arith.constant 1 : index
    %c0_7 = arith.constant 0 : index
    %3 = vector.load %arg1[%c0_5, %c0_6, %c1, %c0_7] : memref<2x18x18x4xbf16, #tpu.memory_space<vmem>>, vector<2x16x16x4xbf16>
    %4 = vector.shape_cast %3 : vector<2x16x16x4xbf16> to vector<512x4xbf16>
    %c0_8 = arith.constant 0 : index
    %c4 = arith.constant 4 : index
    %5 = vector.load %arg6[%c0_8, %c4] : memref<512x36xbf16, #tpu.memory_space<vmem>>, vector<512x4xbf16>
    tpu.vector_store %arg6[%c0_8, %c4], %4 {strides = array<i32>} : memref<512x36xbf16, #tpu.memory_space<vmem>>, vector<512x4xbf16>,
    %c0_9 = arith.constant 0 : index
    %c0_10 = arith.constant 0 : index
    %c2 = arith.constant 2 : index
    %c0_11 = arith.constant 0 : index
    %6 = vector.load %arg1[%c0_9, %c0_10, %c2, %c0_11] : memref<2x18x18x4xbf16, #tpu.memory_space<vmem>>, vector<2x16x16x4xbf16>
    %7 = vector.shape_cast %6 : vector<2x16x16x4xbf16> to vector<512x4xbf16>
    %c0_12 = arith.constant 0 : index
    %c8 = arith.constant 8 : index
    %8 = vector.load %arg6[%c0_12, %c8] : memref<512x36xbf16, #tpu.memory_space<vmem>>, vector<512x4xbf16>
    tpu.vector_store %arg6[%c0_12, %c8], %7 {strides = array<i32>} : memref<512x36xbf16, #tpu.memory_space<vmem>>, vector<512x4xbf16>,
    %c0_13 = arith.constant 0 : index
    %c1_14 = arith.constant 1 : index
    %c0_15 = arith.constant 0 : index
    %c0_16 = arith.constant 0 : index
    %9 = vector.load %arg1[%c0_13, %c1_14, %c0_15, %c0_16] : memref<2x18x18x4xbf16, #tpu.memory_space<vmem>>, vector<2x16x16x4xbf16>
    %10 = vector.shape_cast %9 : vector<2x16x16x4xbf16> to vector<512x4xbf16>
    %c0_17 = arith.constant 0 : index
    %c12 = arith.constant 12 : index
    %11 = vector.load %arg6[%c0_17, %c12] : memref<512x36xbf16, #tpu.memory_space<vmem>>, vector<512x4xbf16>
    tpu.vector_store %arg6[%c0_17, %c12], %10 {strides = array<i32>} : memref<512x36xbf16, #tpu.memory_space<vmem>>, vector<512x4xbf16>,
    %c0_18 = arith.constant 0 : index
    %c1_19 = arith.constant 1 : index
    %c1_20 = arith.constant 1 : index
    %c0_21 = arith.constant 0 : index
    %12 = vector.load %arg1[%c0_18, %c1_19, %c1_20, %c0_21] : memref<2x18x18x4xbf16, #tpu.memory_space<vmem>>, vector<2x16x16x4xbf16>
    %13 = vector.shape_cast %12 : vector<2x16x16x4xbf16> to vector<512x4xbf16>
    %c0_22 = arith.constant 0 : index
    %c16 = arith.constant 16 : index
    %14 = vector.load %arg6[%c0_22, %c16] : memref<512x36xbf16, #tpu.memory_space<vmem>>, vector<512x4xbf16>
    tpu.vector_store %arg6[%c0_22, %c16], %13 {strides = array<i32>} : memref<512x36xbf16, #tpu.memory_space<vmem>>, vector<512x4xbf16>,
    %c0_23 = arith.constant 0 : index
    %c1_24 = arith.constant 1 : index
    %c2_25 = arith.constant 2 : index
    %c0_26 = arith.constant 0 : index
    %15 = vector.load %arg1[%c0_23, %c1_24, %c2_25, %c0_26] : memref<2x18x18x4xbf16, #tpu.memory_space<vmem>>, vector<2x16x16x4xbf16>
    %16 = vector.shape_cast %15 : vector<2x16x16x4xbf16> to vector<512x4xbf16>
    %c0_27 = arith.constant 0 : index
    %c20 = arith.constant 20 : index
    %17 = vector.load %arg6[%c0_27, %c20] : memref<512x36xbf16, #tpu.memory_space<vmem>>, vector<512x4xbf16>
    tpu.vector_store %arg6[%c0_27, %c20], %16 {strides = array<i32>} : memref<512x36xbf16, #tpu.memory_space<vmem>>, vector<512x4xbf16>,
    %c0_28 = arith.constant 0 : index
    %c2_29 = arith.constant 2 : index
    %c0_30 = arith.constant 0 : index
    %c0_31 = arith.constant 0 : index
    %18 = vector.load %arg1[%c0_28, %c2_29, %c0_30, %c0_31] : memref<2x18x18x4xbf16, #tpu.memory_space<vmem>>, vector<2x16x16x4xbf16>
    %19 = vector.shape_cast %18 : vector<2x16x16x4xbf16> to vector<512x4xbf16>
    %c0_32 = arith.constant 0 : index
    %c24 = arith.constant 24 : index
    %20 = vector.load %arg6[%c0_32, %c24] : memref<512x36xbf16, #tpu.memory_space<vmem>>, vector<512x4xbf16>
    tpu.vector_store %arg6[%c0_32, %c24], %19 {strides = array<i32>} : memref<512x36xbf16, #tpu.memory_space<vmem>>, vector<512x4xbf16>,
    %c0_33 = arith.constant 0 : index
    %c2_34 = arith.constant 2 : index
    %c1_35 = arith.constant 1 : index
    %c0_36 = arith.constant 0 : index
    %21 = vector.load %arg1[%c0_33, %c2_34, %c1_35, %c0_36] : memref<2x18x18x4xbf16, #tpu.memory_space<vmem>>, vector<2x16x16x4xbf16>
    %22 = vector.shape_cast %21 : vector<2x16x16x4xbf16> to vector<512x4xbf16>
    %c0_37 = arith.constant 0 : index
    %c28 = arith.constant 28 : index
    %23 = vector.load %arg6[%c0_37, %c28] : memref<512x36xbf16, #tpu.memory_space<vmem>>, vector<512x4xbf16>
    tpu.vector_store %arg6[%c0_37, %c28], %22 {strides = array<i32>} : memref<512x36xbf16, #tpu.memory_space<vmem>>, vector<512x4xbf16>,
    %c0_38 = arith.constant 0 : index
    %c2_39 = arith.constant 2 : index
    %c2_40 = arith.constant 2 : index
    %c0_41 = arith.constant 0 : index
    %24 = vector.load %arg1[%c0_38, %c2_39, %c2_40, %c0_41] : memref<2x18x18x4xbf16, #tpu.memory_space<vmem>>, vector<2x16x16x4xbf16>
    %25 = vector.shape_cast %24 : vector<2x16x16x4xbf16> to vector<512x4xbf16>
    %c0_42 = arith.constant 0 : index
    %c32 = arith.constant 32 : index
    %26 = vector.load %arg6[%c0_42, %c32] : memref<512x36xbf16, #tpu.memory_space<vmem>>, vector<512x4xbf16>
    tpu.vector_store %arg6[%c0_42, %c32], %25 {strides = array<i32>} : memref<512x36xbf16, #tpu.memory_space<vmem>>, vector<512x4xbf16>,
    %c0_43 = arith.constant 0 : index
    %c0_44 = arith.constant 0 : index
    %27 = vector.load %arg6[%c0_43, %c0_44] : memref<512x36xbf16, #tpu.memory_space<vmem>>, vector<512x36xbf16>
    %c0_45 = arith.constant 0 : index
    %c0_46 = arith.constant 0 : index
    %28 = vector.load %arg2[%c0_45, %c0_46] : memref<36x128xbf16, #tpu.memory_space<vmem>>, vector<36x128xbf16>
    %cst = arith.constant dense<0.000000e+00> : vector<512x128xf32>
    %29 = tpu.matmul %27, %28, %cst {dimension_numbers = #tpu.dot_dimension_numbers<[1], [0], [0], [1], [0, 0, 1, 1], [], []>} : vector<512x36xbf16>, vector<36x128xbf16>, vector<512x128xf32> -> vector<512x128xf32>
    %c0_47 = arith.constant 0 : index
    %c0_48 = arith.constant 0 : index
    %30 = vector.load %arg3[%c0_47, %c0_48] : memref<1x128xf32, #tpu.memory_space<vmem>>, vector<1x128xf32>
    %31 = vector.broadcast %30 : vector<1x128xf32> to vector<512x128xf32>
    %32 = arith.mulf %29, %31 : vector<512x128xf32>
    %c0_49 = arith.constant 0 : index
    %c0_50 = arith.constant 0 : index
    %33 = vector.load %arg4[%c0_49, %c0_50] : memref<1x128xf32, #tpu.memory_space<vmem>>, vector<1x128xf32>
    %34 = vector.broadcast %33 : vector<1x128xf32> to vector<512x128xf32>
    %35 = arith.addf %32, %34 : vector<512x128xf32>
    %cst_51 = arith.constant 0.000000e+00 : f32
    %36 = vector.broadcast %cst_51 : f32 to vector<512x128xf32>
    %37 = arith.maximumf %35, %36 : vector<512x128xf32>
    %c0_52 = arith.constant 0 : index
    %c0_53 = arith.constant 0 : index
    %38 = vector.load %arg5[%c0_52, %c0_53] : memref<512x128xf32, #tpu.memory_space<vmem>>, vector<512x128xf32>
    tpu.vector_store %arg5[%c0_52, %c0_53], %37 {strides = array<i32>} : memref<512x128xf32, #tpu.memory_space<vmem>>, vector<512x128xf32>,
    return
  }
  func.func @transform_0(%arg0: i32) -> (i32, i32, i32, i32) {
    %c0_i32 = arith.constant 0 : i32
    %c0_i32_0 = arith.constant 0 : i32
    %c0_i32_1 = arith.constant 0 : i32
    %c0_i32_2 = arith.constant 0 : i32
    return %arg0, %c0_i32, %c0_i32_0, %c0_i32_1 : i32, i32, i32, i32
  }
  func.func @transform_1(%arg0: i32) -> (i32, i32) {
    %c0_i32 = arith.constant 0 : i32
    %c0_i32_0 = arith.constant 0 : i32
    %c0_i32_1 = arith.constant 0 : i32
    return %c0_i32, %c0_i32_0 : i32, i32
  }
  func.func @transform_2(%arg0: i32) -> (i32, i32) {
    %c0_i32 = arith.constant 0 : i32
    %c0_i32_0 = arith.constant 0 : i32
    %c0_i32_1 = arith.constant 0 : i32
    return %c0_i32, %c0_i32_0 : i32, i32
  }
  func.func @transform_3(%arg0: i32) -> (i32, i32) {
    %c0_i32 = arith.constant 0 : i32
    %c0_i32_0 = arith.constant 0 : i32
    %c0_i32_1 = arith.constant 0 : i32
    return %c0_i32, %c0_i32_0 : i32, i32
  }
  func.func @transform_4(%arg0: i32) -> (i32, i32) {
    %c0_i32 = arith.constant 0 : i32
    %c0_i32_0 = arith.constant 0 : i32
    return %arg0, %c0_i32 : i32, i32
  }
}

</mosaic_0001>

<llo_original>
// kernel: conv_block.1
$region0: #{conv_block.1}
  #allocation0 [shape = 'u32[]', space=smem, size = 0x4, offset = 0x4, fixed_abs, tag = 'smem constant byte address 0x4 - core index']
  #allocation1 [shape = 'u32[72,128]{1,0:T(1,128)}', space=vmem, size = 0x9000, scoped, tag = 'internal scratch']
  #allocation2 [shape = 'bf16[512,36]{1,0:T(8,128)(2,1)}', space=vmem, size = 0x20000, scoped, tag = 'scratch operand']
  %s0 = inlined_call_operand.vmem [shape: bf16[2,18,18,4], index: 0, kind: input, shape index: {}]
  %s1 = inlined_call_operand.vmem [shape: bf16[36,128], index: 1, kind: input, shape index: {}]
  %s2 = inlined_call_operand.vmem [shape: f32[1,128], index: 2, kind: input, shape index: {}]
  %s3 = inlined_call_operand.vmem [shape: f32[1,128], index: 3, kind: input, shape index: {}]
  %s4 = inlined_call_operand.vmem [shape: f32[512,128], index: 4, kind: output, shape index: {}]
  %s5 = sld [smem:[#allocation0]]
  $region26: #{conv_block.1} parent=0
    _
  %s7 = ssub.s32 1, %s5
  %s8 = scalar_select 0, %s7, %s5
  // Predicated region
  $region2: #{conv_block.1} parent=0 // pred_check
    _
  $region3: #{conv_block.1} parent=0 // pred_check_branch
    %10 = sbr.rel (0) target = $region5
  $region4: #{conv_block.1} parent=0 // pred_region
    _
  $region5: #{conv_block.1} parent=0 // pred_fallthru
    _
  // Predicated region
  $region6: #{conv_block.1} parent=0 // pred_check
    _
  $region7: #{conv_block.1} parent=0 // pred_check_branch
    %12 = sbr.rel (0) target = $region9
  $region8: #{conv_block.1} parent=0 // pred_region
    _
  $region9: #{conv_block.1} parent=0 // pred_fallthru
    _
  // Predicated region
  $region10: #{conv_block.1} parent=0 // pred_check
    _
  $region11: #{conv_block.1} parent=0 // pred_check_branch
    %14 = sbr.rel (0) target = $region13
  $region12: #{conv_block.1} parent=0 // pred_region
    _
  $region13: #{conv_block.1} parent=0 // pred_fallthru
    _
  // Predicated region
  $region14: #{conv_block.1} parent=0 // pred_check
    _
  $region15: #{conv_block.1} parent=0 // pred_check_branch
    %16 = sbr.rel (0) target = $region17
  $region16: #{conv_block.1} parent=0 // pred_region
    _
  $region17: #{conv_block.1} parent=0 // pred_fallthru
    _
  %v18 = vld [vmem:[%s0] sm:$0xf]
  %v19 = vld [vmem:[%s0 + $0x4] sm:$0xf]
  %v20 = vld [vmem:[%s0 + $0xc] sm:$0xf]
  %v21 = vld [vmem:[%s0 + $0x10] sm:$0xf]
  %v22 = vld [vmem:[%s0 + $0x18] sm:$0xf]
  %v23 = vld [vmem:[%s0 + $0x1c] sm:$0xf]
  %v24 = vld [vmem:[%s0 + $0x24] sm:$0xf]
  %v25 = vld [vmem:[%s0 + $0x28] sm:$0xf]
  %v26 = vld [vmem:[%s0 + $0x30] sm:$0xf]
  %v27 = vld [vmem:[%s0 + $0x34] sm:$0xf]
  %v28 = vld [vmem:[%s0 + $0x3c] sm:$0xf]
  %v29 = vld [vmem:[%s0 + $0x40] sm:$0xf]
  %v30 = vld [vmem:[%s0 + $0x48] sm:$0xf]
  %v31 = vld [vmem:[%s0 + $0x4c] sm:$0xf]
  %v32 = vld [vmem:[%s0 + $0x54] sm:$0xf]
  %v33 = vld [vmem:[%s0 + $0x58] sm:$0xf]
  %v34 = vld [vmem:[%s0 + $0x60] sm:$0xf]
  %v35 = vld [vmem:[%s0 + $0x64] sm:$0xf]
  %v36 = vld [vmem:[%s0 + $0x6c] sm:$0xf]
  %v37 = vld [vmem:[%s0 + $0x70] sm:$0xf]
  %v38 = vld [vmem:[%s0 + $0x78] sm:$0xf]
  %v39 = vld [vmem:[%s0 + $0x7c] sm:$0xf]
  %v40 = vld [vmem:[%s0 + $0x84] sm:$0xf]
  %v41 = vld [vmem:[%s0 + $0x88] sm:$0xf]
  %v42 = vld [vmem:[%s0 + $0x90] sm:$0xf]
  %v43 = vld [vmem:[%s0 + $0x94] sm:$0xf]
  %v44 = vld [vmem:[%s0 + $0x9c] sm:$0xf]
  %v45 = vld [vmem:[%s0 + $0xa0] sm:$0xf]
  %v46 = vld [vmem:[%s0 + $0xa8] sm:$0xf]
  %v47 = vld [vmem:[%s0 + $0xac] sm:$0xf]
  %v48 = vld [vmem:[%s0 + $0xb4] sm:$0xf]
  %v49 = vld [vmem:[%s0 + $0xb8] sm:$0xf]
  %v50 = vld [vmem:[%s0 + $0xd8] sm:$0xf]
  %v51 = vld [vmem:[%s0 + $0xdc] sm:$0xf]
  %v52 = vld [vmem:[%s0 + $0xe4] sm:$0xf]
  %v53 = vld [vmem:[%s0 + $0xe8] sm:$0xf]
  %v54 = vld [vmem:[%s0 + $0xf0] sm:$0xf]
  %v55 = vld [vmem:[%s0 + $0xf4] sm:$0xf]
  %v56 = vld [vmem:[%s0 + $0xfc] sm:$0xf]
  %v57 = vld [vmem:[%s0 + $0x100] sm:$0xf]
  %v58 = vld [vmem:[%s0 + $0x108] sm:$0xf]
  %v59 = vld [vmem:[%s0 + $0x10c] sm:$0xf]
  %v60 = vld [vmem:[%s0 + $0x114] sm:$0xf]
  %v61 = vld [vmem:[%s0 + $0x118] sm:$0xf]
  %v62 = vld [vmem:[%s0 + $0x120] sm:$0xf]
  %v63 = vld [vmem:[%s0 + $0x124] sm:$0xf]
  %v64 = vld [vmem:[%s0 + $0x12c] sm:$0xf]
  %v65 = vld [vmem:[%s0 + $0x130] sm:$0xf]
  %v66 = vld [vmem:[%s0 + $0x138] sm:$0xf]
  %v67 = vld [vmem:[%s0 + $0x13c] sm:$0xf]
  %v68 = vld [vmem:[%s0 + $0x144] sm:$0xf]
  %v69 = vld [vmem:[%s0 + $0x148] sm:$0xf]
  %v70 = vld [vmem:[%s0 + $0x150] sm:$0xf]
  %v71 = vld [vmem:[%s0 + $0x154] sm:$0xf]
  %v72 = vld [vmem:[%s0 + $0x15c] sm:$0xf]
  %v73 = vld [vmem:[%s0 + $0x160] sm:$0xf]
  %v74 = vld [vmem:[%s0 + $0x168] sm:$0xf]
  %v75 = vld [vmem:[%s0 + $0x16c] sm:$0xf]
  %v76 = vld [vmem:[%s0 + $0x174] sm:$0xf]
  %v77 = vld [vmem:[%s0 + $0x178] sm:$0xf]
  %v78 = vld [vmem:[%s0 + $0x180] sm:$0xf]
  %v79 = vld [vmem:[%s0 + $0x184] sm:$0xf]
  %v80 = vld [vmem:[%s0 + $0x18c] sm:$0xf]
  %v81 = vld [vmem:[%s0 + $0x190] sm:$0xf]
  %vm82 = vcmask 27648
  %83 = vst.msk [vmem:[#allocation2] sm:$0xf] %vm82, %v18
  %84 = vst.msk [vmem:[#allocation2 + $0x4] sm:$0xf] %vm82, %v19
  %85 = vst.msk [vmem:[#allocation2 + $0x8] sm:$0xf] %vm82, %v20
  %86 = vst.msk [vmem:[#allocation2 + $0xc] sm:$0xf] %vm82, %v21
  %87 = vst.msk [vmem:[#allocation2 + $0x10] sm:$0xf] %vm82, %v22
  %88 = vst.msk [vmem:[#allocation2 + $0x14] sm:$0xf] %vm82, %v23
  %89 = vst.msk [vmem:[#allocation2 + $0x18] sm:$0xf] %vm82, %v24
  %90 = vst.msk [vmem:[#allocation2 + $0x1c] sm:$0xf] %vm82, %v25
  %91 = vst.msk [vmem:[#allocation2 + $0x20] sm:$0xf] %vm82, %v26
  %92 = vst.msk [vmem:[#allocation2 + $0x24] sm:$0xf] %vm82, %v27
  %93 = vst.msk [vmem:[#allocation2 + $0x28] sm:$0xf] %vm82, %v28
  %94 = vst.msk [vmem:[#allocation2 + $0x2c] sm:$0xf] %vm82, %v29
  %95 = vst.msk [vmem:[#allocation2 + $0x30] sm:$0xf] %vm82, %v30
  %96 = vst.msk [vmem:[#allocation2 + $0x34] sm:$0xf] %vm82, %v31
  %97 = vst.msk [vmem:[#allocation2 + $0x38] sm:$0xf] %vm82, %v32
  %98 = vst.msk [vmem:[#allocation2 + $0x3c] sm:$0xf] %vm82, %v33
  %99 = vst.msk [vmem:[#allocation2 + $0x40] sm:$0xf] %vm82, %v34
  %100 = vst.msk [vmem:[#allocation2 + $0x44] sm:$0xf] %vm82, %v35
  %101 = vst.msk [vmem:[#allocation2 + $0x48] sm:$0xf] %vm82, %v36
  %102 = vst.msk [vmem:[#allocation2 + $0x4c] sm:$0xf] %vm82, %v37
  %103 = vst.msk [vmem:[#allocation2 + $0x50] sm:$0xf] %vm82, %v38
  %104 = vst.msk [vmem:[#allocation2 + $0x54] sm:$0xf] %vm82, %v39
  %105 = vst.msk [vmem:[#allocation2 + $0x58] sm:$0xf] %vm82, %v40
  %106 = vst.msk [vmem:[#allocation2 + $0x5c] sm:$0xf] %vm82, %v41
  %107 = vst.msk [vmem:[#allocation2 + $0x60] sm:$0xf] %vm82, %v42
  %108 = vst.msk [vmem:[#allocation2 + $0x64] sm:$0xf] %vm82, %v43
  %109 = vst.msk [vmem:[#allocation2 + $0x68] sm:$0xf] %vm82, %v44
  %110 = vst.msk [vmem:[#allocation2 + $0x6c] sm:$0xf] %vm82, %v45
  %111 = vst.msk [vmem:[#allocation2 + $0x70] sm:$0xf] %vm82, %v46
  %112 = vst.msk [vmem:[#allocation2 + $0x74] sm:$0xf] %vm82, %v47
  %113 = vst.msk [vmem:[#allocation2 + $0x78] sm:$0xf] %vm82, %v48
  %114 = vst.msk [vmem:[#allocation2 + $0x7c] sm:$0xf] %vm82, %v49
  %115 = vst.msk [vmem:[#allocation2 + $0x80] sm:$0xf] %vm82, %v50
  %116 = vst.msk [vmem:[#allocation2 + $0x84] sm:$0xf] %vm82, %v51
  %117 = vst.msk [vmem:[#allocation2 + $0x88] sm:$0xf] %vm82, %v52
  %118 = vst.msk [vmem:[#allocation2 + $0x8c] sm:$0xf] %vm82, %v53
  %119 = vst.msk [vmem:[#allocation2 + $0x90] sm:$0xf] %vm82, %v54
  %120 = vst.msk [vmem:[#allocation2 + $0x94] sm:$0xf] %vm82, %v55
  %121 = vst.msk [vmem:[#allocation2 + $0x98] sm:$0xf] %vm82, %v56
  %122 = vst.msk [vmem:[#allocation2 + $0x9c] sm:$0xf] %vm82, %v57
  %123 = vst.msk [vmem:[#allocation2 + $0xa0] sm:$0xf] %vm82, %v58
  %124 = vst.msk [vmem:[#allocation2 + $0xa4] sm:$0xf] %vm82, %v59
  %125 = vst.msk [vmem:[#allocation2 + $0xa8] sm:$0xf] %vm82, %v60
  %126 = vst.msk [vmem:[#allocation2 + $0xac] sm:$0xf] %vm82, %v61
  %127 = vst.msk [vmem:[#allocation2 + $0xb0] sm:$0xf] %vm82, %v62
  %128 = vst.msk [vmem:[#allocation2 + $0xb4] sm:$0xf] %vm82, %v63
  %129 = vst.msk [vmem:[#allocation2 + $0xb8] sm:$0xf] %vm82, %v64
  %130 = vst.msk [vmem:[#allocation2 + $0xbc] sm:$0xf] %vm82, %v65
  %131 = vst.msk [vmem:[#allocation2 + $0xc0] sm:$0xf] %vm82, %v66
  %132 = vst.msk [vmem:[#allocation2 + $0xc4] sm:$0xf] %vm82, %v67
  %133 = vst.msk [vmem:[#allocation2 + $0xc8] sm:$0xf] %vm82, %v68
  %134 = vst.msk [vmem:[#allocation2 + $0xcc] sm:$0xf] %vm82, %v69
  %135 = vst.msk [vmem:[#allocation2 + $0xd0] sm:$0xf] %vm82, %v70
  %136 = vst.msk [vmem:[#allocation2 + $0xd4] sm:$0xf] %vm82, %v71
  %137 = vst.msk [vmem:[#allocation2 + $0xd8] sm:$0xf] %vm82, %v72
  %138 = vst.msk [vmem:[#allocation2 + $0xdc] sm:$0xf] %vm82, %v73
  %139 = vst.msk [vmem:[#allocation2 + $0xe0] sm:$0xf] %vm82, %v74
  %140 = vst.msk [vmem:[#allocation2 + $0xe4] sm:$0xf] %vm82, %v75
  %141 = vst.msk [vmem:[#allocation2 + $0xe8] sm:$0xf] %vm82, %v76
  %142 = vst.msk [vmem:[#allocation2 + $0xec] sm:$0xf] %vm82, %v77
  %143 = vst.msk [vmem:[#allocation2 + $0xf0] sm:$0xf] %vm82, %v78
  %144 = vst.msk [vmem:[#allocation2 + $0xf4] sm:$0xf] %vm82, %v79
  %145 = vst.msk [vmem:[#allocation2 + $0xf8] sm:$0xf] %vm82, %v80
  %146 = vst.msk [vmem:[#allocation2 + $0xfc] sm:$0xf] %vm82, %v81
  %v147 = vld [vmem:[%s0] sm:$0xf]
  %v148 = vld [vmem:[%s0 + $0x4] sm:$0xf]
  %v149 = vld [vmem:[%s0 + $0x8] sm:$0x1]
  %v150 = vld [vmem:[%s0 + $0xc] sm:$0xf]
  %v151 = vld [vmem:[%s0 + $0x10] sm:$0xf]
  %v152 = vld [vmem:[%s0 + $0x14] sm:$0x1]
  %v153 = vld [vmem:[%s0 + $0x18] sm:$0xf]
  %v154 = vld [vmem:[%s0 + $0x1c] sm:$0xf]
  %v155 = vld [vmem:[%s0 + $0x20] sm:$0x1]
  %v156 = vld [vmem:[%s0 + $0x24] sm:$0xf]
  %v157 = vld [vmem:[%s0 + $0x28] sm:$0xf]
  %v158 = vld [vmem:[%s0 + $0x2c] sm:$0x1]
  %v159 = vld [vmem:[%s0 + $0x30] sm:$0xf]
  %v160 = vld [vmem:[%s0 + $0x34] sm:$0xf]
  %v161 = vld [vmem:[%s0 + $0x38] sm:$0x1]
  %v162 = vld [vmem:[%s0 + $0x3c] sm:$0xf]
  %v163 = vld [vmem:[%s0 + $0x40] sm:$0xf]
  %v164 = vld [vmem:[%s0 + $0x44] sm:$0x1]
  %v165 = vld [vmem:[%s0 + $0x48] sm:$0xf]
  %v166 = vld [vmem:[%s0 + $0x4c] sm:$0xf]
  %v167 = vld [vmem:[%s0 + $0x50] sm:$0x1]
  %v168 = vld [vmem:[%s0 + $0x54] sm:$0xf]
  %v169 = vld [vmem:[%s0 + $0x58] sm:$0xf]
  %v170 = vld [vmem:[%s0 + $0x5c] sm:$0x1]
  %v171 = vld [vmem:[%s0 + $0x60] sm:$0xf]
  %v172 = vld [vmem:[%s0 + $0x64] sm:$0xf]
  %v173 = vld [vmem:[%s0 + $0x68] sm:$0x1]
  %v174 = vld [vmem:[%s0 + $0x6c] sm:$0xf]
  %v175 = vld [vmem:[%s0 + $0x70] sm:$0xf]
  %v176 = vld [vmem:[%s0 + $0x74] sm:$0x1]
  %v177 = vld [vmem:[%s0 + $0x78] sm:$0xf]
  %v178 = vld [vmem:[%s0 + $0x7c] sm:$0xf]
  %v179 = vld [vmem:[%s0 + $0x80] sm:$0x1]
  %v180 = vld [vmem:[%s0 + $0x84] sm:$0xf]
  %v181 = vld [vmem:[%s0 + $0x88] sm:$0xf]
  %v182 = vld [vmem:[%s0 + $0x8c] sm:$0x1]
  %v183 = vld [vmem:[%s0 + $0x90] sm:$0xf]
  %v184 = vld [vmem:[%s0 + $0x94] sm:$0xf]
  %v185 = vld [vmem:[%s0 + $0x98] sm:$0x1]
  %v186 = vld [vmem:[%s0 + $0x9c] sm:$0xf]
  %v187 = vld [vmem:[%s0 + $0xa0] sm:$0xf]
  %v188 = vld [vmem:[%s0 + $0xa4] sm:$0x1]
  %v189 = vld [vmem:[%s0 + $0xa8] sm:$0xf]
  %v190 = vld [vmem:[%s0 + $0xac] sm:$0xf]
  %v191 = vld [vmem:[%s0 + $0xb0] sm:$0x1]
  %v192 = vld [vmem:[%s0 + $0xb4] sm:$0xf]
  %v193 = vld [vmem:[%s0 + $0xb8] sm:$0xf]
  %v194 = vld [vmem:[%s0 + $0xbc] sm:$0x1]
  %v195 = vld [vmem:[%s0 + $0xd8] sm:$0xf]
  %v196 = vld [vmem:[%s0 + $0xdc] sm:$0xf]
  %v197 = vld [vmem:[%s0 + $0xe0] sm:$0x1]
  %v198 = vld [vmem:[%s0 + $0xe4] sm:$0xf]
  %v199 = vld [vmem:[%s0 + $0xe8] sm:$0xf]
  %v200 = vld [vmem:[%s0 + $0xec] sm:$0x1]
  %v201 = vld [vmem:[%s0 + $0xf0] sm:$0xf]
  %v202 = vld [vmem:[%s0 + $0xf4] sm:$0xf]
  %v203 = vld [vmem:[%s0 + $0xf8] sm:$0x1]
  %v204 = vld [vmem:[%s0 + $0xfc] sm:$0xf]
  %v205 = vld [vmem:[%s0 + $0x100] sm:$0xf]
  %v206 = vld [vmem:[%s0 + $0x104] sm:$0x1]
  %v207 = vld [vmem:[%s0 + $0x108] sm:$0xf]
  %v208 = vld [vmem:[%s0 + $0x10c] sm:$0xf]
  %v209 = vld [vmem:[%s0 + $0x110] sm:$0x1]
  %v210 = vld [vmem:[%s0 + $0x114] sm:$0xf]
  %v211 = vld [vmem:[%s0 + $0x118] sm:$0xf]
  %v212 = vld [vmem:[%s0 + $0x11c] sm:$0x1]
  %v213 = vld [vmem:[%s0 + $0x120] sm:$0xf]
  %v214 = vld [vmem:[%s0 + $0x124] sm:$0xf]
  %v215 = vld [vmem:[%s0 + $0x128] sm:$0x1]
  %v216 = vld [vmem:[%s0 + $0x12c] sm:$0xf]
  %v217 = vld [vmem:[%s0 + $0x130] sm:$0xf]
  %v218 = vld [vmem:[%s0 + $0x134] sm:$0x1]
  %v219 = vld [vmem:[%s0 + $0x138] sm:$0xf]
  %v220 = vld [vmem:[%s0 + $0x13c] sm:$0xf]
  %v221 = vld [vmem:[%s0 + $0x140] sm:$0x1]
  %v222 = vld [vmem:[%s0 + $0x144] sm:$0xf]
  %v223 = vld [vmem:[%s0 + $0x148] sm:$0xf]
  %v224 = vld [vmem:[%s0 + $0x14c] sm:$0x1]
  %v225 = vld [vmem:[%s0 + $0x150] sm:$0xf]
  %v226 = vld [vmem:[%s0 + $0x154] sm:$0xf]
  %v227 = vld [vmem:[%s0 + $0x158] sm:$0x1]
  %v228 = vld [vmem:[%s0 + $0x15c] sm:$0xf]
  %v229 = vld [vmem:[%s0 + $0x160] sm:$0xf]
  %v230 = vld [vmem:[%s0 + $0x164] sm:$0x1]
  %v231 = vld [vmem:[%s0 + $0x168] sm:$0xf]
  %v232 = vld [vmem:[%s0 + $0x16c] sm:$0xf]
  %v233 = vld [vmem:[%s0 + $0x170] sm:$0x1]
  %v234 = vld [vmem:[%s0 + $0x174] sm:$0xf]
  %v235 = vld [vmem:[%s0 + $0x178] sm:$0xf]
  %v236 = vld [vmem:[%s0 + $0x17c] sm:$0x1]
  %v237 = vld [vmem:[%s0 + $0x180] sm:$0xf]
  %v238 = vld [vmem:[%s0 + $0x184] sm:$0xf]
  %v239 = vld [vmem:[%s0 + $0x188] sm:$0x1]
  %v240 = vld [vmem:[%s0 + $0x18c] sm:$0xf]
  %v241 = vld [vmem:[%s0 + $0x190] sm:$0xf]
  %v242 = vld [vmem:[%s0 + $0x194] sm:$0x1]
  %vm243 = vsmask.f32 3328
  %vm244 = vsmask.f32 7440
  %vm245 = vmor %vm243, %vm244
  %v247 = vshrl.u32 %v147, 16
  %v249 = vrot.slane %v247, 4
  %v250 = vshll.u32 %v147, 16
  %v252 = vrot.slane %v250, 5
  %v253 = vor.u32 %v249, %v252
  %v254 = vrot.slane %v253, 4
  %v256 = vshll.u32 %v148, 16
  %v258 = vrot.slane %v256, 5
  %v259 = vsel %vm245, %v254, %v258
  %v260 = vshrl.u32 %v148, 16
  %v262 = vrot.slane %v260, 4
  %v263 = vor.u32 %v262, %v258
  %v264 = vrot.slane %v263, 4
  %v266 = vshll.u32 %v149, 16
  %v268 = vrot.slane %v266, 5
  %v269 = vsel %vm245, %v264, %v268
  %v271 = vshrl.u32 %v150, 16
  %v273 = vrot.slane %v271, 4
  %v274 = vshll.u32 %v150, 16
  %v276 = vrot.slane %v274, 5
  %v277 = vor.u32 %v273, %v276
  %v278 = vrot.slane %v277, 4
  %v280 = vshll.u32 %v151, 16
  %v282 = vrot.slane %v280, 5
  %v283 = vsel %vm245, %v278, %v282
  %v284 = vshrl.u32 %v151, 16
  %v286 = vrot.slane %v284, 4
  %v287 = vor.u32 %v286, %v282
  %v288 = vrot.slane %v287, 4
  %v290 = vshll.u32 %v152, 16
  %v292 = vrot.slane %v290, 5
  %v293 = vsel %vm245, %v288, %v292
  %v295 = vshrl.u32 %v153, 16
  %v297 = vrot.slane %v295, 4
  %v298 = vshll.u32 %v153, 16
  %v300 = vrot.slane %v298, 5
  %v301 = vor.u32 %v297, %v300
  %v302 = vrot.slane %v301, 4
  %v304 = vshll.u32 %v154, 16
  %v306 = vrot.slane %v304, 5
  %v307 = vsel %vm245, %v302, %v306
  %v308 = vshrl.u32 %v154, 16
  %v310 = vrot.slane %v308, 4
  %v311 = vor.u32 %v310, %v306
  %v312 = vrot.slane %v311, 4
  %v314 = vshll.u32 %v155, 16
  %v316 = vrot.slane %v314, 5
  %v317 = vsel %vm245, %v312, %v316
  %v319 = vshrl.u32 %v156, 16
  %v321 = vrot.slane %v319, 4
  %v322 = vshll.u32 %v156, 16
  %v324 = vrot.slane %v322, 5
  %v325 = vor.u32 %v321, %v324
  %v326 = vrot.slane %v325, 4
  %v328 = vshll.u32 %v157, 16
  %v330 = vrot.slane %v328, 5
  %v331 = vsel %vm245, %v326, %v330
  %v332 = vshrl.u32 %v157, 16
  %v334 = vrot.slane %v332, 4
  %v335 = vor.u32 %v334, %v330
  %v336 = vrot.slane %v335, 4
  %v338 = vshll.u32 %v158, 16
  %v340 = vrot.slane %v338, 5
  %v341 = vsel %vm245, %v336, %v340
  %v343 = vshrl.u32 %v159, 16
  %v345 = vrot.slane %v343, 4
  %v346 = vshll.u32 %v159, 16
  %v348 = vrot.slane %v346, 5
  %v349 = vor.u32 %v345, %v348
  %v350 = vrot.slane %v349, 4
  %v352 = vshll.u32 %v160, 16
  %v354 = vrot.slane %v352, 5
  %v355 = vsel %vm245, %v350, %v354
  %v356 = vshrl.u32 %v160, 16
  %v358 = vrot.slane %v356, 4
  %v359 = vor.u32 %v358, %v354
  %v360 = vrot.slane %v359, 4
  %v362 = vshll.u32 %v161, 16
  %v364 = vrot.slane %v362, 5
  %v365 = vsel %vm245, %v360, %v364
  %v367 = vshrl.u32 %v162, 16
  %v369 = vrot.slane %v367, 4
  %v370 = vshll.u32 %v162, 16
  %v372 = vrot.slane %v370, 5
  %v373 = vor.u32 %v369, %v372
  %v374 = vrot.slane %v373, 4
  %v376 = vshll.u32 %v163, 16
  %v378 = vrot.slane %v376, 5
  %v379 = vsel %vm245, %v374, %v378
  %v380 = vshrl.u32 %v163, 16
  %v382 = vrot.slane %v380, 4
  %v383 = vor.u32 %v382, %v378
  %v384 = vrot.slane %v383, 4
  %v386 = vshll.u32 %v164, 16
  %v388 = vrot.slane %v386, 5
  %v389 = vsel %vm245, %v384, %v388
  %v391 = vshrl.u32 %v165, 16
  %v393 = vrot.slane %v391, 4
  %v394 = vshll.u32 %v165, 16
  %v396 = vrot.slane %v394, 5
  %v397 = vor.u32 %v393, %v396
  %v398 = vrot.slane %v397, 4
  %v400 = vshll.u32 %v166, 16
  %v402 = vrot.slane %v400, 5
  %v403 = vsel %vm245, %v398, %v402
  %v404 = vshrl.u32 %v166, 16
  %v406 = vrot.slane %v404, 4
  %v407 = vor.u32 %v406, %v402
  %v408 = vrot.slane %v407, 4
  %v410 = vshll.u32 %v167, 16
  %v412 = vrot.slane %v410, 5
  %v413 = vsel %vm245, %v408, %v412
  %v415 = vshrl.u32 %v168, 16
  %v417 = vrot.slane %v415, 4
  %v418 = vshll.u32 %v168, 16
  %v420 = vrot.slane %v418, 5
  %v421 = vor.u32 %v417, %v420
  %v422 = vrot.slane %v421, 4
  %v424 = vshll.u32 %v169, 16
  %v426 = vrot.slane %v424, 5
  %v427 = vsel %vm245, %v422, %v426
  %v428 = vshrl.u32 %v169, 16
  %v430 = vrot.slane %v428, 4
  %v431 = vor.u32 %v430, %v426
  %v432 = vrot.slane %v431, 4
  %v434 = vshll.u32 %v170, 16
  %v436 = vrot.slane %v434, 5
  %v437 = vsel %vm245, %v432, %v436
  %v439 = vshrl.u32 %v171, 16
  %v441 = vrot.slane %v439, 4
  %v442 = vshll.u32 %v171, 16
  %v444 = vrot.slane %v442, 5
  %v445 = vor.u32 %v441, %v444
  %v446 = vrot.slane %v445, 4
  %v448 = vshll.u32 %v172, 16
  %v450 = vrot.slane %v448, 5
  %v451 = vsel %vm245, %v446, %v450
  %v452 = vshrl.u32 %v172, 16
  %v454 = vrot.slane %v452, 4
  %v455 = vor.u32 %v454, %v450
  %v456 = vrot.slane %v455, 4
  %v458 = vshll.u32 %v173, 16
  %v460 = vrot.slane %v458, 5
  %v461 = vsel %vm245, %v456, %v460
  %v463 = vshrl.u32 %v174, 16
  %v465 = vrot.slane %v463, 4
  %v466 = vshll.u32 %v174, 16
  %v468 = vrot.slane %v466, 5
  %v469 = vor.u32 %v465, %v468
  %v470 = vrot.slane %v469, 4
  %v472 = vshll.u32 %v175, 16
  %v474 = vrot.slane %v472, 5
  %v475 = vsel %vm245, %v470, %v474
  %v476 = vshrl.u32 %v175, 16
  %v478 = vrot.slane %v476, 4
  %v479 = vor.u32 %v478, %v474
  %v480 = vrot.slane %v479, 4
  %v482 = vshll.u32 %v176, 16
  %v484 = vrot.slane %v482, 5
  %v485 = vsel %vm245, %v480, %v484
  %v487 = vshrl.u32 %v177, 16
  %v489 = vrot.slane %v487, 4
  %v490 = vshll.u32 %v177, 16
  %v492 = vrot.slane %v490, 5
  %v493 = vor.u32 %v489, %v492
  %v494 = vrot.slane %v493, 4
  %v496 = vshll.u32 %v178, 16
  %v498 = vrot.slane %v496, 5
  %v499 = vsel %vm245, %v494, %v498
  %v500 = vshrl.u32 %v178, 16
  %v502 = vrot.slane %v500, 4
  %v503 = vor.u32 %v502, %v498
  %v504 = vrot.slane %v503, 4
  %v506 = vshll.u32 %v179, 16
  %v508 = vrot.slane %v506, 5
  %v509 = vsel %vm245, %v504, %v508
  %v511 = vshrl.u32 %v180, 16
  %v513 = vrot.slane %v511, 4
  %v514 = vshll.u32 %v180, 16
  %v516 = vrot.slane %v514, 5
  %v517 = vor.u32 %v513, %v516
  %v518 = vrot.slane %v517, 4
  %v520 = vshll.u32 %v181, 16
  %v522 = vrot.slane %v520, 5
  %v523 = vsel %vm245, %v518, %v522
  %v524 = vshrl.u32 %v181, 16
  %v526 = vrot.slane %v524, 4
  %v527 = vor.u32 %v526, %v522
  %v528 = vrot.slane %v527, 4
  %v530 = vshll.u32 %v182, 16
  %v532 = vrot.slane %v530, 5
  %v533 = vsel %vm245, %v528, %v532
  %v535 = vshrl.u32 %v183, 16
  %v537 = vrot.slane %v535, 4
  %v538 = vshll.u32 %v183, 16
  %v540 = vrot.slane %v538, 5
  %v541 = vor.u32 %v537, %v540
  %v542 = vrot.slane %v541, 4
  %v544 = vshll.u32 %v184, 16
  %v546 = vrot.slane %v544, 5
  %v547 = vsel %vm245, %v542, %v546
  %v548 = vshrl.u32 %v184, 16
  %v550 = vrot.slane %v548, 4
  %v551 = vor.u32 %v550, %v546
  %v552 = vrot.slane %v551, 4
  %v554 = vshll.u32 %v185, 16
  %v556 = vrot.slane %v554, 5
  %v557 = vsel %vm245, %v552, %v556
  %v559 = vshrl.u32 %v186, 16
  %v561 = vrot.slane %v559, 4
  %v562 = vshll.u32 %v186, 16
  %v564 = vrot.slane %v562, 5
  %v565 = vor.u32 %v561, %v564
  %v566 = vrot.slane %v565, 4
  %v568 = vshll.u32 %v187, 16
  %v570 = vrot.slane %v568, 5
  %v571 = vsel %vm245, %v566, %v570
  %v572 = vshrl.u32 %v187, 16
  %v574 = vrot.slane %v572, 4
  %v575 = vor.u32 %v574, %v570
  %v576 = vrot.slane %v575, 4
  %v578 = vshll.u32 %v188, 16
  %v580 = vrot.slane %v578, 5
  %v581 = vsel %vm245, %v576, %v580
  %v583 = vshrl.u32 %v189, 16
  %v585 = vrot.slane %v583, 4
  %v586 = vshll.u32 %v189, 16
  %v588 = vrot.slane %v586, 5
  %v589 = vor.u32 %v585, %v588
  %v590 = vrot.slane %v589, 4
  %v592 = vshll.u32 %v190, 16
  %v594 = vrot.slane %v592, 5
  %v595 = vsel %vm245, %v590, %v594
  %v596 = vshrl.u32 %v190, 16
  %v598 = vrot.slane %v596, 4
  %v599 = vor.u32 %v598, %v594
  %v600 = vrot.slane %v599, 4
  %v602 = vshll.u32 %v191, 16
  %v604 = vrot.slane %v602, 5
  %v605 = vsel %vm245, %v600, %v604
  %v607 = vshrl.u32 %v192, 16
  %v609 = vrot.slane %v607, 4
  %v610 = vshll.u32 %v192, 16
  %v612 = vrot.slane %v610, 5
  %v613 = vor.u32 %v609, %v612
  %v614 = vrot.slane %v613, 4
  %v616 = vshll.u32 %v193, 16
  %v618 = vrot.slane %v616, 5
  %v619 = vsel %vm245, %v614, %v618
  %v620 = vshrl.u32 %v193, 16
  %v622 = vrot.slane %v620, 4
  %v623 = vor.u32 %v622, %v618
  %v624 = vrot.slane %v623, 4
  %v626 = vshll.u32 %v194, 16
  %v628 = vrot.slane %v626, 5
  %v629 = vsel %vm245, %v624, %v628
  %v631 = vshrl.u32 %v195, 16
  %v633 = vrot.slane %v631, 4
  %v634 = vshll.u32 %v195, 16
  %v636 = vrot.slane %v634, 5
  %v637 = vor.u32 %v633, %v636
  %v638 = vrot.slane %v637, 4
  %v640 = vshll.u32 %v196, 16
  %v642 = vrot.slane %v640, 5
  %v643 = vsel %vm245, %v638, %v642
  %v644 = vshrl.u32 %v196, 16
  %v646 = vrot.slane %v644, 4
  %v647 = vor.u32 %v646, %v642
  %v648 = vrot.slane %v647, 4
  %v650 = vshll.u32 %v197, 16
  %v652 = vrot.slane %v650, 5
  %v653 = vsel %vm245, %v648, %v652
  %v655 = vshrl.u32 %v198, 16
  %v657 = vrot.slane %v655, 4
  %v658 = vshll.u32 %v198, 16
  %v660 = vrot.slane %v658, 5
  %v661 = vor.u32 %v657, %v660
  %v662 = vrot.slane %v661, 4
  %v664 = vshll.u32 %v199, 16
  %v666 = vrot.slane %v664, 5
  %v667 = vsel %vm245, %v662, %v666
  %v668 = vshrl.u32 %v199, 16
  %v670 = vrot.slane %v668, 4
  %v671 = vor.u32 %v670, %v666
  %v672 = vrot.slane %v671, 4
  %v674 = vshll.u32 %v200, 16
  %v676 = vrot.slane %v674, 5
  %v677 = vsel %vm245, %v672, %v676
  %v679 = vshrl.u32 %v201, 16
  %v681 = vrot.slane %v679, 4
  %v682 = vshll.u32 %v201, 16
  %v684 = vrot.slane %v682, 5
  %v685 = vor.u32 %v681, %v684
  %v686 = vrot.slane %v685, 4
  %v688 = vshll.u32 %v202, 16
  %v690 = vrot.slane %v688, 5
  %v691 = vsel %vm245, %v686, %v690
  %v692 = vshrl.u32 %v202, 16
  %v694 = vrot.slane %v692, 4
  %v695 = vor.u32 %v694, %v690
  %v696 = vrot.slane %v695, 4
  %v698 = vshll.u32 %v203, 16
  %v700 = vrot.slane %v698, 5
  %v701 = vsel %vm245, %v696, %v700
  %v703 = vshrl.u32 %v204, 16
  %v705 = vrot.slane %v703, 4
  %v706 = vshll.u32 %v204, 16
  %v708 = vrot.slane %v706, 5
  %v709 = vor.u32 %v705, %v708
  %v710 = vrot.slane %v709, 4
  %v712 = vshll.u32 %v205, 16
  %v714 = vrot.slane %v712, 5
  %v715 = vsel %vm245, %v710, %v714
  %v716 = vshrl.u32 %v205, 16
  %v718 = vrot.slane %v716, 4
  %v719 = vor.u32 %v718, %v714
  %v720 = vrot.slane %v719, 4
  %v722 = vshll.u32 %v206, 16
  %v724 = vrot.slane %v722, 5
  %v725 = vsel %vm245, %v720, %v724
  %v727 = vshrl.u32 %v207, 16
  %v729 = vrot.slane %v727, 4
  %v730 = vshll.u32 %v207, 16
  %v732 = vrot.slane %v730, 5
  %v733 = vor.u32 %v729, %v732
  %v734 = vrot.slane %v733, 4
  %v736 = vshll.u32 %v208, 16
  %v738 = vrot.slane %v736, 5
  %v739 = vsel %vm245, %v734, %v738
  %v740 = vshrl.u32 %v208, 16
  %v742 = vrot.slane %v740, 4
  %v743 = vor.u32 %v742, %v738
  %v744 = vrot.slane %v743, 4
  %v746 = vshll.u32 %v209, 16
  %v748 = vrot.slane %v746, 5
  %v749 = vsel %vm245, %v744, %v748
  %v751 = vshrl.u32 %v210, 16
  %v753 = vrot.slane %v751, 4
  %v754 = vshll.u32 %v210, 16
  %v756 = vrot.slane %v754, 5
  %v757 = vor.u32 %v753, %v756
  %v758 = vrot.slane %v757, 4
  %v760 = vshll.u32 %v211, 16
  %v762 = vrot.slane %v760, 5
  %v763 = vsel %vm245, %v758, %v762
  %v764 = vshrl.u32 %v211, 16
  %v766 = vrot.slane %v764, 4
  %v767 = vor.u32 %v766, %v762
  %v768 = vrot.slane %v767, 4
  %v770 = vshll.u32 %v212, 16
  %v772 = vrot.slane %v770, 5
  %v773 = vsel %vm245, %v768, %v772
  %v775 = vshrl.u32 %v213, 16
  %v777 = vrot.slane %v775, 4
  %v778 = vshll.u32 %v213, 16
  %v780 = vrot.slane %v778, 5
  %v781 = vor.u32 %v777, %v780
  %v782 = vrot.slane %v781, 4
  %v784 = vshll.u32 %v214, 16
  %v786 = vrot.slane %v784, 5
  %v787 = vsel %vm245, %v782, %v786
  %v788 = vshrl.u32 %v214, 16
  %v790 = vrot.slane %v788, 4
  %v791 = vor.u32 %v790, %v786
  %v792 = vrot.slane %v791, 4
  %v794 = vshll.u32 %v215, 16
  %v796 = vrot.slane %v794, 5
  %v797 = vsel %vm245, %v792, %v796
  %v799 = vshrl.u32 %v216, 16
  %v801 = vrot.slane %v799, 4
  %v802 = vshll.u32 %v216, 16
  %v804 = vrot.slane %v802, 5
  %v805 = vor.u32 %v801, %v804
  %v806 = vrot.slane %v805, 4
  %v808 = vshll.u32 %v217, 16
  %v810 = vrot.slane %v808, 5
  %v811 = vsel %vm245, %v806, %v810
  %v812 = vshrl.u32 %v217, 16
  %v814 = vrot.slane %v812, 4
  %v815 = vor.u32 %v814, %v810
  %v816 = vrot.slane %v815, 4
  %v818 = vshll.u32 %v218, 16
  %v820 = vrot.slane %v818, 5
  %v821 = vsel %vm245, %v816, %v820
  %v823 = vshrl.u32 %v219, 16
  %v825 = vrot.slane %v823, 4
  %v826 = vshll.u32 %v219, 16
  %v828 = vrot.slane %v826, 5
  %v829 = vor.u32 %v825, %v828
  %v830 = vrot.slane %v829, 4
  %v832 = vshll.u32 %v220, 16
  %v834 = vrot.slane %v832, 5
  %v835 = vsel %vm245, %v830, %v834
  %v836 = vshrl.u32 %v220, 16
  %v838 = vrot.slane %v836, 4
  %v839 = vor.u32 %v838, %v834
  %v840 = vrot.slane %v839, 4
  %v842 = vshll.u32 %v221, 16
  %v844 = vrot.slane %v842, 5
  %v845 = vsel %vm245, %v840, %v844
  %v847 = vshrl.u32 %v222, 16
  %v849 = vrot.slane %v847, 4
  %v850 = vshll.u32 %v222, 16
  %v852 = vrot.slane %v850, 5
  %v853 = vor.u32 %v849, %v852
  %v854 = vrot.slane %v853, 4
  %v856 = vshll.u32 %v223, 16
  %v858 = vrot.slane %v856, 5
  %v859 = vsel %vm245, %v854, %v858
  %v860 = vshrl.u32 %v223, 16
  %v862 = vrot.slane %v860, 4
  %v863 = vor.u32 %v862, %v858
  %v864 = vrot.slane %v863, 4
  %v866 = vshll.u32 %v224, 16
  %v868 = vrot.slane %v866, 5
  %v869 = vsel %vm245, %v864, %v868
  %v871 = vshrl.u32 %v225, 16
  %v873 = vrot.slane %v871, 4
  %v874 = vshll.u32 %v225, 16
  %v876 = vrot.slane %v874, 5
  %v877 = vor.u32 %v873, %v876
  %v878 = vrot.slane %v877, 4
  %v880 = vshll.u32 %v226, 16
  %v882 = vrot.slane %v880, 5
  %v883 = vsel %vm245, %v878, %v882
  %v884 = vshrl.u32 %v226, 16
  %v886 = vrot.slane %v884, 4
  %v887 = vor.u32 %v886, %v882
  %v888 = vrot.slane %v887, 4
  %v890 = vshll.u32 %v227, 16
  %v892 = vrot.slane %v890, 5
  %v893 = vsel %vm245, %v888, %v892
  %v895 = vshrl.u32 %v228, 16
  %v897 = vrot.slane %v895, 4
  %v898 = vshll.u32 %v228, 16
  %v900 = vrot.slane %v898, 5
  %v901 = vor.u32 %v897, %v900
  %v902 = vrot.slane %v901, 4
  %v904 = vshll.u32 %v229, 16
  %v906 = vrot.slane %v904, 5
  %v907 = vsel %vm245, %v902, %v906
  %v908 = vshrl.u32 %v229, 16
  %v910 = vrot.slane %v908, 4
  %v911 = vor.u32 %v910, %v906
  %v912 = vrot.slane %v911, 4
  %v914 = vshll.u32 %v230, 16
  %v916 = vrot.slane %v914, 5
  %v917 = vsel %vm245, %v912, %v916
  %v919 = vshrl.u32 %v231, 16
  %v921 = vrot.slane %v919, 4
  %v922 = vshll.u32 %v231, 16
  %v924 = vrot.slane %v922, 5
  %v925 = vor.u32 %v921, %v924
  %v926 = vrot.slane %v925, 4
  %v928 = vshll.u32 %v232, 16
  %v930 = vrot.slane %v928, 5
  %v931 = vsel %vm245, %v926, %v930
  %v932 = vshrl.u32 %v232, 16
  %v934 = vrot.slane %v932, 4
  %v935 = vor.u32 %v934, %v930
  %v936 = vrot.slane %v935, 4
  %v938 = vshll.u32 %v233, 16
  %v940 = vrot.slane %v938, 5
  %v941 = vsel %vm245, %v936, %v940
  %v943 = vshrl.u32 %v234, 16
  %v945 = vrot.slane %v943, 4
  %v946 = vshll.u32 %v234, 16
  %v948 = vrot.slane %v946, 5
  %v949 = vor.u32 %v945, %v948
  %v950 = vrot.slane %v949, 4
  %v952 = vshll.u32 %v235, 16
  %v954 = vrot.slane %v952, 5
  %v955 = vsel %vm245, %v950, %v954
  %v956 = vshrl.u32 %v235, 16
  %v958 = vrot.slane %v956, 4
  %v959 = vor.u32 %v958, %v954
  %v960 = vrot.slane %v959, 4
  %v962 = vshll.u32 %v236, 16
  %v964 = vrot.slane %v962, 5
  %v965 = vsel %vm245, %v960, %v964
  %v967 = vshrl.u32 %v237, 16
  %v969 = vrot.slane %v967, 4
  %v970 = vshll.u32 %v237, 16
  %v972 = vrot.slane %v970, 5
  %v973 = vor.u32 %v969, %v972
  %v974 = vrot.slane %v973, 4
  %v976 = vshll.u32 %v238, 16
  %v978 = vrot.slane %v976, 5
  %v979 = vsel %vm245, %v974, %v978
  %v980 = vshrl.u32 %v238, 16
  %v982 = vrot.slane %v980, 4
  %v983 = vor.u32 %v982, %v978
  %v984 = vrot.slane %v983, 4
  %v986 = vshll.u32 %v239, 16
  %v988 = vrot.slane %v986, 5
  %v989 = vsel %vm245, %v984, %v988
  %v991 = vshrl.u32 %v240, 16
  %v993 = vrot.slane %v991, 4
  %v994 = vshll.u32 %v240, 16
  %v996 = vrot.slane %v994, 5
  %v997 = vor.u32 %v993, %v996
  %v998 = vrot.slane %v997, 4
  %v1000 = vshll.u32 %v241, 16
  %v1002 = vrot.slane %v1000, 5
  %v1003 = vsel %vm245, %v998, %v1002
  %v1004 = vshrl.u32 %v241, 16
  %v1006 = vrot.slane %v1004, 4
  %v1007 = vor.u32 %v1006, %v1002
  %v1008 = vrot.slane %v1007, 4
  %v1010 = vshll.u32 %v242, 16
  %v1012 = vrot.slane %v1010, 5
  %v1013 = vsel %vm245, %v1008, %v1012
  %1014 = vrot.lane.b32.xlu0 %v259, 4
  %v1015 = vpop.permute.xlu0 %1014
  %1016 = vrot.lane.b32.xlu0 %v269, 4
  %v1017 = vpop.permute.xlu0 %1016
  %1018 = vrot.lane.b32.xlu0 %v283, 4
  %v1019 = vpop.permute.xlu0 %1018
  %1020 = vrot.lane.b32.xlu0 %v293, 4
  %v1021 = vpop.permute.xlu0 %1020
  %1022 = vrot.lane.b32.xlu0 %v307, 4
  %v1023 = vpop.permute.xlu0 %1022
  %1024 = vrot.lane.b32.xlu0 %v317, 4
  %v1025 = vpop.permute.xlu0 %1024
  %1026 = vrot.lane.b32.xlu0 %v331, 4
  %v1027 = vpop.permute.xlu0 %1026
  %1028 = vrot.lane.b32.xlu0 %v341, 4
  %v1029 = vpop.permute.xlu0 %1028
  %1030 = vrot.lane.b32.xlu0 %v355, 4
  %v1031 = vpop.permute.xlu0 %1030
  %1032 = vrot.lane.b32.xlu0 %v365, 4
  %v1033 = vpop.permute.xlu0 %1032
  %1034 = vrot.lane.b32.xlu0 %v379, 4
  %v1035 = vpop.permute.xlu0 %1034
  %1036 = vrot.lane.b32.xlu0 %v389, 4
  %v1037 = vpop.permute.xlu0 %1036
  %1038 = vrot.lane.b32.xlu0 %v403, 4
  %v1039 = vpop.permute.xlu0 %1038
  %1040 = vrot.lane.b32.xlu0 %v413, 4
  %v1041 = vpop.permute.xlu0 %1040
  %1042 = vrot.lane.b32.xlu0 %v427, 4
  %v1043 = vpop.permute.xlu0 %1042
  %1044 = vrot.lane.b32.xlu0 %v437, 4
  %v1045 = vpop.permute.xlu0 %1044
  %1046 = vrot.lane.b32.xlu0 %v451, 4
  %v1047 = vpop.permute.xlu0 %1046
  %1048 = vrot.lane.b32.xlu0 %v461, 4
  %v1049 = vpop.permute.xlu0 %1048
  %1050 = vrot.lane.b32.xlu0 %v475, 4
  %v1051 = vpop.permute.xlu0 %1050
  %1052 = vrot.lane.b32.xlu0 %v485, 4
  %v1053 = vpop.permute.xlu0 %1052
  %1054 = vrot.lane.b32.xlu0 %v499, 4
  %v1055 = vpop.permute.xlu0 %1054
  %1056 = vrot.lane.b32.xlu0 %v509, 4
  %v1057 = vpop.permute.xlu0 %1056
  %1058 = vrot.lane.b32.xlu0 %v523, 4
  %v1059 = vpop.permute.xlu0 %1058
  %1060 = vrot.lane.b32.xlu0 %v533, 4
  %v1061 = vpop.permute.xlu0 %1060
  %1062 = vrot.lane.b32.xlu0 %v547, 4
  %v1063 = vpop.permute.xlu0 %1062
  %1064 = vrot.lane.b32.xlu0 %v557, 4
  %v1065 = vpop.permute.xlu0 %1064
  %1066 = vrot.lane.b32.xlu0 %v571, 4
  %v1067 = vpop.permute.xlu0 %1066
  %1068 = vrot.lane.b32.xlu0 %v581, 4
  %v1069 = vpop.permute.xlu0 %1068
  %1070 = vrot.lane.b32.xlu0 %v595, 4
  %v1071 = vpop.permute.xlu0 %1070
  %1072 = vrot.lane.b32.xlu0 %v605, 4
  %v1073 = vpop.permute.xlu0 %1072
  %1074 = vrot.lane.b32.xlu0 %v619, 4
  %v1075 = vpop.permute.xlu0 %1074
  %1076 = vrot.lane.b32.xlu0 %v629, 4
  %v1077 = vpop.permute.xlu0 %1076
  %1078 = vrot.lane.b32.xlu0 %v643, 4
  %v1079 = vpop.permute.xlu0 %1078
  %1080 = vrot.lane.b32.xlu0 %v653, 4
  %v1081 = vpop.permute.xlu0 %1080
  %1082 = vrot.lane.b32.xlu0 %v667, 4
  %v1083 = vpop.permute.xlu0 %1082
  %1084 = vrot.lane.b32.xlu0 %v677, 4
  %v1085 = vpop.permute.xlu0 %1084
  %1086 = vrot.lane.b32.xlu0 %v691, 4
  %v1087 = vpop.permute.xlu0 %1086
  %1088 = vrot.lane.b32.xlu0 %v701, 4
  %v1089 = vpop.permute.xlu0 %1088
  %1090 = vrot.lane.b32.xlu0 %v715, 4
  %v1091 = vpop.permute.xlu0 %1090
  %1092 = vrot.lane.b32.xlu0 %v725, 4
  %v1093 = vpop.permute.xlu0 %1092
  %1094 = vrot.lane.b32.xlu0 %v739, 4
  %v1095 = vpop.permute.xlu0 %1094
  %1096 = vrot.lane.b32.xlu0 %v749, 4
  %v1097 = vpop.permute.xlu0 %1096
  %1098 = vrot.lane.b32.xlu0 %v763, 4
  %v1099 = vpop.permute.xlu0 %1098
  %1100 = vrot.lane.b32.xlu0 %v773, 4
  %v1101 = vpop.permute.xlu0 %1100
  %1102 = vrot.lane.b32.xlu0 %v787, 4
  %v1103 = vpop.permute.xlu0 %1102
  %1104 = vrot.lane.b32.xlu0 %v797, 4
  %v1105 = vpop.permute.xlu0 %1104
  %1106 = vrot.lane.b32.xlu0 %v811, 4
  %v1107 = vpop.permute.xlu0 %1106
  %1108 = vrot.lane.b32.xlu0 %v821, 4
  %v1109 = vpop.permute.xlu0 %1108
  %1110 = vrot.lane.b32.xlu0 %v835, 4
  %v1111 = vpop.permute.xlu0 %1110
  %1112 = vrot.lane.b32.xlu0 %v845, 4
  %v1113 = vpop.permute.xlu0 %1112
  %1114 = vrot.lane.b32.xlu0 %v859, 4
  %v1115 = vpop.permute.xlu0 %1114
  %1116 = vrot.lane.b32.xlu0 %v869, 4
  %v1117 = vpop.permute.xlu0 %1116
  %1118 = vrot.lane.b32.xlu0 %v883, 4
  %v1119 = vpop.permute.xlu0 %1118
  %1120 = vrot.lane.b32.xlu0 %v893, 4
  %v1121 = vpop.permute.xlu0 %1120
  %1122 = vrot.lane.b32.xlu0 %v907, 4
  %v1123 = vpop.permute.xlu0 %1122
  %1124 = vrot.lane.b32.xlu0 %v917, 4
  %v1125 = vpop.permute.xlu0 %1124
  %1126 = vrot.lane.b32.xlu0 %v931, 4
  %v1127 = vpop.permute.xlu0 %1126
  %1128 = vrot.lane.b32.xlu0 %v941, 4
  %v1129 = vpop.permute.xlu0 %1128
  %1130 = vrot.lane.b32.xlu0 %v955, 4
  %v1131 = vpop.permute.xlu0 %1130
  %1132 = vrot.lane.b32.xlu0 %v965, 4
  %v1133 = vpop.permute.xlu0 %1132
  %1134 = vrot.lane.b32.xlu0 %v979, 4
  %v1135 = vpop.permute.xlu0 %1134
  %1136 = vrot.lane.b32.xlu0 %v989, 4
  %v1137 = vpop.permute.xlu0 %1136
  %1138 = vrot.lane.b32.xlu0 %v1003, 4
  %v1139 = vpop.permute.xlu0 %1138
  %1140 = vrot.lane.b32.xlu0 %v1013, 4
  %v1141 = vpop.permute.xlu0 %1140
  %vm1206 = vcmask 60448
  %1207 = vst.msk [vmem:[#allocation2] sm:$0xf] %vm1206, %v1015
  %1208 = vst.msk [vmem:[#allocation2 + $0x4] sm:$0xf] %vm1206, %v1017
  %1209 = vst.msk [vmem:[#allocation2 + $0x8] sm:$0xf] %vm1206, %v1019
  %1210 = vst.msk [vmem:[#allocation2 + $0xc] sm:$0xf] %vm1206, %v1021
  %1211 = vst.msk [vmem:[#allocation2 + $0x10] sm:$0xf] %vm1206, %v1023
  %1212 = vst.msk [vmem:[#allocation2 + $0x14] sm:$0xf] %vm1206, %v1025
  %1213 = vst.msk [vmem:[#allocation2 + $0x18] sm:$0xf] %vm1206, %v1027
  %1214 = vst.msk [vmem:[#allocation2 + $0x1c] sm:$0xf] %vm1206, %v1029
  %1215 = vst.msk [vmem:[#allocation2 + $0x20] sm:$0xf] %vm1206, %v1031
  %1216 = vst.msk [vmem:[#allocation2 + $0x24] sm:$0xf] %vm1206, %v1033
  %1217 = vst.msk [vmem:[#allocation2 + $0x28] sm:$0xf] %vm1206, %v1035
  %1218 = vst.msk [vmem:[#allocation2 + $0x2c] sm:$0xf] %vm1206, %v1037
  %1219 = vst.msk [vmem:[#allocation2 + $0x30] sm:$0xf] %vm1206, %v1039
  %1220 = vst.msk [vmem:[#allocation2 + $0x34] sm:$0xf] %vm1206, %v1041
  %1221 = vst.msk [vmem:[#allocation2 + $0x38] sm:$0xf] %vm1206, %v1043
  %1222 = vst.msk [vmem:[#allocation2 + $0x3c] sm:$0xf] %vm1206, %v1045
  %1223 = vst.msk [vmem:[#allocation2 + $0x40] sm:$0xf] %vm1206, %v1047
  %1224 = vst.msk [vmem:[#allocation2 + $0x44] sm:$0xf] %vm1206, %v1049
  %1225 = vst.msk [vmem:[#allocation2 + $0x48] sm:$0xf] %vm1206, %v1051
  %1226 = vst.msk [vmem:[#allocation2 + $0x4c] sm:$0xf] %vm1206, %v1053
  %1227 = vst.msk [vmem:[#allocation2 + $0x50] sm:$0xf] %vm1206, %v1055
  %1228 = vst.msk [vmem:[#allocation2 + $0x54] sm:$0xf] %vm1206, %v1057
  %1229 = vst.msk [vmem:[#allocation2 + $0x58] sm:$0xf] %vm1206, %v1059
  %1230 = vst.msk [vmem:[#allocation2 + $0x5c] sm:$0xf] %vm1206, %v1061
  %1231 = vst.msk [vmem:[#allocation2 + $0x60] sm:$0xf] %vm1206, %v1063
  %1232 = vst.msk [vmem:[#allocation2 + $0x64] sm:$0xf] %vm1206, %v1065
  %1233 = vst.msk [vmem:[#allocation2 + $0x68] sm:$0xf] %vm1206, %v1067
  %1234 = vst.msk [vmem:[#allocation2 + $0x6c] sm:$0xf] %vm1206, %v1069
  %1235 = vst.msk [vmem:[#allocation2 + $0x70] sm:$0xf] %vm1206, %v1071
  %1236 = vst.msk [vmem:[#allocation2 + $0x74] sm:$0xf] %vm1206, %v1073
  %1237 = vst.msk [vmem:[#allocation2 + $0x78] sm:$0xf] %vm1206, %v1075
  %1238 = vst.msk [vmem:[#allocation2 + $0x7c] sm:$0xf] %vm1206, %v1077
  %1239 = vst.msk [vmem:[#allocation2 + $0x80] sm:$0xf] %vm1206, %v1079
  %1240 = vst.msk [vmem:[#allocation2 + $0x84] sm:$0xf] %vm1206, %v1081
  %1241 = vst.msk [vmem:[#allocation2 + $0x88] sm:$0xf] %vm1206, %v1083
  %1242 = vst.msk [vmem:[#allocation2 + $0x8c] sm:$0xf] %vm1206, %v1085
  %1243 = vst.msk [vmem:[#allocation2 + $0x90] sm:$0xf] %vm1206, %v1087
  %1244 = vst.msk [vmem:[#allocation2 + $0x94] sm:$0xf] %vm1206, %v1089
  %1245 = vst.msk [vmem:[#allocation2 + $0x98] sm:$0xf] %vm1206, %v1091
  %1246 = vst.msk [vmem:[#allocation2 + $0x9c] sm:$0xf] %vm1206, %v1093
  %1247 = vst.msk [vmem:[#allocation2 + $0xa0] sm:$0xf] %vm1206, %v1095
  %1248 = vst.msk [vmem:[#allocation2 + $0xa4] sm:$0xf] %vm1206, %v1097
  %1249 = vst.msk [vmem:[#allocation2 + $0xa8] sm:$0xf] %vm1206, %v1099
  %1250 = vst.msk [vmem:[#allocation2 + $0xac] sm:$0xf] %vm1206, %v1101
  %1251 = vst.msk [vmem:[#allocation2 + $0xb0] sm:$0xf] %vm1206, %v1103
  %1252 = vst.msk [vmem:[#allocation2 + $0xb4] sm:$0xf] %vm1206, %v1105
  %1253 = vst.msk [vmem:[#allocation2 + $0xb8] sm:$0xf] %vm1206, %v1107
  %1254 = vst.msk [vmem:[#allocation2 + $0xbc] sm:$0xf] %vm1206, %v1109
  %1255 = vst.msk [vmem:[#allocation2 + $0xc0] sm:$0xf] %vm1206, %v1111
  %1256 = vst.msk [vmem:[#allocation2 + $0xc4] sm:$0xf] %vm1206, %v1113
  %1257 = vst.msk [vmem:[#allocation2 + $0xc8] sm:$0xf] %vm1206, %v1115
  %1258 = vst.msk [vmem:[#allocation2 + $0xcc] sm:$0xf] %vm1206, %v1117
  %1259 = vst.msk [vmem:[#allocation2 + $0xd0] sm:$0xf] %vm1206, %v1119
  %1260 = vst.msk [vmem:[#allocation2 + $0xd4] sm:$0xf] %vm1206, %v1121
  %1261 = vst.msk [vmem:[#allocation2 + $0xd8] sm:$0xf] %vm1206, %v1123
  %1262 = vst.msk [vmem:[#allocation2 + $0xdc] sm:$0xf] %vm1206, %v1125
  %1263 = vst.msk [vmem:[#allocation2 + $0xe0] sm:$0xf] %vm1206, %v1127
  %1264 = vst.msk [vmem:[#allocation2 + $0xe4] sm:$0xf] %vm1206, %v1129
  %1265 = vst.msk [vmem:[#allocation2 + $0xe8] sm:$0xf] %vm1206, %v1131
  %1266 = vst.msk [vmem:[#allocation2 + $0xec] sm:$0xf] %vm1206, %v1133
  %1267 = vst.msk [vmem:[#allocation2 + $0xf0] sm:$0xf] %vm1206, %v1135
  %1268 = vst.msk [vmem:[#allocation2 + $0xf4] sm:$0xf] %vm1206, %v1137
  %1269 = vst.msk [vmem:[#allocation2 + $0xf8] sm:$0xf] %vm1206, %v1139
  %1270 = vst.msk [vmem:[#allocation2 + $0xfc] sm:$0xf] %vm1206, %v1141
  %v1271 = vld [vmem:[%s0] sm:$0xe]
  %v1272 = vld [vmem:[%s0 + $0x4] sm:$0xf]
  %v1273 = vld [vmem:[%s0 + $0x8] sm:$0x1]
  %v1274 = vld [vmem:[%s0 + $0xc] sm:$0xe]
  %v1275 = vld [vmem:[%s0 + $0x10] sm:$0xf]
  %v1276 = vld [vmem:[%s0 + $0x14] sm:$0x1]
  %v1277 = vld [vmem:[%s0 + $0x18] sm:$0xe]
  %v1278 = vld [vmem:[%s0 + $0x1c] sm:$0xf]
  %v1279 = vld [vmem:[%s0 + $0x20] sm:$0x1]
  %v1280 = vld [vmem:[%s0 + $0x24] sm:$0xe]
  %v1281 = vld [vmem:[%s0 + $0x28] sm:$0xf]
  %v1282 = vld [vmem:[%s0 + $0x2c] sm:$0x1]
  %v1283 = vld [vmem:[%s0 + $0x30] sm:$0xe]
  %v1284 = vld [vmem:[%s0 + $0x34] sm:$0xf]
  %v1285 = vld [vmem:[%s0 + $0x38] sm:$0x1]
  %v1286 = vld [vmem:[%s0 + $0x3c] sm:$0xe]
  %v1287 = vld [vmem:[%s0 + $0x40] sm:$0xf]
  %v1288 = vld [vmem:[%s0 + $0x44] sm:$0x1]
  %v1289 = vld [vmem:[%s0 + $0x48] sm:$0xe]
  %v1290 = vld [vmem:[%s0 + $0x4c] sm:$0xf]
  %v1291 = vld [vmem:[%s0 + $0x50] sm:$0x1]
  %v1292 = vld [vmem:[%s0 + $0x54] sm:$0xe]
  %v1293 = vld [vmem:[%s0 + $0x58] sm:$0xf]
  %v1294 = vld [vmem:[%s0 + $0x5c] sm:$0x1]
  %v1295 = vld [vmem:[%s0 + $0x60] sm:$0xe]
  %v1296 = vld [vmem:[%s0 + $0x64] sm:$0xf]
  %v1297 = vld [vmem:[%s0 + $0x68] sm:$0x1]
  %v1298 = vld [vmem:[%s0 + $0x6c] sm:$0xe]
  %v1299 = vld [vmem:[%s0 + $0x70] sm:$0xf]
  %v1300 = vld [vmem:[%s0 + $0x74] sm:$0x1]
  %v1301 = vld [vmem:[%s0 + $0x78] sm:$0xe]
  %v1302 = vld [vmem:[%s0 + $0x7c] sm:$0xf]
  %v1303 = vld [vmem:[%s0 + $0x80] sm:$0x1]
  %v1304 = vld [vmem:[%s0 + $0x84] sm:$0xe]
  %v1305 = vld [vmem:[%s0 + $0x88] sm:$0xf]
  %v1306 = vld [vmem:[%s0 + $0x8c] sm:$0x1]
  %v1307 = vld [vmem:[%s0 + $0x90] sm:$0xe]
  %v1308 = vld [vmem:[%s0 + $0x94] sm:$0xf]
  %v1309 = vld [vmem:[%s0 + $0x98] sm:$0x1]
  %v1310 = vld [vmem:[%s0 + $0x9c] sm:$0xe]
  %v1311 = vld [vmem:[%s0 + $0xa0] sm:$0xf]
  %v1312 = vld [vmem:[%s0 + $0xa4] sm:$0x1]
  %v1313 = vld [vmem:[%s0 + $0xa8] sm:$0xe]
  %v1314 = vld [vmem:[%s0 + $0xac] sm:$0xf]
  %v1315 = vld [vmem:[%s0 + $0xb0] sm:$0x1]
  %v1316 = vld [vmem:[%s0 + $0xb4] sm:$0xe]
  %v1317 = vld [vmem:[%s0 + $0xb8] sm:$0xf]
  %v1318 = vld [vmem:[%s0 + $0xbc] sm:$0x1]
  %v1319 = vld [vmem:[%s0 + $0xd8] sm:$0xe]
  %v1320 = vld [vmem:[%s0 + $0xdc] sm:$0xf]
  %v1321 = vld [vmem:[%s0 + $0xe0] sm:$0x1]
  %v1322 = vld [vmem:[%s0 + $0xe4] sm:$0xe]
  %v1323 = vld [vmem:[%s0 + $0xe8] sm:$0xf]
  %v1324 = vld [vmem:[%s0 + $0xec] sm:$0x1]
  %v1325 = vld [vmem:[%s0 + $0xf0] sm:$0xe]
  %v1326 = vld [vmem:[%s0 + $0xf4] sm:$0xf]
  %v1327 = vld [vmem:[%s0 + $0xf8] sm:$0x1]
  %v1328 = vld [vmem:[%s0 + $0xfc] sm:$0xe]
  %v1329 = vld [vmem:[%s0 + $0x100] sm:$0xf]
  %v1330 = vld [vmem:[%s0 + $0x104] sm:$0x1]
  %v1331 = vld [vmem:[%s0 + $0x108] sm:$0xe]
  %v1332 = vld [vmem:[%s0 + $0x10c] sm:$0xf]
  %v1333 = vld [vmem:[%s0 + $0x110] sm:$0x1]
  %v1334 = vld [vmem:[%s0 + $0x114] sm:$0xe]
  %v1335 = vld [vmem:[%s0 + $0x118] sm:$0xf]
  %v1336 = vld [vmem:[%s0 + $0x11c] sm:$0x1]
  %v1337 = vld [vmem:[%s0 + $0x120] sm:$0xe]
  %v1338 = vld [vmem:[%s0 + $0x124] sm:$0xf]
  %v1339 = vld [vmem:[%s0 + $0x128] sm:$0x1]
  %v1340 = vld [vmem:[%s0 + $0x12c] sm:$0xe]
  %v1341 = vld [vmem:[%s0 + $0x130] sm:$0xf]
  %v1342 = vld [vmem:[%s0 + $0x134] sm:$0x1]
  %v1343 = vld [vmem:[%s0 + $0x138] sm:$0xe]
  %v1344 = vld [vmem:[%s0 + $0x13c] sm:$0xf]
  %v1345 = vld [vmem:[%s0 + $0x140] sm:$0x1]
  %v1346 = vld [vmem:[%s0 + $0x144] sm:$0xe]
  %v1347 = vld [vmem:[%s0 + $0x148] sm:$0xf]
  %v1348 = vld [vmem:[%s0 + $0x14c] sm:$0x1]
  %v1349 = vld [vmem:[%s0 + $0x150] sm:$0xe]
  %v1350 = vld [vmem:[%s0 + $0x154] sm:$0xf]
  %v1351 = vld [vmem:[%s0 + $0x158] sm:$0x1]
  %v1352 = vld [vmem:[%s0 + $0x15c] sm:$0xe]
  %v1353 = vld [vmem:[%s0 + $0x160] sm:$0xf]
  %v1354 = vld [vmem:[%s0 + $0x164] sm:$0x1]
  %v1355 = vld [vmem:[%s0 + $0x168] sm:$0xe]
  %v1356 = vld [vmem:[%s0 + $0x16c] sm:$0xf]
  %v1357 = vld [vmem:[%s0 + $0x170] sm:$0x1]
  %v1358 = vld [vmem:[%s0 + $0x174] sm:$0xe]
  %v1359 = vld [vmem:[%s0 + $0x178] sm:$0xf]
  %v1360 = vld [vmem:[%s0 + $0x17c] sm:$0x1]
  %v1361 = vld [vmem:[%s0 + $0x180] sm:$0xe]
  %v1362 = vld [vmem:[%s0 + $0x184] sm:$0xf]
  %v1363 = vld [vmem:[%s0 + $0x188] sm:$0x1]
  %v1364 = vld [vmem:[%s0 + $0x18c] sm:$0xe]
  %v1365 = vld [vmem:[%s0 + $0x190] sm:$0xf]
  %v1366 = vld [vmem:[%s0 + $0x194] sm:$0x1]
  %vm1463 = vcmask 1042432
  %vm1464 = vcmask 1046532
  %vm1465 = vmor %vm1463, %vm1464
  %v1466 = vrot.slane %v1271, 5
  %v1467 = vrot.slane %v1466, 4
  %v1468 = vrot.slane %v1272, 5
  %v1469 = vsel %vm1465, %v1467, %v1468
  %v1470 = vrot.slane %v1468, 4
  %v1471 = vrot.slane %v1273, 5
  %v1472 = vsel %vm1465, %v1470, %v1471
  %v1473 = vrot.slane %v1274, 5
  %v1474 = vrot.slane %v1473, 4
  %v1475 = vrot.slane %v1275, 5
  %v1476 = vsel %vm1465, %v1474, %v1475
  %v1477 = vrot.slane %v1475, 4
  %v1478 = vrot.slane %v1276, 5
  %v1479 = vsel %vm1465, %v1477, %v1478
  %v1480 = vrot.slane %v1277, 5
  %v1481 = vrot.slane %v1480, 4
  %v1482 = vrot.slane %v1278, 5
  %v1483 = vsel %vm1465, %v1481, %v1482
  %v1484 = vrot.slane %v1482, 4
  %v1485 = vrot.slane %v1279, 5
  %v1486 = vsel %vm1465, %v1484, %v1485
  %v1487 = vrot.slane %v1280, 5
  %v1488 = vrot.slane %v1487, 4
  %v1489 = vrot.slane %v1281, 5
  %v1490 = vsel %vm1465, %v1488, %v1489
  %v1491 = vrot.slane %v1489, 4
  %v1492 = vrot.slane %v1282, 5
  %v1493 = vsel %vm1465, %v1491, %v1492
  %v1494 = vrot.slane %v1283, 5
  %v1495 = vrot.slane %v1494, 4
  %v1496 = vrot.slane %v1284, 5
  %v1497 = vsel %vm1465, %v1495, %v1496
  %v1498 = vrot.slane %v1496, 4
  %v1499 = vrot.slane %v1285, 5
  %v1500 = vsel %vm1465, %v1498, %v1499
  %v1501 = vrot.slane %v1286, 5
  %v1502 = vrot.slane %v1501, 4
  %v1503 = vrot.slane %v1287, 5
  %v1504 = vsel %vm1465, %v1502, %v1503
  %v1505 = vrot.slane %v1503, 4
  %v1506 = vrot.slane %v1288, 5
  %v1507 = vsel %vm1465, %v1505, %v1506
  %v1508 = vrot.slane %v1289, 5
  %v1509 = vrot.slane %v1508, 4
  %v1510 = vrot.slane %v1290, 5
  %v1511 = vsel %vm1465, %v1509, %v1510
  %v1512 = vrot.slane %v1510, 4
  %v1513 = vrot.slane %v1291, 5
  %v1514 = vsel %vm1465, %v1512, %v1513
  %v1515 = vrot.slane %v1292, 5
  %v1516 = vrot.slane %v1515, 4
  %v1517 = vrot.slane %v1293, 5
  %v1518 = vsel %vm1465, %v1516, %v1517
  %v1519 = vrot.slane %v1517, 4
  %v1520 = vrot.slane %v1294, 5
  %v1521 = vsel %vm1465, %v1519, %v1520
  %v1522 = vrot.slane %v1295, 5
  %v1523 = vrot.slane %v1522, 4
  %v1524 = vrot.slane %v1296, 5
  %v1525 = vsel %vm1465, %v1523, %v1524
  %v1526 = vrot.slane %v1524, 4
  %v1527 = vrot.slane %v1297, 5
  %v1528 = vsel %vm1465, %v1526, %v1527
  %v1529 = vrot.slane %v1298, 5
  %v1530 = vrot.slane %v1529, 4
  %v1531 = vrot.slane %v1299, 5
  %v1532 = vsel %vm1465, %v1530, %v1531
  %v1533 = vrot.slane %v1531, 4
  %v1534 = vrot.slane %v1300, 5
  %v1535 = vsel %vm1465, %v1533, %v1534
  %v1536 = vrot.slane %v1301, 5
  %v1537 = vrot.slane %v1536, 4
  %v1538 = vrot.slane %v1302, 5
  %v1539 = vsel %vm1465, %v1537, %v1538
  %v1540 = vrot.slane %v1538, 4
  %v1541 = vrot.slane %v1303, 5
  %v1542 = vsel %vm1465, %v1540, %v1541
  %v1543 = vrot.slane %v1304, 5
  %v1544 = vrot.slane %v1543, 4
  %v1545 = vrot.slane %v1305, 5
  %v1546 = vsel %vm1465, %v1544, %v1545
  %v1547 = vrot.slane %v1545, 4
  %v1548 = vrot.slane %v1306, 5
  %v1549 = vsel %vm1465, %v1547, %v1548
  %v1550 = vrot.slane %v1307, 5
  %v1551 = vrot.slane %v1550, 4
  %v1552 = vrot.slane %v1308, 5
  %v1553 = vsel %vm1465, %v1551, %v1552
  %v1554 = vrot.slane %v1552, 4
  %v1555 = vrot.slane %v1309, 5
  %v1556 = vsel %vm1465, %v1554, %v1555
  %v1557 = vrot.slane %v1310, 5
  %v1558 = vrot.slane %v1557, 4
  %v1559 = vrot.slane %v1311, 5
  %v1560 = vsel %vm1465, %v1558, %v1559
  %v1561 = vrot.slane %v1559, 4
  %v1562 = vrot.slane %v1312, 5
  %v1563 = vsel %vm1465, %v1561, %v1562
  %v1564 = vrot.slane %v1313, 5
  %v1565 = vrot.slane %v1564, 4
  %v1566 = vrot.slane %v1314, 5
  %v1567 = vsel %vm1465, %v1565, %v1566
  %v1568 = vrot.slane %v1566, 4
  %v1569 = vrot.slane %v1315, 5
  %v1570 = vsel %vm1465, %v1568, %v1569
  %v1571 = vrot.slane %v1316, 5
  %v1572 = vrot.slane %v1571, 4
  %v1573 = vrot.slane %v1317, 5
  %v1574 = vsel %vm1465, %v1572, %v1573
  %v1575 = vrot.slane %v1573, 4
  %v1576 = vrot.slane %v1318, 5
  %v1577 = vsel %vm1465, %v1575, %v1576
  %v1578 = vrot.slane %v1319, 5
  %v1579 = vrot.slane %v1578, 4
  %v1580 = vrot.slane %v1320, 5
  %v1581 = vsel %vm1465, %v1579, %v1580
  %v1582 = vrot.slane %v1580, 4
  %v1583 = vrot.slane %v1321, 5
  %v1584 = vsel %vm1465, %v1582, %v1583
  %v1585 = vrot.slane %v1322, 5
  %v1586 = vrot.slane %v1585, 4
  %v1587 = vrot.slane %v1323, 5
  %v1588 = vsel %vm1465, %v1586, %v1587
  %v1589 = vrot.slane %v1587, 4
  %v1590 = vrot.slane %v1324, 5
  %v1591 = vsel %vm1465, %v1589, %v1590
  %v1592 = vrot.slane %v1325, 5
  %v1593 = vrot.slane %v1592, 4
  %v1594 = vrot.slane %v1326, 5
  %v1595 = vsel %vm1465, %v1593, %v1594
  %v1596 = vrot.slane %v1594, 4
  %v1597 = vrot.slane %v1327, 5
  %v1598 = vsel %vm1465, %v1596, %v1597
  %v1599 = vrot.slane %v1328, 5
  %v1600 = vrot.slane %v1599, 4
  %v1601 = vrot.slane %v1329, 5
  %v1602 = vsel %vm1465, %v1600, %v1601
  %v1603 = vrot.slane %v1601, 4
  %v1604 = vrot.slane %v1330, 5
  %v1605 = vsel %vm1465, %v1603, %v1604
  %v1606 = vrot.slane %v1331, 5
  %v1607 = vrot.slane %v1606, 4
  %v1608 = vrot.slane %v1332, 5
  %v1609 = vsel %vm1465, %v1607, %v1608
  %v1610 = vrot.slane %v1608, 4
  %v1611 = vrot.slane %v1333, 5
  %v1612 = vsel %vm1465, %v1610, %v1611
  %v1613 = vrot.slane %v1334, 5
  %v1614 = vrot.slane %v1613, 4
  %v1615 = vrot.slane %v1335, 5
  %v1616 = vsel %vm1465, %v1614, %v1615
  %v1617 = vrot.slane %v1615, 4
  %v1618 = vrot.slane %v1336, 5
  %v1619 = vsel %vm1465, %v1617, %v1618
  %v1620 = vrot.slane %v1337, 5
  %v1621 = vrot.slane %v1620, 4
  %v1622 = vrot.slane %v1338, 5
  %v1623 = vsel %vm1465, %v1621, %v1622
  %v1624 = vrot.slane %v1622, 4
  %v1625 = vrot.slane %v1339, 5
  %v1626 = vsel %vm1465, %v1624, %v1625
  %v1627 = vrot.slane %v1340, 5
  %v1628 = vrot.slane %v1627, 4
  %v1629 = vrot.slane %v1341, 5
  %v1630 = vsel %vm1465, %v1628, %v1629
  %v1631 = vrot.slane %v1629, 4
  %v1632 = vrot.slane %v1342, 5
  %v1633 = vsel %vm1465, %v1631, %v1632
  %v1634 = vrot.slane %v1343, 5
  %v1635 = vrot.slane %v1634, 4
  %v1636 = vrot.slane %v1344, 5
  %v1637 = vsel %vm1465, %v1635, %v1636
  %v1638 = vrot.slane %v1636, 4
  %v1639 = vrot.slane %v1345, 5
  %v1640 = vsel %vm1465, %v1638, %v1639
  %v1641 = vrot.slane %v1346, 5
  %v1642 = vrot.slane %v1641, 4
  %v1643 = vrot.slane %v1347, 5
  %v1644 = vsel %vm1465, %v1642, %v1643
  %v1645 = vrot.slane %v1643, 4
  %v1646 = vrot.slane %v1348, 5
  %v1647 = vsel %vm1465, %v1645, %v1646
  %v1648 = vrot.slane %v1349, 5
  %v1649 = vrot.slane %v1648, 4
  %v1650 = vrot.slane %v1350, 5
  %v1651 = vsel %vm1465, %v1649, %v1650
  %v1652 = vrot.slane %v1650, 4
  %v1653 = vrot.slane %v1351, 5
  %v1654 = vsel %vm1465, %v1652, %v1653
  %v1655 = vrot.slane %v1352, 5
  %v1656 = vrot.slane %v1655, 4
  %v1657 = vrot.slane %v1353, 5
  %v1658 = vsel %vm1465, %v1656, %v1657
  %v1659 = vrot.slane %v1657, 4
  %v1660 = vrot.slane %v1354, 5
  %v1661 = vsel %vm1465, %v1659, %v1660
  %v1662 = vrot.slane %v1355, 5
  %v1663 = vrot.slane %v1662, 4
  %v1664 = vrot.slane %v1356, 5
  %v1665 = vsel %vm1465, %v1663, %v1664
  %v1666 = vrot.slane %v1664, 4
  %v1667 = vrot.slane %v1357, 5
  %v1668 = vsel %vm1465, %v1666, %v1667
  %v1669 = vrot.slane %v1358, 5
  %v1670 = vrot.slane %v1669, 4
  %v1671 = vrot.slane %v1359, 5
  %v1672 = vsel %vm1465, %v1670, %v1671
  %v1673 = vrot.slane %v1671, 4
  %v1674 = vrot.slane %v1360, 5
  %v1675 = vsel %vm1465, %v1673, %v1674
  %v1676 = vrot.slane %v1361, 5
  %v1677 = vrot.slane %v1676, 4
  %v1678 = vrot.slane %v1362, 5
  %v1679 = vsel %vm1465, %v1677, %v1678
  %v1680 = vrot.slane %v1678, 4
  %v1681 = vrot.slane %v1363, 5
  %v1682 = vsel %vm1465, %v1680, %v1681
  %v1683 = vrot.slane %v1364, 5
  %v1684 = vrot.slane %v1683, 4
  %v1685 = vrot.slane %v1365, 5
  %v1686 = vsel %vm1465, %v1684, %v1685
  %v1687 = vrot.slane %v1685, 4
  %v1688 = vrot.slane %v1366, 5
  %v1689 = vsel %vm1465, %v1687, %v1688
  %1690 = vrot.lane.b32.xlu0 %v1469, 8
  %v1691 = vpop.permute.xlu0 %1690
  %1692 = vrot.lane.b32.xlu0 %v1472, 8
  %v1693 = vpop.permute.xlu0 %1692
  %1694 = vrot.lane.b32.xlu0 %v1476, 8
  %v1695 = vpop.permute.xlu0 %1694
  %1696 = vrot.lane.b32.xlu0 %v1479, 8
  %v1697 = vpop.permute.xlu0 %1696
  %1698 = vrot.lane.b32.xlu0 %v1483, 8
  %v1699 = vpop.permute.xlu0 %1698
  %1700 = vrot.lane.b32.xlu0 %v1486, 8
  %v1701 = vpop.permute.xlu0 %1700
  %1702 = vrot.lane.b32.xlu0 %v1490, 8
  %v1703 = vpop.permute.xlu0 %1702
  %1704 = vrot.lane.b32.xlu0 %v1493, 8
  %v1705 = vpop.permute.xlu0 %1704
  %1706 = vrot.lane.b32.xlu0 %v1497, 8
  %v1707 = vpop.permute.xlu0 %1706
  %1708 = vrot.lane.b32.xlu0 %v1500, 8
  %v1709 = vpop.permute.xlu0 %1708
  %1710 = vrot.lane.b32.xlu0 %v1504, 8
  %v1711 = vpop.permute.xlu0 %1710
  %1712 = vrot.lane.b32.xlu0 %v1507, 8
  %v1713 = vpop.permute.xlu0 %1712
  %1714 = vrot.lane.b32.xlu0 %v1511, 8
  %v1715 = vpop.permute.xlu0 %1714
  %1716 = vrot.lane.b32.xlu0 %v1514, 8
  %v1717 = vpop.permute.xlu0 %1716
  %1718 = vrot.lane.b32.xlu0 %v1518, 8
  %v1719 = vpop.permute.xlu0 %1718
  %1720 = vrot.lane.b32.xlu0 %v1521, 8
  %v1721 = vpop.permute.xlu0 %1720
  %1722 = vrot.lane.b32.xlu0 %v1525, 8
  %v1723 = vpop.permute.xlu0 %1722
  %1724 = vrot.lane.b32.xlu0 %v1528, 8
  %v1725 = vpop.permute.xlu0 %1724
  %1726 = vrot.lane.b32.xlu0 %v1532, 8
  %v1727 = vpop.permute.xlu0 %1726
  %1728 = vrot.lane.b32.xlu0 %v1535, 8
  %v1729 = vpop.permute.xlu0 %1728
  %1730 = vrot.lane.b32.xlu0 %v1539, 8
  %v1731 = vpop.permute.xlu0 %1730
  %1732 = vrot.lane.b32.xlu0 %v1542, 8
  %v1733 = vpop.permute.xlu0 %1732
  %1734 = vrot.lane.b32.xlu0 %v1546, 8
  %v1735 = vpop.permute.xlu0 %1734
  %1736 = vrot.lane.b32.xlu0 %v1549, 8
  %v1737 = vpop.permute.xlu0 %1736
  %1738 = vrot.lane.b32.xlu0 %v1553, 8
  %v1739 = vpop.permute.xlu0 %1738
  %1740 = vrot.lane.b32.xlu0 %v1556, 8
  %v1741 = vpop.permute.xlu0 %1740
  %1742 = vrot.lane.b32.xlu0 %v1560, 8
  %v1743 = vpop.permute.xlu0 %1742
  %1744 = vrot.lane.b32.xlu0 %v1563, 8
  %v1745 = vpop.permute.xlu0 %1744
  %1746 = vrot.lane.b32.xlu0 %v1567, 8
  %v1747 = vpop.permute.xlu0 %1746
  %1748 = vrot.lane.b32.xlu0 %v1570, 8
  %v1749 = vpop.permute.xlu0 %1748
  %1750 = vrot.lane.b32.xlu0 %v1574, 8
  %v1751 = vpop.permute.xlu0 %1750
  %1752 = vrot.lane.b32.xlu0 %v1577, 8
  %v1753 = vpop.permute.xlu0 %1752
  %1754 = vrot.lane.b32.xlu0 %v1581, 8
  %v1755 = vpop.permute.xlu0 %1754
  %1756 = vrot.lane.b32.xlu0 %v1584, 8
  %v1757 = vpop.permute.xlu0 %1756
  %1758 = vrot.lane.b32.xlu0 %v1588, 8
  %v1759 = vpop.permute.xlu0 %1758
  %1760 = vrot.lane.b32.xlu0 %v1591, 8
  %v1761 = vpop.permute.xlu0 %1760
  %1762 = vrot.lane.b32.xlu0 %v1595, 8
  %v1763 = vpop.permute.xlu0 %1762
  %1764 = vrot.lane.b32.xlu0 %v1598, 8
  %v1765 = vpop.permute.xlu0 %1764
  %1766 = vrot.lane.b32.xlu0 %v1602, 8
  %v1767 = vpop.permute.xlu0 %1766
  %1768 = vrot.lane.b32.xlu0 %v1605, 8
  %v1769 = vpop.permute.xlu0 %1768
  %1770 = vrot.lane.b32.xlu0 %v1609, 8
  %v1771 = vpop.permute.xlu0 %1770
  %1772 = vrot.lane.b32.xlu0 %v1612, 8
  %v1773 = vpop.permute.xlu0 %1772
  %1774 = vrot.lane.b32.xlu0 %v1616, 8
  %v1775 = vpop.permute.xlu0 %1774
  %1776 = vrot.lane.b32.xlu0 %v1619, 8
  %v1777 = vpop.permute.xlu0 %1776
  %1778 = vrot.lane.b32.xlu0 %v1623, 8
  %v1779 = vpop.permute.xlu0 %1778
  %1780 = vrot.lane.b32.xlu0 %v1626, 8
  %v1781 = vpop.permute.xlu0 %1780
  %1782 = vrot.lane.b32.xlu0 %v1630, 8
  %v1783 = vpop.permute.xlu0 %1782
  %1784 = vrot.lane.b32.xlu0 %v1633, 8
  %v1785 = vpop.permute.xlu0 %1784
  %1786 = vrot.lane.b32.xlu0 %v1637, 8
  %v1787 = vpop.permute.xlu0 %1786
  %1788 = vrot.lane.b32.xlu0 %v1640, 8
  %v1789 = vpop.permute.xlu0 %1788
  %1790 = vrot.lane.b32.xlu0 %v1644, 8
  %v1791 = vpop.permute.xlu0 %1790
  %1792 = vrot.lane.b32.xlu0 %v1647, 8
  %v1793 = vpop.permute.xlu0 %1792
  %1794 = vrot.lane.b32.xlu0 %v1651, 8
  %v1795 = vpop.permute.xlu0 %1794
  %1796 = vrot.lane.b32.xlu0 %v1654, 8
  %v1797 = vpop.permute.xlu0 %1796
  %1798 = vrot.lane.b32.xlu0 %v1658, 8
  %v1799 = vpop.permute.xlu0 %1798
  %1800 = vrot.lane.b32.xlu0 %v1661, 8
  %v1801 = vpop.permute.xlu0 %1800
  %1802 = vrot.lane.b32.xlu0 %v1665, 8
  %v1803 = vpop.permute.xlu0 %1802
  %1804 = vrot.lane.b32.xlu0 %v1668, 8
  %v1805 = vpop.permute.xlu0 %1804
  %1806 = vrot.lane.b32.xlu0 %v1672, 8
  %v1807 = vpop.permute.xlu0 %1806
  %1808 = vrot.lane.b32.xlu0 %v1675, 8
  %v1809 = vpop.permute.xlu0 %1808
  %1810 = vrot.lane.b32.xlu0 %v1679, 8
  %v1811 = vpop.permute.xlu0 %1810
  %1812 = vrot.lane.b32.xlu0 %v1682, 8
  %v1813 = vpop.permute.xlu0 %1812
  %1814 = vrot.lane.b32.xlu0 %v1686, 8
  %v1815 = vpop.permute.xlu0 %1814
  %1816 = vrot.lane.b32.xlu0 %v1689, 8
  %v1817 = vpop.permute.xlu0 %1816
  %vm1882 = vcmask 93248
  %1883 = vst.msk [vmem:[#allocation2] sm:$0xf] %vm1882, %v1691
  %1884 = vst.msk [vmem:[#allocation2 + $0x4] sm:$0xf] %vm1882, %v1693
  %1885 = vst.msk [vmem:[#allocation2 + $0x8] sm:$0xf] %vm1882, %v1695
  %1886 = vst.msk [vmem:[#allocation2 + $0xc] sm:$0xf] %vm1882, %v1697
  %1887 = vst.msk [vmem:[#allocation2 + $0x10] sm:$0xf] %vm1882, %v1699
  %1888 = vst.msk [vmem:[#allocation2 + $0x14] sm:$0xf] %vm1882, %v1701
  %1889 = vst.msk [vmem:[#allocation2 + $0x18] sm:$0xf] %vm1882, %v1703
  %1890 = vst.msk [vmem:[#allocation2 + $0x1c] sm:$0xf] %vm1882, %v1705
  %1891 = vst.msk [vmem:[#allocation2 + $0x20] sm:$0xf] %vm1882, %v1707
  %1892 = vst.msk [vmem:[#allocation2 + $0x24] sm:$0xf] %vm1882, %v1709
  %1893 = vst.msk [vmem:[#allocation2 + $0x28] sm:$0xf] %vm1882, %v1711
  %1894 = vst.msk [vmem:[#allocation2 + $0x2c] sm:$0xf] %vm1882, %v1713
  %1895 = vst.msk [vmem:[#allocation2 + $0x30] sm:$0xf] %vm1882, %v1715
  %1896 = vst.msk [vmem:[#allocation2 + $0x34] sm:$0xf] %vm1882, %v1717
  %1897 = vst.msk [vmem:[#allocation2 + $0x38] sm:$0xf] %vm1882, %v1719
  %1898 = vst.msk [vmem:[#allocation2 + $0x3c] sm:$0xf] %vm1882, %v1721
  %1899 = vst.msk [vmem:[#allocation2 + $0x40] sm:$0xf] %vm1882, %v1723
  %1900 = vst.msk [vmem:[#allocation2 + $0x44] sm:$0xf] %vm1882, %v1725
  %1901 = vst.msk [vmem:[#allocation2 + $0x48] sm:$0xf] %vm1882, %v1727
  %1902 = vst.msk [vmem:[#allocation2 + $0x4c] sm:$0xf] %vm1882, %v1729
  %1903 = vst.msk [vmem:[#allocation2 + $0x50] sm:$0xf] %vm1882, %v1731
  %1904 = vst.msk [vmem:[#allocation2 + $0x54] sm:$0xf] %vm1882, %v1733
  %1905 = vst.msk [vmem:[#allocation2 + $0x58] sm:$0xf] %vm1882, %v1735
  %1906 = vst.msk [vmem:[#allocation2 + $0x5c] sm:$0xf] %vm1882, %v1737
  %1907 = vst.msk [vmem:[#allocation2 + $0x60] sm:$0xf] %vm1882, %v1739
  %1908 = vst.msk [vmem:[#allocation2 + $0x64] sm:$0xf] %vm1882, %v1741
  %1909 = vst.msk [vmem:[#allocation2 + $0x68] sm:$0xf] %vm1882, %v1743
  %1910 = vst.msk [vmem:[#allocation2 + $0x6c] sm:$0xf] %vm1882, %v1745
  %1911 = vst.msk [vmem:[#allocation2 + $0x70] sm:$0xf] %vm1882, %v1747
  %1912 = vst.msk [vmem:[#allocation2 + $0x74] sm:$0xf] %vm1882, %v1749
  %1913 = vst.msk [vmem:[#allocation2 + $0x78] sm:$0xf] %vm1882, %v1751
  %1914 = vst.msk [vmem:[#allocation2 + $0x7c] sm:$0xf] %vm1882, %v1753
  %1915 = vst.msk [vmem:[#allocation2 + $0x80] sm:$0xf] %vm1882, %v1755
  %1916 = vst.msk [vmem:[#allocation2 + $0x84] sm:$0xf] %vm1882, %v1757
  %1917 = vst.msk [vmem:[#allocation2 + $0x88] sm:$0xf] %vm1882, %v1759
  %1918 = vst.msk [vmem:[#allocation2 + $0x8c] sm:$0xf] %vm1882, %v1761
  %1919 = vst.msk [vmem:[#allocation2 + $0x90] sm:$0xf] %vm1882, %v1763
  %1920 = vst.msk [vmem:[#allocation2 + $0x94] sm:$0xf] %vm1882, %v1765
  %1921 = vst.msk [vmem:[#allocation2 + $0x98] sm:$0xf] %vm1882, %v1767
  %1922 = vst.msk [vmem:[#allocation2 + $0x9c] sm:$0xf] %vm1882, %v1769
  %1923 = vst.msk [vmem:[#allocation2 + $0xa0] sm:$0xf] %vm1882, %v1771
  %1924 = vst.msk [vmem:[#allocation2 + $0xa4] sm:$0xf] %vm1882, %v1773
  %1925 = vst.msk [vmem:[#allocation2 + $0xa8] sm:$0xf] %vm1882, %v1775
  %1926 = vst.msk [vmem:[#allocation2 + $0xac] sm:$0xf] %vm1882, %v1777
  %1927 = vst.msk [vmem:[#allocation2 + $0xb0] sm:$0xf] %vm1882, %v1779
  %1928 = vst.msk [vmem:[#allocation2 + $0xb4] sm:$0xf] %vm1882, %v1781
  %1929 = vst.msk [vmem:[#allocation2 + $0xb8] sm:$0xf] %vm1882, %v1783
  %1930 = vst.msk [vmem:[#allocation2 + $0xbc] sm:$0xf] %vm1882, %v1785
  %1931 = vst.msk [vmem:[#allocation2 + $0xc0] sm:$0xf] %vm1882, %v1787
  %1932 = vst.msk [vmem:[#allocation2 + $0xc4] sm:$0xf] %vm1882, %v1789
  %1933 = vst.msk [vmem:[#allocation2 + $0xc8] sm:$0xf] %vm1882, %v1791
  %1934 = vst.msk [vmem:[#allocation2 + $0xcc] sm:$0xf] %vm1882, %v1793
  %1935 = vst.msk [vmem:[#allocation2 + $0xd0] sm:$0xf] %vm1882, %v1795
  %1936 = vst.msk [vmem:[#allocation2 + $0xd4] sm:$0xf] %vm1882, %v1797
  %1937 = vst.msk [vmem:[#allocation2 + $0xd8] sm:$0xf] %vm1882, %v1799
  %1938 = vst.msk [vmem:[#allocation2 + $0xdc] sm:$0xf] %vm1882, %v1801
  %1939 = vst.msk [vmem:[#allocation2 + $0xe0] sm:$0xf] %vm1882, %v1803
  %1940 = vst.msk [vmem:[#allocation2 + $0xe4] sm:$0xf] %vm1882, %v1805
  %1941 = vst.msk [vmem:[#allocation2 + $0xe8] sm:$0xf] %vm1882, %v1807
  %1942 = vst.msk [vmem:[#allocation2 + $0xec] sm:$0xf] %vm1882, %v1809
  %1943 = vst.msk [vmem:[#allocation2 + $0xf0] sm:$0xf] %vm1882, %v1811
  %1944 = vst.msk [vmem:[#allocation2 + $0xf4] sm:$0xf] %vm1882, %v1813
  %1945 = vst.msk [vmem:[#allocation2 + $0xf8] sm:$0xf] %vm1882, %v1815
  %1946 = vst.msk [vmem:[#allocation2 + $0xfc] sm:$0xf] %vm1882, %v1817
  %s1947 = scalar_lea.vmem %s0, 12
  %v1948 = vld [vmem:[%s1947] sm:$0xf]
  %v1949 = vld [vmem:[%s1947 + $0x4] sm:$0xf]
  %v1950 = vld [vmem:[%s1947 + $0xc] sm:$0xf]
  %v1951 = vld [vmem:[%s1947 + $0x10] sm:$0xf]
  %v1952 = vld [vmem:[%s1947 + $0x18] sm:$0xf]
  %v1953 = vld [vmem:[%s1947 + $0x1c] sm:$0xf]
  %v1954 = vld [vmem:[%s1947 + $0x24] sm:$0xf]
  %v1955 = vld [vmem:[%s1947 + $0x28] sm:$0xf]
  %v1956 = vld [vmem:[%s1947 + $0x30] sm:$0xf]
  %v1957 = vld [vmem:[%s1947 + $0x34] sm:$0xf]
  %v1958 = vld [vmem:[%s1947 + $0x3c] sm:$0xf]
  %v1959 = vld [vmem:[%s1947 + $0x40] sm:$0xf]
  %v1960 = vld [vmem:[%s1947 + $0x48] sm:$0xf]
  %v1961 = vld [vmem:[%s1947 + $0x4c] sm:$0xf]
  %v1962 = vld [vmem:[%s1947 + $0x54] sm:$0xf]
  %v1963 = vld [vmem:[%s1947 + $0x58] sm:$0xf]
  %v1964 = vld [vmem:[%s1947 + $0x60] sm:$0xf]
  %v1965 = vld [vmem:[%s1947 + $0x64] sm:$0xf]
  %v1966 = vld [vmem:[%s1947 + $0x6c] sm:$0xf]
  %v1967 = vld [vmem:[%s1947 + $0x70] sm:$0xf]
  %v1968 = vld [vmem:[%s1947 + $0x78] sm:$0xf]
  %v1969 = vld [vmem:[%s1947 + $0x7c] sm:$0xf]
  %v1970 = vld [vmem:[%s1947 + $0x84] sm:$0xf]
  %v1971 = vld [vmem:[%s1947 + $0x88] sm:$0xf]
  %v1972 = vld [vmem:[%s1947 + $0x90] sm:$0xf]
  %v1973 = vld [vmem:[%s1947 + $0x94] sm:$0xf]
  %v1974 = vld [vmem:[%s1947 + $0x9c] sm:$0xf]
  %v1975 = vld [vmem:[%s1947 + $0xa0] sm:$0xf]
  %v1976 = vld [vmem:[%s1947 + $0xa8] sm:$0xf]
  %v1977 = vld [vmem:[%s1947 + $0xac] sm:$0xf]
  %v1978 = vld [vmem:[%s1947 + $0xb4] sm:$0xf]
  %v1979 = vld [vmem:[%s1947 + $0xb8] sm:$0xf]
  %v1980 = vld [vmem:[%s1947 + $0xd8] sm:$0xf]
  %v1981 = vld [vmem:[%s1947 + $0xdc] sm:$0xf]
  %v1982 = vld [vmem:[%s1947 + $0xe4] sm:$0xf]
  %v1983 = vld [vmem:[%s1947 + $0xe8] sm:$0xf]
  %v1984 = vld [vmem:[%s1947 + $0xf0] sm:$0xf]
  %v1985 = vld [vmem:[%s1947 + $0xf4] sm:$0xf]
  %v1986 = vld [vmem:[%s1947 + $0xfc] sm:$0xf]
  %v1987 = vld [vmem:[%s1947 + $0x100] sm:$0xf]
  %v1988 = vld [vmem:[%s1947 + $0x108] sm:$0xf]
  %v1989 = vld [vmem:[%s1947 + $0x10c] sm:$0xf]
  %v1990 = vld [vmem:[%s1947 + $0x114] sm:$0xf]
  %v1991 = vld [vmem:[%s1947 + $0x118] sm:$0xf]
  %v1992 = vld [vmem:[%s1947 + $0x120] sm:$0xf]
  %v1993 = vld [vmem:[%s1947 + $0x124] sm:$0xf]
  %v1994 = vld [vmem:[%s1947 + $0x12c] sm:$0xf]
  %v1995 = vld [vmem:[%s1947 + $0x130] sm:$0xf]
  %v1996 = vld [vmem:[%s1947 + $0x138] sm:$0xf]
  %v1997 = vld [vmem:[%s1947 + $0x13c] sm:$0xf]
  %v1998 = vld [vmem:[%s1947 + $0x144] sm:$0xf]
  %v1999 = vld [vmem:[%s1947 + $0x148] sm:$0xf]
  %v2000 = vld [vmem:[%s1947 + $0x150] sm:$0xf]
  %v2001 = vld [vmem:[%s1947 + $0x154] sm:$0xf]
  %v2002 = vld [vmem:[%s1947 + $0x15c] sm:$0xf]
  %v2003 = vld [vmem:[%s1947 + $0x160] sm:$0xf]
  %v2004 = vld [vmem:[%s1947 + $0x168] sm:$0xf]
  %v2005 = vld [vmem:[%s1947 + $0x16c] sm:$0xf]
  %v2006 = vld [vmem:[%s1947 + $0x174] sm:$0xf]
  %v2007 = vld [vmem:[%s1947 + $0x178] sm:$0xf]
  %v2008 = vld [vmem:[%s1947 + $0x180] sm:$0xf]
  %v2009 = vld [vmem:[%s1947 + $0x184] sm:$0xf]
  %v2010 = vld [vmem:[%s1947 + $0x18c] sm:$0xf]
  %v2011 = vld [vmem:[%s1947 + $0x190] sm:$0xf]
  %2076 = vrot.lane.b32.xlu0 %v1948, 12
  %v2077 = vpop.permute.xlu0 %2076
  %2078 = vrot.lane.b32.xlu0 %v1949, 12
  %v2079 = vpop.permute.xlu0 %2078
  %2080 = vrot.lane.b32.xlu0 %v1950, 12
  %v2081 = vpop.permute.xlu0 %2080
  %2082 = vrot.lane.b32.xlu0 %v1951, 12
  %v2083 = vpop.permute.xlu0 %2082
  %2084 = vrot.lane.b32.xlu0 %v1952, 12
  %v2085 = vpop.permute.xlu0 %2084
  %2086 = vrot.lane.b32.xlu0 %v1953, 12
  %v2087 = vpop.permute.xlu0 %2086
  %2088 = vrot.lane.b32.xlu0 %v1954, 12
  %v2089 = vpop.permute.xlu0 %2088
  %2090 = vrot.lane.b32.xlu0 %v1955, 12
  %v2091 = vpop.permute.xlu0 %2090
  %2092 = vrot.lane.b32.xlu0 %v1956, 12
  %v2093 = vpop.permute.xlu0 %2092
  %2094 = vrot.lane.b32.xlu0 %v1957, 12
  %v2095 = vpop.permute.xlu0 %2094
  %2096 = vrot.lane.b32.xlu0 %v1958, 12
  %v2097 = vpop.permute.xlu0 %2096
  %2098 = vrot.lane.b32.xlu0 %v1959, 12
  %v2099 = vpop.permute.xlu0 %2098
  %2100 = vrot.lane.b32.xlu0 %v1960, 12
  %v2101 = vpop.permute.xlu0 %2100
  %2102 = vrot.lane.b32.xlu0 %v1961, 12
  %v2103 = vpop.permute.xlu0 %2102
  %2104 = vrot.lane.b32.xlu0 %v1962, 12
  %v2105 = vpop.permute.xlu0 %2104
  %2106 = vrot.lane.b32.xlu0 %v1963, 12
  %v2107 = vpop.permute.xlu0 %2106
  %2108 = vrot.lane.b32.xlu0 %v1964, 12
  %v2109 = vpop.permute.xlu0 %2108
  %2110 = vrot.lane.b32.xlu0 %v1965, 12
  %v2111 = vpop.permute.xlu0 %2110
  %2112 = vrot.lane.b32.xlu0 %v1966, 12
  %v2113 = vpop.permute.xlu0 %2112
  %2114 = vrot.lane.b32.xlu0 %v1967, 12
  %v2115 = vpop.permute.xlu0 %2114
  %2116 = vrot.lane.b32.xlu0 %v1968, 12
  %v2117 = vpop.permute.xlu0 %2116
  %2118 = vrot.lane.b32.xlu0 %v1969, 12
  %v2119 = vpop.permute.xlu0 %2118
  %2120 = vrot.lane.b32.xlu0 %v1970, 12
  %v2121 = vpop.permute.xlu0 %2120
  %2122 = vrot.lane.b32.xlu0 %v1971, 12
  %v2123 = vpop.permute.xlu0 %2122
  %2124 = vrot.lane.b32.xlu0 %v1972, 12
  %v2125 = vpop.permute.xlu0 %2124
  %2126 = vrot.lane.b32.xlu0 %v1973, 12
  %v2127 = vpop.permute.xlu0 %2126
  %2128 = vrot.lane.b32.xlu0 %v1974, 12
  %v2129 = vpop.permute.xlu0 %2128
  %2130 = vrot.lane.b32.xlu0 %v1975, 12
  %v2131 = vpop.permute.xlu0 %2130
  %2132 = vrot.lane.b32.xlu0 %v1976, 12
  %v2133 = vpop.permute.xlu0 %2132
  %2134 = vrot.lane.b32.xlu0 %v1977, 12
  %v2135 = vpop.permute.xlu0 %2134
  %2136 = vrot.lane.b32.xlu0 %v1978, 12
  %v2137 = vpop.permute.xlu0 %2136
  %2138 = vrot.lane.b32.xlu0 %v1979, 12
  %v2139 = vpop.permute.xlu0 %2138
  %2140 = vrot.lane.b32.xlu0 %v1980, 12
  %v2141 = vpop.permute.xlu0 %2140
  %2142 = vrot.lane.b32.xlu0 %v1981, 12
  %v2143 = vpop.permute.xlu0 %2142
  %2144 = vrot.lane.b32.xlu0 %v1982, 12
  %v2145 = vpop.permute.xlu0 %2144
  %2146 = vrot.lane.b32.xlu0 %v1983, 12
  %v2147 = vpop.permute.xlu0 %2146
  %2148 = vrot.lane.b32.xlu0 %v1984, 12
  %v2149 = vpop.permute.xlu0 %2148
  %2150 = vrot.lane.b32.xlu0 %v1985, 12
  %v2151 = vpop.permute.xlu0 %2150
  %2152 = vrot.lane.b32.xlu0 %v1986, 12
  %v2153 = vpop.permute.xlu0 %2152
  %2154 = vrot.lane.b32.xlu0 %v1987, 12
  %v2155 = vpop.permute.xlu0 %2154
  %2156 = vrot.lane.b32.xlu0 %v1988, 12
  %v2157 = vpop.permute.xlu0 %2156
  %2158 = vrot.lane.b32.xlu0 %v1989, 12
  %v2159 = vpop.permute.xlu0 %2158
  %2160 = vrot.lane.b32.xlu0 %v1990, 12
  %v2161 = vpop.permute.xlu0 %2160
  %2162 = vrot.lane.b32.xlu0 %v1991, 12
  %v2163 = vpop.permute.xlu0 %2162
  %2164 = vrot.lane.b32.xlu0 %v1992, 12
  %v2165 = vpop.permute.xlu0 %2164
  %2166 = vrot.lane.b32.xlu0 %v1993, 12
  %v2167 = vpop.permute.xlu0 %2166
  %2168 = vrot.lane.b32.xlu0 %v1994, 12
  %v2169 = vpop.permute.xlu0 %2168
  %2170 = vrot.lane.b32.xlu0 %v1995, 12
  %v2171 = vpop.permute.xlu0 %2170
  %2172 = vrot.lane.b32.xlu0 %v1996, 12
  %v2173 = vpop.permute.xlu0 %2172
  %2174 = vrot.lane.b32.xlu0 %v1997, 12
  %v2175 = vpop.permute.xlu0 %2174
  %2176 = vrot.lane.b32.xlu0 %v1998, 12
  %v2177 = vpop.permute.xlu0 %2176
  %2178 = vrot.lane.b32.xlu0 %v1999, 12
  %v2179 = vpop.permute.xlu0 %2178
  %2180 = vrot.lane.b32.xlu0 %v2000, 12
  %v2181 = vpop.permute.xlu0 %2180
  %2182 = vrot.lane.b32.xlu0 %v2001, 12
  %v2183 = vpop.permute.xlu0 %2182
  %2184 = vrot.lane.b32.xlu0 %v2002, 12
  %v2185 = vpop.permute.xlu0 %2184
  %2186 = vrot.lane.b32.xlu0 %v2003, 12
  %v2187 = vpop.permute.xlu0 %2186
  %2188 = vrot.lane.b32.xlu0 %v2004, 12
  %v2189 = vpop.permute.xlu0 %2188
  %2190 = vrot.lane.b32.xlu0 %v2005, 12
  %v2191 = vpop.permute.xlu0 %2190
  %2192 = vrot.lane.b32.xlu0 %v2006, 12
  %v2193 = vpop.permute.xlu0 %2192
  %2194 = vrot.lane.b32.xlu0 %v2007, 12
  %v2195 = vpop.permute.xlu0 %2194
  %2196 = vrot.lane.b32.xlu0 %v2008, 12
  %v2197 = vpop.permute.xlu0 %2196
  %2198 = vrot.lane.b32.xlu0 %v2009, 12
  %v2199 = vpop.permute.xlu0 %2198
  %2200 = vrot.lane.b32.xlu0 %v2010, 12
  %v2201 = vpop.permute.xlu0 %2200
  %2202 = vrot.lane.b32.xlu0 %v2011, 12
  %v2203 = vpop.permute.xlu0 %2202
  %vm2268 = vcmask 126048
  %2269 = vst.msk [vmem:[#allocation2] sm:$0xf] %vm2268, %v2077
  %2270 = vst.msk [vmem:[#allocation2 + $0x4] sm:$0xf] %vm2268, %v2079
  %2271 = vst.msk [vmem:[#allocation2 + $0x8] sm:$0xf] %vm2268, %v2081
  %2272 = vst.msk [vmem:[#allocation2 + $0xc] sm:$0xf] %vm2268, %v2083
  %2273 = vst.msk [vmem:[#allocation2 + $0x10] sm:$0xf] %vm2268, %v2085
  %2274 = vst.msk [vmem:[#allocation2 + $0x14] sm:$0xf] %vm2268, %v2087
  %2275 = vst.msk [vmem:[#allocation2 + $0x18] sm:$0xf] %vm2268, %v2089
  %2276 = vst.msk [vmem:[#allocation2 + $0x1c] sm:$0xf] %vm2268, %v2091
  %2277 = vst.msk [vmem:[#allocation2 + $0x20] sm:$0xf] %vm2268, %v2093
  %2278 = vst.msk [vmem:[#allocation2 + $0x24] sm:$0xf] %vm2268, %v2095
  %2279 = vst.msk [vmem:[#allocation2 + $0x28] sm:$0xf] %vm2268, %v2097
  %2280 = vst.msk [vmem:[#allocation2 + $0x2c] sm:$0xf] %vm2268, %v2099
  %2281 = vst.msk [vmem:[#allocation2 + $0x30] sm:$0xf] %vm2268, %v2101
  %2282 = vst.msk [vmem:[#allocation2 + $0x34] sm:$0xf] %vm2268, %v2103
  %2283 = vst.msk [vmem:[#allocation2 + $0x38] sm:$0xf] %vm2268, %v2105
  %2284 = vst.msk [vmem:[#allocation2 + $0x3c] sm:$0xf] %vm2268, %v2107
  %2285 = vst.msk [vmem:[#allocation2 + $0x40] sm:$0xf] %vm2268, %v2109
  %2286 = vst.msk [vmem:[#allocation2 + $0x44] sm:$0xf] %vm2268, %v2111
  %2287 = vst.msk [vmem:[#allocation2 + $0x48] sm:$0xf] %vm2268, %v2113
  %2288 = vst.msk [vmem:[#allocation2 + $0x4c] sm:$0xf] %vm2268, %v2115
  %2289 = vst.msk [vmem:[#allocation2 + $0x50] sm:$0xf] %vm2268, %v2117
  %2290 = vst.msk [vmem:[#allocation2 + $0x54] sm:$0xf] %vm2268, %v2119
  %2291 = vst.msk [vmem:[#allocation2 + $0x58] sm:$0xf] %vm2268, %v2121
  %2292 = vst.msk [vmem:[#allocation2 + $0x5c] sm:$0xf] %vm2268, %v2123
  %2293 = vst.msk [vmem:[#allocation2 + $0x60] sm:$0xf] %vm2268, %v2125
  %2294 = vst.msk [vmem:[#allocation2 + $0x64] sm:$0xf] %vm2268, %v2127
  %2295 = vst.msk [vmem:[#allocation2 + $0x68] sm:$0xf] %vm2268, %v2129
  %2296 = vst.msk [vmem:[#allocation2 + $0x6c] sm:$0xf] %vm2268, %v2131
  %2297 = vst.msk [vmem:[#allocation2 + $0x70] sm:$0xf] %vm2268, %v2133
  %2298 = vst.msk [vmem:[#allocation2 + $0x74] sm:$0xf] %vm2268, %v2135
  %2299 = vst.msk [vmem:[#allocation2 + $0x78] sm:$0xf] %vm2268, %v2137
  %2300 = vst.msk [vmem:[#allocation2 + $0x7c] sm:$0xf] %vm2268, %v2139
  %2301 = vst.msk [vmem:[#allocation2 + $0x80] sm:$0xf] %vm2268, %v2141
  %2302 = vst.msk [vmem:[#allocation2 + $0x84] sm:$0xf] %vm2268, %v2143
  %2303 = vst.msk [vmem:[#allocation2 + $0x88] sm:$0xf] %vm2268, %v2145
  %2304 = vst.msk [vmem:[#allocation2 + $0x8c] sm:$0xf] %vm2268, %v2147
  %2305 = vst.msk [vmem:[#allocation2 + $0x90] sm:$0xf] %vm2268, %v2149
  %2306 = vst.msk [vmem:[#allocation2 + $0x94] sm:$0xf] %vm2268, %v2151
  %2307 = vst.msk [vmem:[#allocation2 + $0x98] sm:$0xf] %vm2268, %v2153
  %2308 = vst.msk [vmem:[#allocation2 + $0x9c] sm:$0xf] %vm2268, %v2155
  %2309 = vst.msk [vmem:[#allocation2 + $0xa0] sm:$0xf] %vm2268, %v2157
  %2310 = vst.msk [vmem:[#allocation2 + $0xa4] sm:$0xf] %vm2268, %v2159
  %2311 = vst.msk [vmem:[#allocation2 + $0xa8] sm:$0xf] %vm2268, %v2161
  %2312 = vst.msk [vmem:[#allocation2 + $0xac] sm:$0xf] %vm2268, %v2163
  %2313 = vst.msk [vmem:[#allocation2 + $0xb0] sm:$0xf] %vm2268, %v2165
  %2314 = vst.msk [vmem:[#allocation2 + $0xb4] sm:$0xf] %vm2268, %v2167
  %2315 = vst.msk [vmem:[#allocation2 + $0xb8] sm:$0xf] %vm2268, %v2169
  %2316 = vst.msk [vmem:[#allocation2 + $0xbc] sm:$0xf] %vm2268, %v2171
  %2317 = vst.msk [vmem:[#allocation2 + $0xc0] sm:$0xf] %vm2268, %v2173
  %2318 = vst.msk [vmem:[#allocation2 + $0xc4] sm:$0xf] %vm2268, %v2175
  %2319 = vst.msk [vmem:[#allocation2 + $0xc8] sm:$0xf] %vm2268, %v2177
  %2320 = vst.msk [vmem:[#allocation2 + $0xcc] sm:$0xf] %vm2268, %v2179
  %2321 = vst.msk [vmem:[#allocation2 + $0xd0] sm:$0xf] %vm2268, %v2181
  %2322 = vst.msk [vmem:[#allocation2 + $0xd4] sm:$0xf] %vm2268, %v2183
  %2323 = vst.msk [vmem:[#allocation2 + $0xd8] sm:$0xf] %vm2268, %v2185
  %2324 = vst.msk [vmem:[#allocation2 + $0xdc] sm:$0xf] %vm2268, %v2187
  %2325 = vst.msk [vmem:[#allocation2 + $0xe0] sm:$0xf] %vm2268, %v2189
  %2326 = vst.msk [vmem:[#allocation2 + $0xe4] sm:$0xf] %vm2268, %v2191
  %2327 = vst.msk [vmem:[#allocation2 + $0xe8] sm:$0xf] %vm2268, %v2193
  %2328 = vst.msk [vmem:[#allocation2 + $0xec] sm:$0xf] %vm2268, %v2195
  %2329 = vst.msk [vmem:[#allocation2 + $0xf0] sm:$0xf] %vm2268, %v2197
  %2330 = vst.msk [vmem:[#allocation2 + $0xf4] sm:$0xf] %vm2268, %v2199
  %2331 = vst.msk [vmem:[#allocation2 + $0xf8] sm:$0xf] %vm2268, %v2201
  %2332 = vst.msk [vmem:[#allocation2 + $0xfc] sm:$0xf] %vm2268, %v2203
  %v2333 = vld [vmem:[%s1947] sm:$0xf]
  %v2334 = vld [vmem:[%s1947 + $0x4] sm:$0xf]
  %v2335 = vld [vmem:[%s1947 + $0x8] sm:$0x1]
  %v2336 = vld [vmem:[%s1947 + $0xc] sm:$0xf]
  %v2337 = vld [vmem:[%s1947 + $0x10] sm:$0xf]
  %v2338 = vld [vmem:[%s1947 + $0x14] sm:$0x1]
  %v2339 = vld [vmem:[%s1947 + $0x18] sm:$0xf]
  %v2340 = vld [vmem:[%s1947 + $0x1c] sm:$0xf]
  %v2341 = vld [vmem:[%s1947 + $0x20] sm:$0x1]
  %v2342 = vld [vmem:[%s1947 + $0x24] sm:$0xf]
  %v2343 = vld [vmem:[%s1947 + $0x28] sm:$0xf]
  %v2344 = vld [vmem:[%s1947 + $0x2c] sm:$0x1]
  %v2345 = vld [vmem:[%s1947 + $0x30] sm:$0xf]
  %v2346 = vld [vmem:[%s1947 + $0x34] sm:$0xf]
  %v2347 = vld [vmem:[%s1947 + $0x38] sm:$0x1]
  %v2348 = vld [vmem:[%s1947 + $0x3c] sm:$0xf]
  %v2349 = vld [vmem:[%s1947 + $0x40] sm:$0xf]
  %v2350 = vld [vmem:[%s1947 + $0x44] sm:$0x1]
  %v2351 = vld [vmem:[%s1947 + $0x48] sm:$0xf]
  %v2352 = vld [vmem:[%s1947 + $0x4c] sm:$0xf]
  %v2353 = vld [vmem:[%s1947 + $0x50] sm:$0x1]
  %v2354 = vld [vmem:[%s1947 + $0x54] sm:$0xf]
  %v2355 = vld [vmem:[%s1947 + $0x58] sm:$0xf]
  %v2356 = vld [vmem:[%s1947 + $0x5c] sm:$0x1]
  %v2357 = vld [vmem:[%s1947 + $0x60] sm:$0xf]
  %v2358 = vld [vmem:[%s1947 + $0x64] sm:$0xf]
  %v2359 = vld [vmem:[%s1947 + $0x68] sm:$0x1]
  %v2360 = vld [vmem:[%s1947 + $0x6c] sm:$0xf]
  %v2361 = vld [vmem:[%s1947 + $0x70] sm:$0xf]
  %v2362 = vld [vmem:[%s1947 + $0x74] sm:$0x1]
  %v2363 = vld [vmem:[%s1947 + $0x78] sm:$0xf]
  %v2364 = vld [vmem:[%s1947 + $0x7c] sm:$0xf]
  %v2365 = vld [vmem:[%s1947 + $0x80] sm:$0x1]
  %v2366 = vld [vmem:[%s1947 + $0x84] sm:$0xf]
  %v2367 = vld [vmem:[%s1947 + $0x88] sm:$0xf]
  %v2368 = vld [vmem:[%s1947 + $0x8c] sm:$0x1]
  %v2369 = vld [vmem:[%s1947 + $0x90] sm:$0xf]
  %v2370 = vld [vmem:[%s1947 + $0x94] sm:$0xf]
  %v2371 = vld [vmem:[%s1947 + $0x98] sm:$0x1]
  %v2372 = vld [vmem:[%s1947 + $0x9c] sm:$0xf]
  %v2373 = vld [vmem:[%s1947 + $0xa0] sm:$0xf]
  %v2374 = vld [vmem:[%s1947 + $0xa4] sm:$0x1]
  %v2375 = vld [vmem:[%s1947 + $0xa8] sm:$0xf]
  %v2376 = vld [vmem:[%s1947 + $0xac] sm:$0xf]
  %v2377 = vld [vmem:[%s1947 + $0xb0] sm:$0x1]
  %v2378 = vld [vmem:[%s1947 + $0xb4] sm:$0xf]
  %v2379 = vld [vmem:[%s1947 + $0xb8] sm:$0xf]
  %v2380 = vld [vmem:[%s1947 + $0xbc] sm:$0x1]
  %v2381 = vld [vmem:[%s1947 + $0xd8] sm:$0xf]
  %v2382 = vld [vmem:[%s1947 + $0xdc] sm:$0xf]
  %v2383 = vld [vmem:[%s1947 + $0xe0] sm:$0x1]
  %v2384 = vld [vmem:[%s1947 + $0xe4] sm:$0xf]
  %v2385 = vld [vmem:[%s1947 + $0xe8] sm:$0xf]
  %v2386 = vld [vmem:[%s1947 + $0xec] sm:$0x1]
  %v2387 = vld [vmem:[%s1947 + $0xf0] sm:$0xf]
  %v2388 = vld [vmem:[%s1947 + $0xf4] sm:$0xf]
  %v2389 = vld [vmem:[%s1947 + $0xf8] sm:$0x1]
  %v2390 = vld [vmem:[%s1947 + $0xfc] sm:$0xf]
  %v2391 = vld [vmem:[%s1947 + $0x100] sm:$0xf]
  %v2392 = vld [vmem:[%s1947 + $0x104] sm:$0x1]
  %v2393 = vld [vmem:[%s1947 + $0x108] sm:$0xf]
  %v2394 = vld [vmem:[%s1947 + $0x10c] sm:$0xf]
  %v2395 = vld [vmem:[%s1947 + $0x110] sm:$0x1]
  %v2396 = vld [vmem:[%s1947 + $0x114] sm:$0xf]
  %v2397 = vld [vmem:[%s1947 + $0x118] sm:$0xf]
  %v2398 = vld [vmem:[%s1947 + $0x11c] sm:$0x1]
  %v2399 = vld [vmem:[%s1947 + $0x120] sm:$0xf]
  %v2400 = vld [vmem:[%s1947 + $0x124] sm:$0xf]
  %v2401 = vld [vmem:[%s1947 + $0x128] sm:$0x1]
  %v2402 = vld [vmem:[%s1947 + $0x12c] sm:$0xf]
  %v2403 = vld [vmem:[%s1947 + $0x130] sm:$0xf]
  %v2404 = vld [vmem:[%s1947 + $0x134] sm:$0x1]
  %v2405 = vld [vmem:[%s1947 + $0x138] sm:$0xf]
  %v2406 = vld [vmem:[%s1947 + $0x13c] sm:$0xf]
  %v2407 = vld [vmem:[%s1947 + $0x140] sm:$0x1]
  %v2408 = vld [vmem:[%s1947 + $0x144] sm:$0xf]
  %v2409 = vld [vmem:[%s1947 + $0x148] sm:$0xf]
  %v2410 = vld [vmem:[%s1947 + $0x14c] sm:$0x1]
  %v2411 = vld [vmem:[%s1947 + $0x150] sm:$0xf]
  %v2412 = vld [vmem:[%s1947 + $0x154] sm:$0xf]
  %v2413 = vld [vmem:[%s1947 + $0x158] sm:$0x1]
  %v2414 = vld [vmem:[%s1947 + $0x15c] sm:$0xf]
  %v2415 = vld [vmem:[%s1947 + $0x160] sm:$0xf]
  %v2416 = vld [vmem:[%s1947 + $0x164] sm:$0x1]
  %v2417 = vld [vmem:[%s1947 + $0x168] sm:$0xf]
  %v2418 = vld [vmem:[%s1947 + $0x16c] sm:$0xf]
  %v2419 = vld [vmem:[%s1947 + $0x170] sm:$0x1]
  %v2420 = vld [vmem:[%s1947 + $0x174] sm:$0xf]
  %v2421 = vld [vmem:[%s1947 + $0x178] sm:$0xf]
  %v2422 = vld [vmem:[%s1947 + $0x17c] sm:$0x1]
  %v2423 = vld [vmem:[%s1947 + $0x180] sm:$0xf]
  %v2424 = vld [vmem:[%s1947 + $0x184] sm:$0xf]
  %v2425 = vld [vmem:[%s1947 + $0x188] sm:$0x1]
  %v2426 = vld [vmem:[%s1947 + $0x18c] sm:$0xf]
  %v2427 = vld [vmem:[%s1947 + $0x190] sm:$0xf]
  %v2428 = vld [vmem:[%s1947 + $0x194] sm:$0x1]
  %v2430 = vshrl.u32 %v2333, 16
  %v2432 = vrot.slane %v2430, 4
  %v2433 = vshll.u32 %v2333, 16
  %v2435 = vrot.slane %v2433, 5
  %v2436 = vor.u32 %v2432, %v2435
  %v2437 = vrot.slane %v2436, 4
  %v2439 = vshll.u32 %v2334, 16
  %v2441 = vrot.slane %v2439, 5
  %v2442 = vsel %vm245, %v2437, %v2441
  %v2443 = vshrl.u32 %v2334, 16
  %v2445 = vrot.slane %v2443, 4
  %v2446 = vor.u32 %v2445, %v2441
  %v2447 = vrot.slane %v2446, 4
  %v2449 = vshll.u32 %v2335, 16
  %v2451 = vrot.slane %v2449, 5
  %v2452 = vsel %vm245, %v2447, %v2451
  %v2454 = vshrl.u32 %v2336, 16
  %v2456 = vrot.slane %v2454, 4
  %v2457 = vshll.u32 %v2336, 16
  %v2459 = vrot.slane %v2457, 5
  %v2460 = vor.u32 %v2456, %v2459
  %v2461 = vrot.slane %v2460, 4
  %v2463 = vshll.u32 %v2337, 16
  %v2465 = vrot.slane %v2463, 5
  %v2466 = vsel %vm245, %v2461, %v2465
  %v2467 = vshrl.u32 %v2337, 16
  %v2469 = vrot.slane %v2467, 4
  %v2470 = vor.u32 %v2469, %v2465
  %v2471 = vrot.slane %v2470, 4
  %v2473 = vshll.u32 %v2338, 16
  %v2475 = vrot.slane %v2473, 5
  %v2476 = vsel %vm245, %v2471, %v2475
  %v2478 = vshrl.u32 %v2339, 16
  %v2480 = vrot.slane %v2478, 4
  %v2481 = vshll.u32 %v2339, 16
  %v2483 = vrot.slane %v2481, 5
  %v2484 = vor.u32 %v2480, %v2483
  %v2485 = vrot.slane %v2484, 4
  %v2487 = vshll.u32 %v2340, 16
  %v2489 = vrot.slane %v2487, 5
  %v2490 = vsel %vm245, %v2485, %v2489
  %v2491 = vshrl.u32 %v2340, 16
  %v2493 = vrot.slane %v2491, 4
  %v2494 = vor.u32 %v2493, %v2489
  %v2495 = vrot.slane %v2494, 4
  %v2497 = vshll.u32 %v2341, 16
  %v2499 = vrot.slane %v2497, 5
  %v2500 = vsel %vm245, %v2495, %v2499
  %v2502 = vshrl.u32 %v2342, 16
  %v2504 = vrot.slane %v2502, 4
  %v2505 = vshll.u32 %v2342, 16
  %v2507 = vrot.slane %v2505, 5
  %v2508 = vor.u32 %v2504, %v2507
  %v2509 = vrot.slane %v2508, 4
  %v2511 = vshll.u32 %v2343, 16
  %v2513 = vrot.slane %v2511, 5
  %v2514 = vsel %vm245, %v2509, %v2513
  %v2515 = vshrl.u32 %v2343, 16
  %v2517 = vrot.slane %v2515, 4
  %v2518 = vor.u32 %v2517, %v2513
  %v2519 = vrot.slane %v2518, 4
  %v2521 = vshll.u32 %v2344, 16
  %v2523 = vrot.slane %v2521, 5
  %v2524 = vsel %vm245, %v2519, %v2523
  %v2526 = vshrl.u32 %v2345, 16
  %v2528 = vrot.slane %v2526, 4
  %v2529 = vshll.u32 %v2345, 16
  %v2531 = vrot.slane %v2529, 5
  %v2532 = vor.u32 %v2528, %v2531
  %v2533 = vrot.slane %v2532, 4
  %v2535 = vshll.u32 %v2346, 16
  %v2537 = vrot.slane %v2535, 5
  %v2538 = vsel %vm245, %v2533, %v2537
  %v2539 = vshrl.u32 %v2346, 16
  %v2541 = vrot.slane %v2539, 4
  %v2542 = vor.u32 %v2541, %v2537
  %v2543 = vrot.slane %v2542, 4
  %v2545 = vshll.u32 %v2347, 16
  %v2547 = vrot.slane %v2545, 5
  %v2548 = vsel %vm245, %v2543, %v2547
  %v2550 = vshrl.u32 %v2348, 16
  %v2552 = vrot.slane %v2550, 4
  %v2553 = vshll.u32 %v2348, 16
  %v2555 = vrot.slane %v2553, 5
  %v2556 = vor.u32 %v2552, %v2555
  %v2557 = vrot.slane %v2556, 4
  %v2559 = vshll.u32 %v2349, 16
  %v2561 = vrot.slane %v2559, 5
  %v2562 = vsel %vm245, %v2557, %v2561
  %v2563 = vshrl.u32 %v2349, 16
  %v2565 = vrot.slane %v2563, 4
  %v2566 = vor.u32 %v2565, %v2561
  %v2567 = vrot.slane %v2566, 4
  %v2569 = vshll.u32 %v2350, 16
  %v2571 = vrot.slane %v2569, 5
  %v2572 = vsel %vm245, %v2567, %v2571
  %v2574 = vshrl.u32 %v2351, 16
  %v2576 = vrot.slane %v2574, 4
  %v2577 = vshll.u32 %v2351, 16
  %v2579 = vrot.slane %v2577, 5
  %v2580 = vor.u32 %v2576, %v2579
  %v2581 = vrot.slane %v2580, 4
  %v2583 = vshll.u32 %v2352, 16
  %v2585 = vrot.slane %v2583, 5
  %v2586 = vsel %vm245, %v2581, %v2585
  %v2587 = vshrl.u32 %v2352, 16
  %v2589 = vrot.slane %v2587, 4
  %v2590 = vor.u32 %v2589, %v2585
  %v2591 = vrot.slane %v2590, 4
  %v2593 = vshll.u32 %v2353, 16
  %v2595 = vrot.slane %v2593, 5
  %v2596 = vsel %vm245, %v2591, %v2595
  %v2598 = vshrl.u32 %v2354, 16
  %v2600 = vrot.slane %v2598, 4
  %v2601 = vshll.u32 %v2354, 16
  %v2603 = vrot.slane %v2601, 5
  %v2604 = vor.u32 %v2600, %v2603
  %v2605 = vrot.slane %v2604, 4
  %v2607 = vshll.u32 %v2355, 16
  %v2609 = vrot.slane %v2607, 5
  %v2610 = vsel %vm245, %v2605, %v2609
  %v2611 = vshrl.u32 %v2355, 16
  %v2613 = vrot.slane %v2611, 4
  %v2614 = vor.u32 %v2613, %v2609
  %v2615 = vrot.slane %v2614, 4
  %v2617 = vshll.u32 %v2356, 16
  %v2619 = vrot.slane %v2617, 5
  %v2620 = vsel %vm245, %v2615, %v2619
  %v2622 = vshrl.u32 %v2357, 16
  %v2624 = vrot.slane %v2622, 4
  %v2625 = vshll.u32 %v2357, 16
  %v2627 = vrot.slane %v2625, 5
  %v2628 = vor.u32 %v2624, %v2627
  %v2629 = vrot.slane %v2628, 4
  %v2631 = vshll.u32 %v2358, 16
  %v2633 = vrot.slane %v2631, 5
  %v2634 = vsel %vm245, %v2629, %v2633
  %v2635 = vshrl.u32 %v2358, 16
  %v2637 = vrot.slane %v2635, 4
  %v2638 = vor.u32 %v2637, %v2633
  %v2639 = vrot.slane %v2638, 4
  %v2641 = vshll.u32 %v2359, 16
  %v2643 = vrot.slane %v2641, 5
  %v2644 = vsel %vm245, %v2639, %v2643
  %v2646 = vshrl.u32 %v2360, 16
  %v2648 = vrot.slane %v2646, 4
  %v2649 = vshll.u32 %v2360, 16
  %v2651 = vrot.slane %v2649, 5
  %v2652 = vor.u32 %v2648, %v2651
  %v2653 = vrot.slane %v2652, 4
  %v2655 = vshll.u32 %v2361, 16
  %v2657 = vrot.slane %v2655, 5
  %v2658 = vsel %vm245, %v2653, %v2657
  %v2659 = vshrl.u32 %v2361, 16
  %v2661 = vrot.slane %v2659, 4
  %v2662 = vor.u32 %v2661, %v2657
  %v2663 = vrot.slane %v2662, 4
  %v2665 = vshll.u32 %v2362, 16
  %v2667 = vrot.slane %v2665, 5
  %v2668 = vsel %vm245, %v2663, %v2667
  %v2670 = vshrl.u32 %v2363, 16
  %v2672 = vrot.slane %v2670, 4
  %v2673 = vshll.u32 %v2363, 16
  %v2675 = vrot.slane %v2673, 5
  %v2676 = vor.u32 %v2672, %v2675
  %v2677 = vrot.slane %v2676, 4
  %v2679 = vshll.u32 %v2364, 16
  %v2681 = vrot.slane %v2679, 5
  %v2682 = vsel %vm245, %v2677, %v2681
  %v2683 = vshrl.u32 %v2364, 16
  %v2685 = vrot.slane %v2683, 4
  %v2686 = vor.u32 %v2685, %v2681
  %v2687 = vrot.slane %v2686, 4
  %v2689 = vshll.u32 %v2365, 16
  %v2691 = vrot.slane %v2689, 5
  %v2692 = vsel %vm245, %v2687, %v2691
  %v2694 = vshrl.u32 %v2366, 16
  %v2696 = vrot.slane %v2694, 4
  %v2697 = vshll.u32 %v2366, 16
  %v2699 = vrot.slane %v2697, 5
  %v2700 = vor.u32 %v2696, %v2699
  %v2701 = vrot.slane %v2700, 4
  %v2703 = vshll.u32 %v2367, 16
  %v2705 = vrot.slane %v2703, 5
  %v2706 = vsel %vm245, %v2701, %v2705
  %v2707 = vshrl.u32 %v2367, 16
  %v2709 = vrot.slane %v2707, 4
  %v2710 = vor.u32 %v2709, %v2705
  %v2711 = vrot.slane %v2710, 4
  %v2713 = vshll.u32 %v2368, 16
  %v2715 = vrot.slane %v2713, 5
  %v2716 = vsel %vm245, %v2711, %v2715
  %v2718 = vshrl.u32 %v2369, 16
  %v2720 = vrot.slane %v2718, 4
  %v2721 = vshll.u32 %v2369, 16
  %v2723 = vrot.slane %v2721, 5
  %v2724 = vor.u32 %v2720, %v2723
  %v2725 = vrot.slane %v2724, 4
  %v2727 = vshll.u32 %v2370, 16
  %v2729 = vrot.slane %v2727, 5
  %v2730 = vsel %vm245, %v2725, %v2729
  %v2731 = vshrl.u32 %v2370, 16
  %v2733 = vrot.slane %v2731, 4
  %v2734 = vor.u32 %v2733, %v2729
  %v2735 = vrot.slane %v2734, 4
  %v2737 = vshll.u32 %v2371, 16
  %v2739 = vrot.slane %v2737, 5
  %v2740 = vsel %vm245, %v2735, %v2739
  %v2742 = vshrl.u32 %v2372, 16
  %v2744 = vrot.slane %v2742, 4
  %v2745 = vshll.u32 %v2372, 16
  %v2747 = vrot.slane %v2745, 5
  %v2748 = vor.u32 %v2744, %v2747
  %v2749 = vrot.slane %v2748, 4
  %v2751 = vshll.u32 %v2373, 16
  %v2753 = vrot.slane %v2751, 5
  %v2754 = vsel %vm245, %v2749, %v2753
  %v2755 = vshrl.u32 %v2373, 16
  %v2757 = vrot.slane %v2755, 4
  %v2758 = vor.u32 %v2757, %v2753
  %v2759 = vrot.slane %v2758, 4
  %v2761 = vshll.u32 %v2374, 16
  %v2763 = vrot.slane %v2761, 5
  %v2764 = vsel %vm245, %v2759, %v2763
  %v2766 = vshrl.u32 %v2375, 16
  %v2768 = vrot.slane %v2766, 4
  %v2769 = vshll.u32 %v2375, 16
  %v2771 = vrot.slane %v2769, 5
  %v2772 = vor.u32 %v2768, %v2771
  %v2773 = vrot.slane %v2772, 4
  %v2775 = vshll.u32 %v2376, 16
  %v2777 = vrot.slane %v2775, 5
  %v2778 = vsel %vm245, %v2773, %v2777
  %v2779 = vshrl.u32 %v2376, 16
  %v2781 = vrot.slane %v2779, 4
  %v2782 = vor.u32 %v2781, %v2777
  %v2783 = vrot.slane %v2782, 4
  %v2785 = vshll.u32 %v2377, 16
  %v2787 = vrot.slane %v2785, 5
  %v2788 = vsel %vm245, %v2783, %v2787
  %v2790 = vshrl.u32 %v2378, 16
  %v2792 = vrot.slane %v2790, 4
  %v2793 = vshll.u32 %v2378, 16
  %v2795 = vrot.slane %v2793, 5
  %v2796 = vor.u32 %v2792, %v2795
  %v2797 = vrot.slane %v2796, 4
  %v2799 = vshll.u32 %v2379, 16
  %v2801 = vrot.slane %v2799, 5
  %v2802 = vsel %vm245, %v2797, %v2801
  %v2803 = vshrl.u32 %v2379, 16
  %v2805 = vrot.slane %v2803, 4
  %v2806 = vor.u32 %v2805, %v2801
  %v2807 = vrot.slane %v2806, 4
  %v2809 = vshll.u32 %v2380, 16
  %v2811 = vrot.slane %v2809, 5
  %v2812 = vsel %vm245, %v2807, %v2811
  %v2814 = vshrl.u32 %v2381, 16
  %v2816 = vrot.slane %v2814, 4
  %v2817 = vshll.u32 %v2381, 16
  %v2819 = vrot.slane %v2817, 5
  %v2820 = vor.u32 %v2816, %v2819
  %v2821 = vrot.slane %v2820, 4
  %v2823 = vshll.u32 %v2382, 16
  %v2825 = vrot.slane %v2823, 5
  %v2826 = vsel %vm245, %v2821, %v2825
  %v2827 = vshrl.u32 %v2382, 16
  %v2829 = vrot.slane %v2827, 4
  %v2830 = vor.u32 %v2829, %v2825
  %v2831 = vrot.slane %v2830, 4
  %v2833 = vshll.u32 %v2383, 16
  %v2835 = vrot.slane %v2833, 5
  %v2836 = vsel %vm245, %v2831, %v2835
  %v2838 = vshrl.u32 %v2384, 16
  %v2840 = vrot.slane %v2838, 4
  %v2841 = vshll.u32 %v2384, 16
  %v2843 = vrot.slane %v2841, 5
  %v2844 = vor.u32 %v2840, %v2843
  %v2845 = vrot.slane %v2844, 4
  %v2847 = vshll.u32 %v2385, 16
  %v2849 = vrot.slane %v2847, 5
  %v2850 = vsel %vm245, %v2845, %v2849
  %v2851 = vshrl.u32 %v2385, 16
  %v2853 = vrot.slane %v2851, 4
  %v2854 = vor.u32 %v2853, %v2849
  %v2855 = vrot.slane %v2854, 4
  %v2857 = vshll.u32 %v2386, 16
  %v2859 = vrot.slane %v2857, 5
  %v2860 = vsel %vm245, %v2855, %v2859
  %v2862 = vshrl.u32 %v2387, 16
  %v2864 = vrot.slane %v2862, 4
  %v2865 = vshll.u32 %v2387, 16
  %v2867 = vrot.slane %v2865, 5
  %v2868 = vor.u32 %v2864, %v2867
  %v2869 = vrot.slane %v2868, 4
  %v2871 = vshll.u32 %v2388, 16
  %v2873 = vrot.slane %v2871, 5
  %v2874 = vsel %vm245, %v2869, %v2873
  %v2875 = vshrl.u32 %v2388, 16
  %v2877 = vrot.slane %v2875, 4
  %v2878 = vor.u32 %v2877, %v2873
  %v2879 = vrot.slane %v2878, 4
  %v2881 = vshll.u32 %v2389, 16
  %v2883 = vrot.slane %v2881, 5
  %v2884 = vsel %vm245, %v2879, %v2883
  %v2886 = vshrl.u32 %v2390, 16
  %v2888 = vrot.slane %v2886, 4
  %v2889 = vshll.u32 %v2390, 16
  %v2891 = vrot.slane %v2889, 5
  %v2892 = vor.u32 %v2888, %v2891
  %v2893 = vrot.slane %v2892, 4
  %v2895 = vshll.u32 %v2391, 16
  %v2897 = vrot.slane %v2895, 5
  %v2898 = vsel %vm245, %v2893, %v2897
  %v2899 = vshrl.u32 %v2391, 16
  %v2901 = vrot.slane %v2899, 4
  %v2902 = vor.u32 %v2901, %v2897
  %v2903 = vrot.slane %v2902, 4
  %v2905 = vshll.u32 %v2392, 16
  %v2907 = vrot.slane %v2905, 5
  %v2908 = vsel %vm245, %v2903, %v2907
  %v2910 = vshrl.u32 %v2393, 16
  %v2912 = vrot.slane %v2910, 4
  %v2913 = vshll.u32 %v2393, 16
  %v2915 = vrot.slane %v2913, 5
  %v2916 = vor.u32 %v2912, %v2915
  %v2917 = vrot.slane %v2916, 4
  %v2919 = vshll.u32 %v2394, 16
  %v2921 = vrot.slane %v2919, 5
  %v2922 = vsel %vm245, %v2917, %v2921
  %v2923 = vshrl.u32 %v2394, 16
  %v2925 = vrot.slane %v2923, 4
  %v2926 = vor.u32 %v2925, %v2921
  %v2927 = vrot.slane %v2926, 4
  %v2929 = vshll.u32 %v2395, 16
  %v2931 = vrot.slane %v2929, 5
  %v2932 = vsel %vm245, %v2927, %v2931
  %v2934 = vshrl.u32 %v2396, 16
  %v2936 = vrot.slane %v2934, 4
  %v2937 = vshll.u32 %v2396, 16
  %v2939 = vrot.slane %v2937, 5
  %v2940 = vor.u32 %v2936, %v2939
  %v2941 = vrot.slane %v2940, 4
  %v2943 = vshll.u32 %v2397, 16
  %v2945 = vrot.slane %v2943, 5
  %v2946 = vsel %vm245, %v2941, %v2945
  %v2947 = vshrl.u32 %v2397, 16
  %v2949 = vrot.slane %v2947, 4
  %v2950 = vor.u32 %v2949, %v2945
  %v2951 = vrot.slane %v2950, 4
  %v2953 = vshll.u32 %v2398, 16
  %v2955 = vrot.slane %v2953, 5
  %v2956 = vsel %vm245, %v2951, %v2955
  %v2958 = vshrl.u32 %v2399, 16
  %v2960 = vrot.slane %v2958, 4
  %v2961 = vshll.u32 %v2399, 16
  %v2963 = vrot.slane %v2961, 5
  %v2964 = vor.u32 %v2960, %v2963
  %v2965 = vrot.slane %v2964, 4
  %v2967 = vshll.u32 %v2400, 16
  %v2969 = vrot.slane %v2967, 5
  %v2970 = vsel %vm245, %v2965, %v2969
  %v2971 = vshrl.u32 %v2400, 16
  %v2973 = vrot.slane %v2971, 4
  %v2974 = vor.u32 %v2973, %v2969
  %v2975 = vrot.slane %v2974, 4
  %v2977 = vshll.u32 %v2401, 16
  %v2979 = vrot.slane %v2977, 5
  %v2980 = vsel %vm245, %v2975, %v2979
  %v2982 = vshrl.u32 %v2402, 16
  %v2984 = vrot.slane %v2982, 4
  %v2985 = vshll.u32 %v2402, 16
  %v2987 = vrot.slane %v2985, 5
  %v2988 = vor.u32 %v2984, %v2987
  %v2989 = vrot.slane %v2988, 4
  %v2991 = vshll.u32 %v2403, 16
  %v2993 = vrot.slane %v2991, 5
  %v2994 = vsel %vm245, %v2989, %v2993
  %v2995 = vshrl.u32 %v2403, 16
  %v2997 = vrot.slane %v2995, 4
  %v2998 = vor.u32 %v2997, %v2993
  %v2999 = vrot.slane %v2998, 4
  %v3001 = vshll.u32 %v2404, 16
  %v3003 = vrot.slane %v3001, 5
  %v3004 = vsel %vm245, %v2999, %v3003
  %v3006 = vshrl.u32 %v2405, 16
  %v3008 = vrot.slane %v3006, 4
  %v3009 = vshll.u32 %v2405, 16
  %v3011 = vrot.slane %v3009, 5
  %v3012 = vor.u32 %v3008, %v3011
  %v3013 = vrot.slane %v3012, 4
  %v3015 = vshll.u32 %v2406, 16
  %v3017 = vrot.slane %v3015, 5
  %v3018 = vsel %vm245, %v3013, %v3017
  %v3019 = vshrl.u32 %v2406, 16
  %v3021 = vrot.slane %v3019, 4
  %v3022 = vor.u32 %v3021, %v3017
  %v3023 = vrot.slane %v3022, 4
  %v3025 = vshll.u32 %v2407, 16
  %v3027 = vrot.slane %v3025, 5
  %v3028 = vsel %vm245, %v3023, %v3027
  %v3030 = vshrl.u32 %v2408, 16
  %v3032 = vrot.slane %v3030, 4
  %v3033 = vshll.u32 %v2408, 16
  %v3035 = vrot.slane %v3033, 5
  %v3036 = vor.u32 %v3032, %v3035
  %v3037 = vrot.slane %v3036, 4
  %v3039 = vshll.u32 %v2409, 16
  %v3041 = vrot.slane %v3039, 5
  %v3042 = vsel %vm245, %v3037, %v3041
  %v3043 = vshrl.u32 %v2409, 16
  %v3045 = vrot.slane %v3043, 4
  %v3046 = vor.u32 %v3045, %v3041
  %v3047 = vrot.slane %v3046, 4
  %v3049 = vshll.u32 %v2410, 16
  %v3051 = vrot.slane %v3049, 5
  %v3052 = vsel %vm245, %v3047, %v3051
  %v3054 = vshrl.u32 %v2411, 16
  %v3056 = vrot.slane %v3054, 4
  %v3057 = vshll.u32 %v2411, 16
  %v3059 = vrot.slane %v3057, 5
  %v3060 = vor.u32 %v3056, %v3059
  %v3061 = vrot.slane %v3060, 4
  %v3063 = vshll.u32 %v2412, 16
  %v3065 = vrot.slane %v3063, 5
  %v3066 = vsel %vm245, %v3061, %v3065
  %v3067 = vshrl.u32 %v2412, 16
  %v3069 = vrot.slane %v3067, 4
  %v3070 = vor.u32 %v3069, %v3065
  %v3071 = vrot.slane %v3070, 4
  %v3073 = vshll.u32 %v2413, 16
  %v3075 = vrot.slane %v3073, 5
  %v3076 = vsel %vm245, %v3071, %v3075
  %v3078 = vshrl.u32 %v2414, 16
  %v3080 = vrot.slane %v3078, 4
  %v3081 = vshll.u32 %v2414, 16
  %v3083 = vrot.slane %v3081, 5
  %v3084 = vor.u32 %v3080, %v3083
  %v3085 = vrot.slane %v3084, 4
  %v3087 = vshll.u32 %v2415, 16
  %v3089 = vrot.slane %v3087, 5
  %v3090 = vsel %vm245, %v3085, %v3089
  %v3091 = vshrl.u32 %v2415, 16
  %v3093 = vrot.slane %v3091, 4
  %v3094 = vor.u32 %v3093, %v3089
  %v3095 = vrot.slane %v3094, 4
  %v3097 = vshll.u32 %v2416, 16
  %v3099 = vrot.slane %v3097, 5
  %v3100 = vsel %vm245, %v3095, %v3099
  %v3102 = vshrl.u32 %v2417, 16
  %v3104 = vrot.slane %v3102, 4
  %v3105 = vshll.u32 %v2417, 16
  %v3107 = vrot.slane %v3105, 5
  %v3108 = vor.u32 %v3104, %v3107
  %v3109 = vrot.slane %v3108, 4
  %v3111 = vshll.u32 %v2418, 16
  %v3113 = vrot.slane %v3111, 5
  %v3114 = vsel %vm245, %v3109, %v3113
  %v3115 = vshrl.u32 %v2418, 16
  %v3117 = vrot.slane %v3115, 4
  %v3118 = vor.u32 %v3117, %v3113
  %v3119 = vrot.slane %v3118, 4
  %v3121 = vshll.u32 %v2419, 16
  %v3123 = vrot.slane %v3121, 5
  %v3124 = vsel %vm245, %v3119, %v3123
  %v3126 = vshrl.u32 %v2420, 16
  %v3128 = vrot.slane %v3126, 4
  %v3129 = vshll.u32 %v2420, 16
  %v3131 = vrot.slane %v3129, 5
  %v3132 = vor.u32 %v3128, %v3131
  %v3133 = vrot.slane %v3132, 4
  %v3135 = vshll.u32 %v2421, 16
  %v3137 = vrot.slane %v3135, 5
  %v3138 = vsel %vm245, %v3133, %v3137
  %v3139 = vshrl.u32 %v2421, 16
  %v3141 = vrot.slane %v3139, 4
  %v3142 = vor.u32 %v3141, %v3137
  %v3143 = vrot.slane %v3142, 4
  %v3145 = vshll.u32 %v2422, 16
  %v3147 = vrot.slane %v3145, 5
  %v3148 = vsel %vm245, %v3143, %v3147
  %v3150 = vshrl.u32 %v2423, 16
  %v3152 = vrot.slane %v3150, 4
  %v3153 = vshll.u32 %v2423, 16
  %v3155 = vrot.slane %v3153, 5
  %v3156 = vor.u32 %v3152, %v3155
  %v3157 = vrot.slane %v3156, 4
  %v3159 = vshll.u32 %v2424, 16
  %v3161 = vrot.slane %v3159, 5
  %v3162 = vsel %vm245, %v3157, %v3161
  %v3163 = vshrl.u32 %v2424, 16
  %v3165 = vrot.slane %v3163, 4
  %v3166 = vor.u32 %v3165, %v3161
  %v3167 = vrot.slane %v3166, 4
  %v3169 = vshll.u32 %v2425, 16
  %v3171 = vrot.slane %v3169, 5
  %v3172 = vsel %vm245, %v3167, %v3171
  %v3174 = vshrl.u32 %v2426, 16
  %v3176 = vrot.slane %v3174, 4
  %v3177 = vshll.u32 %v2426, 16
  %v3179 = vrot.slane %v3177, 5
  %v3180 = vor.u32 %v3176, %v3179
  %v3181 = vrot.slane %v3180, 4
  %v3183 = vshll.u32 %v2427, 16
  %v3185 = vrot.slane %v3183, 5
  %v3186 = vsel %vm245, %v3181, %v3185
  %v3187 = vshrl.u32 %v2427, 16
  %v3189 = vrot.slane %v3187, 4
  %v3190 = vor.u32 %v3189, %v3185
  %v3191 = vrot.slane %v3190, 4
  %v3193 = vshll.u32 %v2428, 16
  %v3195 = vrot.slane %v3193, 5
  %v3196 = vsel %vm245, %v3191, %v3195
  %3197 = vrot.lane.b32.xlu0 %v2442, 16
  %v3198 = vpop.permute.xlu0 %3197
  %3199 = vrot.lane.b32.xlu0 %v2452, 16
  %v3200 = vpop.permute.xlu0 %3199
  %3201 = vrot.lane.b32.xlu0 %v2466, 16
  %v3202 = vpop.permute.xlu0 %3201
  %3203 = vrot.lane.b32.xlu0 %v2476, 16
  %v3204 = vpop.permute.xlu0 %3203
  %3205 = vrot.lane.b32.xlu0 %v2490, 16
  %v3206 = vpop.permute.xlu0 %3205
  %3207 = vrot.lane.b32.xlu0 %v2500, 16
  %v3208 = vpop.permute.xlu0 %3207
  %3209 = vrot.lane.b32.xlu0 %v2514, 16
  %v3210 = vpop.permute.xlu0 %3209
  %3211 = vrot.lane.b32.xlu0 %v2524, 16
  %v3212 = vpop.permute.xlu0 %3211
  %3213 = vrot.lane.b32.xlu0 %v2538, 16
  %v3214 = vpop.permute.xlu0 %3213
  %3215 = vrot.lane.b32.xlu0 %v2548, 16
  %v3216 = vpop.permute.xlu0 %3215
  %3217 = vrot.lane.b32.xlu0 %v2562, 16
  %v3218 = vpop.permute.xlu0 %3217
  %3219 = vrot.lane.b32.xlu0 %v2572, 16
  %v3220 = vpop.permute.xlu0 %3219
  %3221 = vrot.lane.b32.xlu0 %v2586, 16
  %v3222 = vpop.permute.xlu0 %3221
  %3223 = vrot.lane.b32.xlu0 %v2596, 16
  %v3224 = vpop.permute.xlu0 %3223
  %3225 = vrot.lane.b32.xlu0 %v2610, 16
  %v3226 = vpop.permute.xlu0 %3225
  %3227 = vrot.lane.b32.xlu0 %v2620, 16
  %v3228 = vpop.permute.xlu0 %3227
  %3229 = vrot.lane.b32.xlu0 %v2634, 16
  %v3230 = vpop.permute.xlu0 %3229
  %3231 = vrot.lane.b32.xlu0 %v2644, 16
  %v3232 = vpop.permute.xlu0 %3231
  %3233 = vrot.lane.b32.xlu0 %v2658, 16
  %v3234 = vpop.permute.xlu0 %3233
  %3235 = vrot.lane.b32.xlu0 %v2668, 16
  %v3236 = vpop.permute.xlu0 %3235
  %3237 = vrot.lane.b32.xlu0 %v2682, 16
  %v3238 = vpop.permute.xlu0 %3237
  %3239 = vrot.lane.b32.xlu0 %v2692, 16
  %v3240 = vpop.permute.xlu0 %3239
  %3241 = vrot.lane.b32.xlu0 %v2706, 16
  %v3242 = vpop.permute.xlu0 %3241
  %3243 = vrot.lane.b32.xlu0 %v2716, 16
  %v3244 = vpop.permute.xlu0 %3243
  %3245 = vrot.lane.b32.xlu0 %v2730, 16
  %v3246 = vpop.permute.xlu0 %3245
  %3247 = vrot.lane.b32.xlu0 %v2740, 16
  %v3248 = vpop.permute.xlu0 %3247
  %3249 = vrot.lane.b32.xlu0 %v2754, 16
  %v3250 = vpop.permute.xlu0 %3249
  %3251 = vrot.lane.b32.xlu0 %v2764, 16
  %v3252 = vpop.permute.xlu0 %3251
  %3253 = vrot.lane.b32.xlu0 %v2778, 16
  %v3254 = vpop.permute.xlu0 %3253
  %3255 = vrot.lane.b32.xlu0 %v2788, 16
  %v3256 = vpop.permute.xlu0 %3255
  %3257 = vrot.lane.b32.xlu0 %v2802, 16
  %v3258 = vpop.permute.xlu0 %3257
  %3259 = vrot.lane.b32.xlu0 %v2812, 16
  %v3260 = vpop.permute.xlu0 %3259
  %3261 = vrot.lane.b32.xlu0 %v2826, 16
  %v3262 = vpop.permute.xlu0 %3261
  %3263 = vrot.lane.b32.xlu0 %v2836, 16
  %v3264 = vpop.permute.xlu0 %3263
  %3265 = vrot.lane.b32.xlu0 %v2850, 16
  %v3266 = vpop.permute.xlu0 %3265
  %3267 = vrot.lane.b32.xlu0 %v2860, 16
  %v3268 = vpop.permute.xlu0 %3267
  %3269 = vrot.lane.b32.xlu0 %v2874, 16
  %v3270 = vpop.permute.xlu0 %3269
  %3271 = vrot.lane.b32.xlu0 %v2884, 16
  %v3272 = vpop.permute.xlu0 %3271
  %3273 = vrot.lane.b32.xlu0 %v2898, 16
  %v3274 = vpop.permute.xlu0 %3273
  %3275 = vrot.lane.b32.xlu0 %v2908, 16
  %v3276 = vpop.permute.xlu0 %3275
  %3277 = vrot.lane.b32.xlu0 %v2922, 16
  %v3278 = vpop.permute.xlu0 %3277
  %3279 = vrot.lane.b32.xlu0 %v2932, 16
  %v3280 = vpop.permute.xlu0 %3279
  %3281 = vrot.lane.b32.xlu0 %v2946, 16
  %v3282 = vpop.permute.xlu0 %3281
  %3283 = vrot.lane.b32.xlu0 %v2956, 16
  %v3284 = vpop.permute.xlu0 %3283
  %3285 = vrot.lane.b32.xlu0 %v2970, 16
  %v3286 = vpop.permute.xlu0 %3285
  %3287 = vrot.lane.b32.xlu0 %v2980, 16
  %v3288 = vpop.permute.xlu0 %3287
  %3289 = vrot.lane.b32.xlu0 %v2994, 16
  %v3290 = vpop.permute.xlu0 %3289
  %3291 = vrot.lane.b32.xlu0 %v3004, 16
  %v3292 = vpop.permute.xlu0 %3291
  %3293 = vrot.lane.b32.xlu0 %v3018, 16
  %v3294 = vpop.permute.xlu0 %3293
  %3295 = vrot.lane.b32.xlu0 %v3028, 16
  %v3296 = vpop.permute.xlu0 %3295
  %3297 = vrot.lane.b32.xlu0 %v3042, 16
  %v3298 = vpop.permute.xlu0 %3297
  %3299 = vrot.lane.b32.xlu0 %v3052, 16
  %v3300 = vpop.permute.xlu0 %3299
  %3301 = vrot.lane.b32.xlu0 %v3066, 16
  %v3302 = vpop.permute.xlu0 %3301
  %3303 = vrot.lane.b32.xlu0 %v3076, 16
  %v3304 = vpop.permute.xlu0 %3303
  %3305 = vrot.lane.b32.xlu0 %v3090, 16
  %v3306 = vpop.permute.xlu0 %3305
  %3307 = vrot.lane.b32.xlu0 %v3100, 16
  %v3308 = vpop.permute.xlu0 %3307
  %3309 = vrot.lane.b32.xlu0 %v3114, 16
  %v3310 = vpop.permute.xlu0 %3309
  %3311 = vrot.lane.b32.xlu0 %v3124, 16
  %v3312 = vpop.permute.xlu0 %3311
  %3313 = vrot.lane.b32.xlu0 %v3138, 16
  %v3314 = vpop.permute.xlu0 %3313
  %3315 = vrot.lane.b32.xlu0 %v3148, 16
  %v3316 = vpop.permute.xlu0 %3315
  %3317 = vrot.lane.b32.xlu0 %v3162, 16
  %v3318 = vpop.permute.xlu0 %3317
  %3319 = vrot.lane.b32.xlu0 %v3172, 16
  %v3320 = vpop.permute.xlu0 %3319
  %3321 = vrot.lane.b32.xlu0 %v3186, 16
  %v3322 = vpop.permute.xlu0 %3321
  %3323 = vrot.lane.b32.xlu0 %v3196, 16
  %v3324 = vpop.permute.xlu0 %3323
  %vm3389 = vcmask 158848
  %3390 = vst.msk [vmem:[#allocation2] sm:$0xf] %vm3389, %v3198
  %3391 = vst.msk [vmem:[#allocation2 + $0x4] sm:$0xf] %vm3389, %v3200
  %3392 = vst.msk [vmem:[#allocation2 + $0x8] sm:$0xf] %vm3389, %v3202
  %3393 = vst.msk [vmem:[#allocation2 + $0xc] sm:$0xf] %vm3389, %v3204
  %3394 = vst.msk [vmem:[#allocation2 + $0x10] sm:$0xf] %vm3389, %v3206
  %3395 = vst.msk [vmem:[#allocation2 + $0x14] sm:$0xf] %vm3389, %v3208
  %3396 = vst.msk [vmem:[#allocation2 + $0x18] sm:$0xf] %vm3389, %v3210
  %3397 = vst.msk [vmem:[#allocation2 + $0x1c] sm:$0xf] %vm3389, %v3212
  %3398 = vst.msk [vmem:[#allocation2 + $0x20] sm:$0xf] %vm3389, %v3214
  %3399 = vst.msk [vmem:[#allocation2 + $0x24] sm:$0xf] %vm3389, %v3216
  %3400 = vst.msk [vmem:[#allocation2 + $0x28] sm:$0xf] %vm3389, %v3218
  %3401 = vst.msk [vmem:[#allocation2 + $0x2c] sm:$0xf] %vm3389, %v3220
  %3402 = vst.msk [vmem:[#allocation2 + $0x30] sm:$0xf] %vm3389, %v3222
  %3403 = vst.msk [vmem:[#allocation2 + $0x34] sm:$0xf] %vm3389, %v3224
  %3404 = vst.msk [vmem:[#allocation2 + $0x38] sm:$0xf] %vm3389, %v3226
  %3405 = vst.msk [vmem:[#allocation2 + $0x3c] sm:$0xf] %vm3389, %v3228
  %3406 = vst.msk [vmem:[#allocation2 + $0x40] sm:$0xf] %vm3389, %v3230
  %3407 = vst.msk [vmem:[#allocation2 + $0x44] sm:$0xf] %vm3389, %v3232
  %3408 = vst.msk [vmem:[#allocation2 + $0x48] sm:$0xf] %vm3389, %v3234
  %3409 = vst.msk [vmem:[#allocation2 + $0x4c] sm:$0xf] %vm3389, %v3236
  %3410 = vst.msk [vmem:[#allocation2 + $0x50] sm:$0xf] %vm3389, %v3238
  %3411 = vst.msk [vmem:[#allocation2 + $0x54] sm:$0xf] %vm3389, %v3240
  %3412 = vst.msk [vmem:[#allocation2 + $0x58] sm:$0xf] %vm3389, %v3242
  %3413 = vst.msk [vmem:[#allocation2 + $0x5c] sm:$0xf] %vm3389, %v3244
  %3414 = vst.msk [vmem:[#allocation2 + $0x60] sm:$0xf] %vm3389, %v3246
  %3415 = vst.msk [vmem:[#allocation2 + $0x64] sm:$0xf] %vm3389, %v3248
  %3416 = vst.msk [vmem:[#allocation2 + $0x68] sm:$0xf] %vm3389, %v3250
  %3417 = vst.msk [vmem:[#allocation2 + $0x6c] sm:$0xf] %vm3389, %v3252
  %3418 = vst.msk [vmem:[#allocation2 + $0x70] sm:$0xf] %vm3389, %v3254
  %3419 = vst.msk [vmem:[#allocation2 + $0x74] sm:$0xf] %vm3389, %v3256
  %3420 = vst.msk [vmem:[#allocation2 + $0x78] sm:$0xf] %vm3389, %v3258
  %3421 = vst.msk [vmem:[#allocation2 + $0x7c] sm:$0xf] %vm3389, %v3260
  %3422 = vst.msk [vmem:[#allocation2 + $0x80] sm:$0xf] %vm3389, %v3262
  %3423 = vst.msk [vmem:[#allocation2 + $0x84] sm:$0xf] %vm3389, %v3264
  %3424 = vst.msk [vmem:[#allocation2 + $0x88] sm:$0xf] %vm3389, %v3266
  %3425 = vst.msk [vmem:[#allocation2 + $0x8c] sm:$0xf] %vm3389, %v3268
  %3426 = vst.msk [vmem:[#allocation2 + $0x90] sm:$0xf] %vm3389, %v3270
  %3427 = vst.msk [vmem:[#allocation2 + $0x94] sm:$0xf] %vm3389, %v3272
  %3428 = vst.msk [vmem:[#allocation2 + $0x98] sm:$0xf] %vm3389, %v3274
  %3429 = vst.msk [vmem:[#allocation2 + $0x9c] sm:$0xf] %vm3389, %v3276
  %3430 = vst.msk [vmem:[#allocation2 + $0xa0] sm:$0xf] %vm3389, %v3278
  %3431 = vst.msk [vmem:[#allocation2 + $0xa4] sm:$0xf] %vm3389, %v3280
  %3432 = vst.msk [vmem:[#allocation2 + $0xa8] sm:$0xf] %vm3389, %v3282
  %3433 = vst.msk [vmem:[#allocation2 + $0xac] sm:$0xf] %vm3389, %v3284
  %3434 = vst.msk [vmem:[#allocation2 + $0xb0] sm:$0xf] %vm3389, %v3286
  %3435 = vst.msk [vmem:[#allocation2 + $0xb4] sm:$0xf] %vm3389, %v3288
  %3436 = vst.msk [vmem:[#allocation2 + $0xb8] sm:$0xf] %vm3389, %v3290
  %3437 = vst.msk [vmem:[#allocation2 + $0xbc] sm:$0xf] %vm3389, %v3292
  %3438 = vst.msk [vmem:[#allocation2 + $0xc0] sm:$0xf] %vm3389, %v3294
  %3439 = vst.msk [vmem:[#allocation2 + $0xc4] sm:$0xf] %vm3389, %v3296
  %3440 = vst.msk [vmem:[#allocation2 + $0xc8] sm:$0xf] %vm3389, %v3298
  %3441 = vst.msk [vmem:[#allocation2 + $0xcc] sm:$0xf] %vm3389, %v3300
  %3442 = vst.msk [vmem:[#allocation2 + $0xd0] sm:$0xf] %vm3389, %v3302
  %3443 = vst.msk [vmem:[#allocation2 + $0xd4] sm:$0xf] %vm3389, %v3304
  %3444 = vst.msk [vmem:[#allocation2 + $0xd8] sm:$0xf] %vm3389, %v3306
  %3445 = vst.msk [vmem:[#allocation2 + $0xdc] sm:$0xf] %vm3389, %v3308
  %3446 = vst.msk [vmem:[#allocation2 + $0xe0] sm:$0xf] %vm3389, %v3310
  %3447 = vst.msk [vmem:[#allocation2 + $0xe4] sm:$0xf] %vm3389, %v3312
  %3448 = vst.msk [vmem:[#allocation2 + $0xe8] sm:$0xf] %vm3389, %v3314
  %3449 = vst.msk [vmem:[#allocation2 + $0xec] sm:$0xf] %vm3389, %v3316
  %3450 = vst.msk [vmem:[#allocation2 + $0xf0] sm:$0xf] %vm3389, %v3318
  %3451 = vst.msk [vmem:[#allocation2 + $0xf4] sm:$0xf] %vm3389, %v3320
  %3452 = vst.msk [vmem:[#allocation2 + $0xf8] sm:$0xf] %vm3389, %v3322
  %3453 = vst.msk [vmem:[#allocation2 + $0xfc] sm:$0xf] %vm3389, %v3324
  %v3454 = vld [vmem:[%s1947] sm:$0xe]
  %v3455 = vld [vmem:[%s1947 + $0x4] sm:$0xf]
  %v3456 = vld [vmem:[%s1947 + $0x8] sm:$0x1]
  %v3457 = vld [vmem:[%s1947 + $0xc] sm:$0xe]
  %v3458 = vld [vmem:[%s1947 + $0x10] sm:$0xf]
  %v3459 = vld [vmem:[%s1947 + $0x14] sm:$0x1]
  %v3460 = vld [vmem:[%s1947 + $0x18] sm:$0xe]
  %v3461 = vld [vmem:[%s1947 + $0x1c] sm:$0xf]
  %v3462 = vld [vmem:[%s1947 + $0x20] sm:$0x1]
  %v3463 = vld [vmem:[%s1947 + $0x24] sm:$0xe]
  %v3464 = vld [vmem:[%s1947 + $0x28] sm:$0xf]
  %v3465 = vld [vmem:[%s1947 + $0x2c] sm:$0x1]
  %v3466 = vld [vmem:[%s1947 + $0x30] sm:$0xe]
  %v3467 = vld [vmem:[%s1947 + $0x34] sm:$0xf]
  %v3468 = vld [vmem:[%s1947 + $0x38] sm:$0x1]
  %v3469 = vld [vmem:[%s1947 + $0x3c] sm:$0xe]
  %v3470 = vld [vmem:[%s1947 + $0x40] sm:$0xf]
  %v3471 = vld [vmem:[%s1947 + $0x44] sm:$0x1]
  %v3472 = vld [vmem:[%s1947 + $0x48] sm:$0xe]
  %v3473 = vld [vmem:[%s1947 + $0x4c] sm:$0xf]
  %v3474 = vld [vmem:[%s1947 + $0x50] sm:$0x1]
  %v3475 = vld [vmem:[%s1947 + $0x54] sm:$0xe]
  %v3476 = vld [vmem:[%s1947 + $0x58] sm:$0xf]
  %v3477 = vld [vmem:[%s1947 + $0x5c] sm:$0x1]
  %v3478 = vld [vmem:[%s1947 + $0x60] sm:$0xe]
  %v3479 = vld [vmem:[%s1947 + $0x64] sm:$0xf]
  %v3480 = vld [vmem:[%s1947 + $0x68] sm:$0x1]
  %v3481 = vld [vmem:[%s1947 + $0x6c] sm:$0xe]
  %v3482 = vld [vmem:[%s1947 + $0x70] sm:$0xf]
  %v3483 = vld [vmem:[%s1947 + $0x74] sm:$0x1]
  %v3484 = vld [vmem:[%s1947 + $0x78] sm:$0xe]
  %v3485 = vld [vmem:[%s1947 + $0x7c] sm:$0xf]
  %v3486 = vld [vmem:[%s1947 + $0x80] sm:$0x1]
  %v3487 = vld [vmem:[%s1947 + $0x84] sm:$0xe]
  %v3488 = vld [vmem:[%s1947 + $0x88] sm:$0xf]
  %v3489 = vld [vmem:[%s1947 + $0x8c] sm:$0x1]
  %v3490 = vld [vmem:[%s1947 + $0x90] sm:$0xe]
  %v3491 = vld [vmem:[%s1947 + $0x94] sm:$0xf]
  %v3492 = vld [vmem:[%s1947 + $0x98] sm:$0x1]
  %v3493 = vld [vmem:[%s1947 + $0x9c] sm:$0xe]
  %v3494 = vld [vmem:[%s1947 + $0xa0] sm:$0xf]
  %v3495 = vld [vmem:[%s1947 + $0xa4] sm:$0x1]
  %v3496 = vld [vmem:[%s1947 + $0xa8] sm:$0xe]
  %v3497 = vld [vmem:[%s1947 + $0xac] sm:$0xf]
  %v3498 = vld [vmem:[%s1947 + $0xb0] sm:$0x1]
  %v3499 = vld [vmem:[%s1947 + $0xb4] sm:$0xe]
  %v3500 = vld [vmem:[%s1947 + $0xb8] sm:$0xf]
  %v3501 = vld [vmem:[%s1947 + $0xbc] sm:$0x1]
  %v3502 = vld [vmem:[%s1947 + $0xd8] sm:$0xe]
  %v3503 = vld [vmem:[%s1947 + $0xdc] sm:$0xf]
  %v3504 = vld [vmem:[%s1947 + $0xe0] sm:$0x1]
  %v3505 = vld [vmem:[%s1947 + $0xe4] sm:$0xe]
  %v3506 = vld [vmem:[%s1947 + $0xe8] sm:$0xf]
  %v3507 = vld [vmem:[%s1947 + $0xec] sm:$0x1]
  %v3508 = vld [vmem:[%s1947 + $0xf0] sm:$0xe]
  %v3509 = vld [vmem:[%s1947 + $0xf4] sm:$0xf]
  %v3510 = vld [vmem:[%s1947 + $0xf8] sm:$0x1]
  %v3511 = vld [vmem:[%s1947 + $0xfc] sm:$0xe]
  %v3512 = vld [vmem:[%s1947 + $0x100] sm:$0xf]
  %v3513 = vld [vmem:[%s1947 + $0x104] sm:$0x1]
  %v3514 = vld [vmem:[%s1947 + $0x108] sm:$0xe]
  %v3515 = vld [vmem:[%s1947 + $0x10c] sm:$0xf]
  %v3516 = vld [vmem:[%s1947 + $0x110] sm:$0x1]
  %v3517 = vld [vmem:[%s1947 + $0x114] sm:$0xe]
  %v3518 = vld [vmem:[%s1947 + $0x118] sm:$0xf]
  %v3519 = vld [vmem:[%s1947 + $0x11c] sm:$0x1]
  %v3520 = vld [vmem:[%s1947 + $0x120] sm:$0xe]
  %v3521 = vld [vmem:[%s1947 + $0x124] sm:$0xf]
  %v3522 = vld [vmem:[%s1947 + $0x128] sm:$0x1]
  %v3523 = vld [vmem:[%s1947 + $0x12c] sm:$0xe]
  %v3524 = vld [vmem:[%s1947 + $0x130] sm:$0xf]
  %v3525 = vld [vmem:[%s1947 + $0x134] sm:$0x1]
  %v3526 = vld [vmem:[%s1947 + $0x138] sm:$0xe]
  %v3527 = vld [vmem:[%s1947 + $0x13c] sm:$0xf]
  %v3528 = vld [vmem:[%s1947 + $0x140] sm:$0x1]
  %v3529 = vld [vmem:[%s1947 + $0x144] sm:$0xe]
  %v3530 = vld [vmem:[%s1947 + $0x148] sm:$0xf]
  %v3531 = vld [vmem:[%s1947 + $0x14c] sm:$0x1]
  %v3532 = vld [vmem:[%s1947 + $0x150] sm:$0xe]
  %v3533 = vld [vmem:[%s1947 + $0x154] sm:$0xf]
  %v3534 = vld [vmem:[%s1947 + $0x158] sm:$0x1]
  %v3535 = vld [vmem:[%s1947 + $0x15c] sm:$0xe]
  %v3536 = vld [vmem:[%s1947 + $0x160] sm:$0xf]
  %v3537 = vld [vmem:[%s1947 + $0x164] sm:$0x1]
  %v3538 = vld [vmem:[%s1947 + $0x168] sm:$0xe]
  %v3539 = vld [vmem:[%s1947 + $0x16c] sm:$0xf]
  %v3540 = vld [vmem:[%s1947 + $0x170] sm:$0x1]
  %v3541 = vld [vmem:[%s1947 + $0x174] sm:$0xe]
  %v3542 = vld [vmem:[%s1947 + $0x178] sm:$0xf]
  %v3543 = vld [vmem:[%s1947 + $0x17c] sm:$0x1]
  %v3544 = vld [vmem:[%s1947 + $0x180] sm:$0xe]
  %v3545 = vld [vmem:[%s1947 + $0x184] sm:$0xf]
  %v3546 = vld [vmem:[%s1947 + $0x188] sm:$0x1]
  %v3547 = vld [vmem:[%s1947 + $0x18c] sm:$0xe]
  %v3548 = vld [vmem:[%s1947 + $0x190] sm:$0xf]
  %v3549 = vld [vmem:[%s1947 + $0x194] sm:$0x1]
  %v3646 = vrot.slane %v3454, 5
  %v3647 = vrot.slane %v3646, 4
  %v3648 = vrot.slane %v3455, 5
  %v3649 = vsel %vm1465, %v3647, %v3648
  %v3650 = vrot.slane %v3648, 4
  %v3651 = vrot.slane %v3456, 5
  %v3652 = vsel %vm1465, %v3650, %v3651
  %v3653 = vrot.slane %v3457, 5
  %v3654 = vrot.slane %v3653, 4
  %v3655 = vrot.slane %v3458, 5
  %v3656 = vsel %vm1465, %v3654, %v3655
  %v3657 = vrot.slane %v3655, 4
  %v3658 = vrot.slane %v3459, 5
  %v3659 = vsel %vm1465, %v3657, %v3658
  %v3660 = vrot.slane %v3460, 5
  %v3661 = vrot.slane %v3660, 4
  %v3662 = vrot.slane %v3461, 5
  %v3663 = vsel %vm1465, %v3661, %v3662
  %v3664 = vrot.slane %v3662, 4
  %v3665 = vrot.slane %v3462, 5
  %v3666 = vsel %vm1465, %v3664, %v3665
  %v3667 = vrot.slane %v3463, 5
  %v3668 = vrot.slane %v3667, 4
  %v3669 = vrot.slane %v3464, 5
  %v3670 = vsel %vm1465, %v3668, %v3669
  %v3671 = vrot.slane %v3669, 4
  %v3672 = vrot.slane %v3465, 5
  %v3673 = vsel %vm1465, %v3671, %v3672
  %v3674 = vrot.slane %v3466, 5
  %v3675 = vrot.slane %v3674, 4
  %v3676 = vrot.slane %v3467, 5
  %v3677 = vsel %vm1465, %v3675, %v3676
  %v3678 = vrot.slane %v3676, 4
  %v3679 = vrot.slane %v3468, 5
  %v3680 = vsel %vm1465, %v3678, %v3679
  %v3681 = vrot.slane %v3469, 5
  %v3682 = vrot.slane %v3681, 4
  %v3683 = vrot.slane %v3470, 5
  %v3684 = vsel %vm1465, %v3682, %v3683
  %v3685 = vrot.slane %v3683, 4
  %v3686 = vrot.slane %v3471, 5
  %v3687 = vsel %vm1465, %v3685, %v3686
  %v3688 = vrot.slane %v3472, 5
  %v3689 = vrot.slane %v3688, 4
  %v3690 = vrot.slane %v3473, 5
  %v3691 = vsel %vm1465, %v3689, %v3690
  %v3692 = vrot.slane %v3690, 4
  %v3693 = vrot.slane %v3474, 5
  %v3694 = vsel %vm1465, %v3692, %v3693
  %v3695 = vrot.slane %v3475, 5
  %v3696 = vrot.slane %v3695, 4
  %v3697 = vrot.slane %v3476, 5
  %v3698 = vsel %vm1465, %v3696, %v3697
  %v3699 = vrot.slane %v3697, 4
  %v3700 = vrot.slane %v3477, 5
  %v3701 = vsel %vm1465, %v3699, %v3700
  %v3702 = vrot.slane %v3478, 5
  %v3703 = vrot.slane %v3702, 4
  %v3704 = vrot.slane %v3479, 5
  %v3705 = vsel %vm1465, %v3703, %v3704
  %v3706 = vrot.slane %v3704, 4
  %v3707 = vrot.slane %v3480, 5
  %v3708 = vsel %vm1465, %v3706, %v3707
  %v3709 = vrot.slane %v3481, 5
  %v3710 = vrot.slane %v3709, 4
  %v3711 = vrot.slane %v3482, 5
  %v3712 = vsel %vm1465, %v3710, %v3711
  %v3713 = vrot.slane %v3711, 4
  %v3714 = vrot.slane %v3483, 5
  %v3715 = vsel %vm1465, %v3713, %v3714
  %v3716 = vrot.slane %v3484, 5
  %v3717 = vrot.slane %v3716, 4
  %v3718 = vrot.slane %v3485, 5
  %v3719 = vsel %vm1465, %v3717, %v3718
  %v3720 = vrot.slane %v3718, 4
  %v3721 = vrot.slane %v3486, 5
  %v3722 = vsel %vm1465, %v3720, %v3721
  %v3723 = vrot.slane %v3487, 5
  %v3724 = vrot.slane %v3723, 4
  %v3725 = vrot.slane %v3488, 5
  %v3726 = vsel %vm1465, %v3724, %v3725
  %v3727 = vrot.slane %v3725, 4
  %v3728 = vrot.slane %v3489, 5
  %v3729 = vsel %vm1465, %v3727, %v3728
  %v3730 = vrot.slane %v3490, 5
  %v3731 = vrot.slane %v3730, 4
  %v3732 = vrot.slane %v3491, 5
  %v3733 = vsel %vm1465, %v3731, %v3732
  %v3734 = vrot.slane %v3732, 4
  %v3735 = vrot.slane %v3492, 5
  %v3736 = vsel %vm1465, %v3734, %v3735
  %v3737 = vrot.slane %v3493, 5
  %v3738 = vrot.slane %v3737, 4
  %v3739 = vrot.slane %v3494, 5
  %v3740 = vsel %vm1465, %v3738, %v3739
  %v3741 = vrot.slane %v3739, 4
  %v3742 = vrot.slane %v3495, 5
  %v3743 = vsel %vm1465, %v3741, %v3742
  %v3744 = vrot.slane %v3496, 5
  %v3745 = vrot.slane %v3744, 4
  %v3746 = vrot.slane %v3497, 5
  %v3747 = vsel %vm1465, %v3745, %v3746
  %v3748 = vrot.slane %v3746, 4
  %v3749 = vrot.slane %v3498, 5
  %v3750 = vsel %vm1465, %v3748, %v3749
  %v3751 = vrot.slane %v3499, 5
  %v3752 = vrot.slane %v3751, 4
  %v3753 = vrot.slane %v3500, 5
  %v3754 = vsel %vm1465, %v3752, %v3753
  %v3755 = vrot.slane %v3753, 4
  %v3756 = vrot.slane %v3501, 5
  %v3757 = vsel %vm1465, %v3755, %v3756
  %v3758 = vrot.slane %v3502, 5
  %v3759 = vrot.slane %v3758, 4
  %v3760 = vrot.slane %v3503, 5
  %v3761 = vsel %vm1465, %v3759, %v3760
  %v3762 = vrot.slane %v3760, 4
  %v3763 = vrot.slane %v3504, 5
  %v3764 = vsel %vm1465, %v3762, %v3763
  %v3765 = vrot.slane %v3505, 5
  %v3766 = vrot.slane %v3765, 4
  %v3767 = vrot.slane %v3506, 5
  %v3768 = vsel %vm1465, %v3766, %v3767
  %v3769 = vrot.slane %v3767, 4
  %v3770 = vrot.slane %v3507, 5
  %v3771 = vsel %vm1465, %v3769, %v3770
  %v3772 = vrot.slane %v3508, 5
  %v3773 = vrot.slane %v3772, 4
  %v3774 = vrot.slane %v3509, 5
  %v3775 = vsel %vm1465, %v3773, %v3774
  %v3776 = vrot.slane %v3774, 4
  %v3777 = vrot.slane %v3510, 5
  %v3778 = vsel %vm1465, %v3776, %v3777
  %v3779 = vrot.slane %v3511, 5
  %v3780 = vrot.slane %v3779, 4
  %v3781 = vrot.slane %v3512, 5
  %v3782 = vsel %vm1465, %v3780, %v3781
  %v3783 = vrot.slane %v3781, 4
  %v3784 = vrot.slane %v3513, 5
  %v3785 = vsel %vm1465, %v3783, %v3784
  %v3786 = vrot.slane %v3514, 5
  %v3787 = vrot.slane %v3786, 4
  %v3788 = vrot.slane %v3515, 5
  %v3789 = vsel %vm1465, %v3787, %v3788
  %v3790 = vrot.slane %v3788, 4
  %v3791 = vrot.slane %v3516, 5
  %v3792 = vsel %vm1465, %v3790, %v3791
  %v3793 = vrot.slane %v3517, 5
  %v3794 = vrot.slane %v3793, 4
  %v3795 = vrot.slane %v3518, 5
  %v3796 = vsel %vm1465, %v3794, %v3795
  %v3797 = vrot.slane %v3795, 4
  %v3798 = vrot.slane %v3519, 5
  %v3799 = vsel %vm1465, %v3797, %v3798
  %v3800 = vrot.slane %v3520, 5
  %v3801 = vrot.slane %v3800, 4
  %v3802 = vrot.slane %v3521, 5
  %v3803 = vsel %vm1465, %v3801, %v3802
  %v3804 = vrot.slane %v3802, 4
  %v3805 = vrot.slane %v3522, 5
  %v3806 = vsel %vm1465, %v3804, %v3805
  %v3807 = vrot.slane %v3523, 5
  %v3808 = vrot.slane %v3807, 4
  %v3809 = vrot.slane %v3524, 5
  %v3810 = vsel %vm1465, %v3808, %v3809
  %v3811 = vrot.slane %v3809, 4
  %v3812 = vrot.slane %v3525, 5
  %v3813 = vsel %vm1465, %v3811, %v3812
  %v3814 = vrot.slane %v3526, 5
  %v3815 = vrot.slane %v3814, 4
  %v3816 = vrot.slane %v3527, 5
  %v3817 = vsel %vm1465, %v3815, %v3816
  %v3818 = vrot.slane %v3816, 4
  %v3819 = vrot.slane %v3528, 5
  %v3820 = vsel %vm1465, %v3818, %v3819
  %v3821 = vrot.slane %v3529, 5
  %v3822 = vrot.slane %v3821, 4
  %v3823 = vrot.slane %v3530, 5
  %v3824 = vsel %vm1465, %v3822, %v3823
  %v3825 = vrot.slane %v3823, 4
  %v3826 = vrot.slane %v3531, 5
  %v3827 = vsel %vm1465, %v3825, %v3826
  %v3828 = vrot.slane %v3532, 5
  %v3829 = vrot.slane %v3828, 4
  %v3830 = vrot.slane %v3533, 5
  %v3831 = vsel %vm1465, %v3829, %v3830
  %v3832 = vrot.slane %v3830, 4
  %v3833 = vrot.slane %v3534, 5
  %v3834 = vsel %vm1465, %v3832, %v3833
  %v3835 = vrot.slane %v3535, 5
  %v3836 = vrot.slane %v3835, 4
  %v3837 = vrot.slane %v3536, 5
  %v3838 = vsel %vm1465, %v3836, %v3837
  %v3839 = vrot.slane %v3837, 4
  %v3840 = vrot.slane %v3537, 5
  %v3841 = vsel %vm1465, %v3839, %v3840
  %v3842 = vrot.slane %v3538, 5
  %v3843 = vrot.slane %v3842, 4
  %v3844 = vrot.slane %v3539, 5
  %v3845 = vsel %vm1465, %v3843, %v3844
  %v3846 = vrot.slane %v3844, 4
  %v3847 = vrot.slane %v3540, 5
  %v3848 = vsel %vm1465, %v3846, %v3847
  %v3849 = vrot.slane %v3541, 5
  %v3850 = vrot.slane %v3849, 4
  %v3851 = vrot.slane %v3542, 5
  %v3852 = vsel %vm1465, %v3850, %v3851
  %v3853 = vrot.slane %v3851, 4
  %v3854 = vrot.slane %v3543, 5
  %v3855 = vsel %vm1465, %v3853, %v3854
  %v3856 = vrot.slane %v3544, 5
  %v3857 = vrot.slane %v3856, 4
  %v3858 = vrot.slane %v3545, 5
  %v3859 = vsel %vm1465, %v3857, %v3858
  %v3860 = vrot.slane %v3858, 4
  %v3861 = vrot.slane %v3546, 5
  %v3862 = vsel %vm1465, %v3860, %v3861
  %v3863 = vrot.slane %v3547, 5
  %v3864 = vrot.slane %v3863, 4
  %v3865 = vrot.slane %v3548, 5
  %v3866 = vsel %vm1465, %v3864, %v3865
  %v3867 = vrot.slane %v3865, 4
  %v3868 = vrot.slane %v3549, 5
  %v3869 = vsel %vm1465, %v3867, %v3868
  %3870 = vrot.lane.b32.xlu0 %v3649, 20
  %v3871 = vpop.permute.xlu0 %3870
  %3872 = vrot.lane.b32.xlu0 %v3652, 20
  %v3873 = vpop.permute.xlu0 %3872
  %3874 = vrot.lane.b32.xlu0 %v3656, 20
  %v3875 = vpop.permute.xlu0 %3874
  %3876 = vrot.lane.b32.xlu0 %v3659, 20
  %v3877 = vpop.permute.xlu0 %3876
  %3878 = vrot.lane.b32.xlu0 %v3663, 20
  %v3879 = vpop.permute.xlu0 %3878
  %3880 = vrot.lane.b32.xlu0 %v3666, 20
  %v3881 = vpop.permute.xlu0 %3880
  %3882 = vrot.lane.b32.xlu0 %v3670, 20
  %v3883 = vpop.permute.xlu0 %3882
  %3884 = vrot.lane.b32.xlu0 %v3673, 20
  %v3885 = vpop.permute.xlu0 %3884
  %3886 = vrot.lane.b32.xlu0 %v3677, 20
  %v3887 = vpop.permute.xlu0 %3886
  %3888 = vrot.lane.b32.xlu0 %v3680, 20
  %v3889 = vpop.permute.xlu0 %3888
  %3890 = vrot.lane.b32.xlu0 %v3684, 20
  %v3891 = vpop.permute.xlu0 %3890
  %3892 = vrot.lane.b32.xlu0 %v3687, 20
  %v3893 = vpop.permute.xlu0 %3892
  %3894 = vrot.lane.b32.xlu0 %v3691, 20
  %v3895 = vpop.permute.xlu0 %3894
  %3896 = vrot.lane.b32.xlu0 %v3694, 20
  %v3897 = vpop.permute.xlu0 %3896
  %3898 = vrot.lane.b32.xlu0 %v3698, 20
  %v3899 = vpop.permute.xlu0 %3898
  %3900 = vrot.lane.b32.xlu0 %v3701, 20
  %v3901 = vpop.permute.xlu0 %3900
  %3902 = vrot.lane.b32.xlu0 %v3705, 20
  %v3903 = vpop.permute.xlu0 %3902
  %3904 = vrot.lane.b32.xlu0 %v3708, 20
  %v3905 = vpop.permute.xlu0 %3904
  %3906 = vrot.lane.b32.xlu0 %v3712, 20
  %v3907 = vpop.permute.xlu0 %3906
  %3908 = vrot.lane.b32.xlu0 %v3715, 20
  %v3909 = vpop.permute.xlu0 %3908
  %3910 = vrot.lane.b32.xlu0 %v3719, 20
  %v3911 = vpop.permute.xlu0 %3910
  %3912 = vrot.lane.b32.xlu0 %v3722, 20
  %v3913 = vpop.permute.xlu0 %3912
  %3914 = vrot.lane.b32.xlu0 %v3726, 20
  %v3915 = vpop.permute.xlu0 %3914
  %3916 = vrot.lane.b32.xlu0 %v3729, 20
  %v3917 = vpop.permute.xlu0 %3916
  %3918 = vrot.lane.b32.xlu0 %v3733, 20
  %v3919 = vpop.permute.xlu0 %3918
  %3920 = vrot.lane.b32.xlu0 %v3736, 20
  %v3921 = vpop.permute.xlu0 %3920
  %3922 = vrot.lane.b32.xlu0 %v3740, 20
  %v3923 = vpop.permute.xlu0 %3922
  %3924 = vrot.lane.b32.xlu0 %v3743, 20
  %v3925 = vpop.permute.xlu0 %3924
  %3926 = vrot.lane.b32.xlu0 %v3747, 20
  %v3927 = vpop.permute.xlu0 %3926
  %3928 = vrot.lane.b32.xlu0 %v3750, 20
  %v3929 = vpop.permute.xlu0 %3928
  %3930 = vrot.lane.b32.xlu0 %v3754, 20
  %v3931 = vpop.permute.xlu0 %3930
  %3932 = vrot.lane.b32.xlu0 %v3757, 20
  %v3933 = vpop.permute.xlu0 %3932
  %3934 = vrot.lane.b32.xlu0 %v3761, 20
  %v3935 = vpop.permute.xlu0 %3934
  %3936 = vrot.lane.b32.xlu0 %v3764, 20
  %v3937 = vpop.permute.xlu0 %3936
  %3938 = vrot.lane.b32.xlu0 %v3768, 20
  %v3939 = vpop.permute.xlu0 %3938
  %3940 = vrot.lane.b32.xlu0 %v3771, 20
  %v3941 = vpop.permute.xlu0 %3940
  %3942 = vrot.lane.b32.xlu0 %v3775, 20
  %v3943 = vpop.permute.xlu0 %3942
  %3944 = vrot.lane.b32.xlu0 %v3778, 20
  %v3945 = vpop.permute.xlu0 %3944
  %3946 = vrot.lane.b32.xlu0 %v3782, 20
  %v3947 = vpop.permute.xlu0 %3946
  %3948 = vrot.lane.b32.xlu0 %v3785, 20
  %v3949 = vpop.permute.xlu0 %3948
  %3950 = vrot.lane.b32.xlu0 %v3789, 20
  %v3951 = vpop.permute.xlu0 %3950
  %3952 = vrot.lane.b32.xlu0 %v3792, 20
  %v3953 = vpop.permute.xlu0 %3952
  %3954 = vrot.lane.b32.xlu0 %v3796, 20
  %v3955 = vpop.permute.xlu0 %3954
  %3956 = vrot.lane.b32.xlu0 %v3799, 20
  %v3957 = vpop.permute.xlu0 %3956
  %3958 = vrot.lane.b32.xlu0 %v3803, 20
  %v3959 = vpop.permute.xlu0 %3958
  %3960 = vrot.lane.b32.xlu0 %v3806, 20
  %v3961 = vpop.permute.xlu0 %3960
  %3962 = vrot.lane.b32.xlu0 %v3810, 20
  %v3963 = vpop.permute.xlu0 %3962
  %3964 = vrot.lane.b32.xlu0 %v3813, 20
  %v3965 = vpop.permute.xlu0 %3964
  %3966 = vrot.lane.b32.xlu0 %v3817, 20
  %v3967 = vpop.permute.xlu0 %3966
  %3968 = vrot.lane.b32.xlu0 %v3820, 20
  %v3969 = vpop.permute.xlu0 %3968
  %3970 = vrot.lane.b32.xlu0 %v3824, 20
  %v3971 = vpop.permute.xlu0 %3970
  %3972 = vrot.lane.b32.xlu0 %v3827, 20
  %v3973 = vpop.permute.xlu0 %3972
  %3974 = vrot.lane.b32.xlu0 %v3831, 20
  %v3975 = vpop.permute.xlu0 %3974
  %3976 = vrot.lane.b32.xlu0 %v3834, 20
  %v3977 = vpop.permute.xlu0 %3976
  %3978 = vrot.lane.b32.xlu0 %v3838, 20
  %v3979 = vpop.permute.xlu0 %3978
  %3980 = vrot.lane.b32.xlu0 %v3841, 20
  %v3981 = vpop.permute.xlu0 %3980
  %3982 = vrot.lane.b32.xlu0 %v3845, 20
  %v3983 = vpop.permute.xlu0 %3982
  %3984 = vrot.lane.b32.xlu0 %v3848, 20
  %v3985 = vpop.permute.xlu0 %3984
  %3986 = vrot.lane.b32.xlu0 %v3852, 20
  %v3987 = vpop.permute.xlu0 %3986
  %3988 = vrot.lane.b32.xlu0 %v3855, 20
  %v3989 = vpop.permute.xlu0 %3988
  %3990 = vrot.lane.b32.xlu0 %v3859, 20
  %v3991 = vpop.permute.xlu0 %3990
  %3992 = vrot.lane.b32.xlu0 %v3862, 20
  %v3993 = vpop.permute.xlu0 %3992
  %3994 = vrot.lane.b32.xlu0 %v3866, 20
  %v3995 = vpop.permute.xlu0 %3994
  %3996 = vrot.lane.b32.xlu0 %v3869, 20
  %v3997 = vpop.permute.xlu0 %3996
  %vm4062 = vcmask 191648
  %4063 = vst.msk [vmem:[#allocation2] sm:$0xf] %vm4062, %v3871
  %4064 = vst.msk [vmem:[#allocation2 + $0x4] sm:$0xf] %vm4062, %v3873
  %4065 = vst.msk [vmem:[#allocation2 + $0x8] sm:$0xf] %vm4062, %v3875
  %4066 = vst.msk [vmem:[#allocation2 + $0xc] sm:$0xf] %vm4062, %v3877
  %4067 = vst.msk [vmem:[#allocation2 + $0x10] sm:$0xf] %vm4062, %v3879
  %4068 = vst.msk [vmem:[#allocation2 + $0x14] sm:$0xf] %vm4062, %v3881
  %4069 = vst.msk [vmem:[#allocation2 + $0x18] sm:$0xf] %vm4062, %v3883
  %4070 = vst.msk [vmem:[#allocation2 + $0x1c] sm:$0xf] %vm4062, %v3885
  %4071 = vst.msk [vmem:[#allocation2 + $0x20] sm:$0xf] %vm4062, %v3887
  %4072 = vst.msk [vmem:[#allocation2 + $0x24] sm:$0xf] %vm4062, %v3889
  %4073 = vst.msk [vmem:[#allocation2 + $0x28] sm:$0xf] %vm4062, %v3891
  %4074 = vst.msk [vmem:[#allocation2 + $0x2c] sm:$0xf] %vm4062, %v3893
  %4075 = vst.msk [vmem:[#allocation2 + $0x30] sm:$0xf] %vm4062, %v3895
  %4076 = vst.msk [vmem:[#allocation2 + $0x34] sm:$0xf] %vm4062, %v3897
  %4077 = vst.msk [vmem:[#allocation2 + $0x38] sm:$0xf] %vm4062, %v3899
  %4078 = vst.msk [vmem:[#allocation2 + $0x3c] sm:$0xf] %vm4062, %v3901
  %4079 = vst.msk [vmem:[#allocation2 + $0x40] sm:$0xf] %vm4062, %v3903
  %4080 = vst.msk [vmem:[#allocation2 + $0x44] sm:$0xf] %vm4062, %v3905
  %4081 = vst.msk [vmem:[#allocation2 + $0x48] sm:$0xf] %vm4062, %v3907
  %4082 = vst.msk [vmem:[#allocation2 + $0x4c] sm:$0xf] %vm4062, %v3909
  %4083 = vst.msk [vmem:[#allocation2 + $0x50] sm:$0xf] %vm4062, %v3911
  %4084 = vst.msk [vmem:[#allocation2 + $0x54] sm:$0xf] %vm4062, %v3913
  %4085 = vst.msk [vmem:[#allocation2 + $0x58] sm:$0xf] %vm4062, %v3915
  %4086 = vst.msk [vmem:[#allocation2 + $0x5c] sm:$0xf] %vm4062, %v3917
  %4087 = vst.msk [vmem:[#allocation2 + $0x60] sm:$0xf] %vm4062, %v3919
  %4088 = vst.msk [vmem:[#allocation2 + $0x64] sm:$0xf] %vm4062, %v3921
  %4089 = vst.msk [vmem:[#allocation2 + $0x68] sm:$0xf] %vm4062, %v3923
  %4090 = vst.msk [vmem:[#allocation2 + $0x6c] sm:$0xf] %vm4062, %v3925
  %4091 = vst.msk [vmem:[#allocation2 + $0x70] sm:$0xf] %vm4062, %v3927
  %4092 = vst.msk [vmem:[#allocation2 + $0x74] sm:$0xf] %vm4062, %v3929
  %4093 = vst.msk [vmem:[#allocation2 + $0x78] sm:$0xf] %vm4062, %v3931
  %4094 = vst.msk [vmem:[#allocation2 + $0x7c] sm:$0xf] %vm4062, %v3933
  %4095 = vst.msk [vmem:[#allocation2 + $0x80] sm:$0xf] %vm4062, %v3935
  %4096 = vst.msk [vmem:[#allocation2 + $0x84] sm:$0xf] %vm4062, %v3937
  %4097 = vst.msk [vmem:[#allocation2 + $0x88] sm:$0xf] %vm4062, %v3939
  %4098 = vst.msk [vmem:[#allocation2 + $0x8c] sm:$0xf] %vm4062, %v3941
  %4099 = vst.msk [vmem:[#allocation2 + $0x90] sm:$0xf] %vm4062, %v3943
  %4100 = vst.msk [vmem:[#allocation2 + $0x94] sm:$0xf] %vm4062, %v3945
  %4101 = vst.msk [vmem:[#allocation2 + $0x98] sm:$0xf] %vm4062, %v3947
  %4102 = vst.msk [vmem:[#allocation2 + $0x9c] sm:$0xf] %vm4062, %v3949
  %4103 = vst.msk [vmem:[#allocation2 + $0xa0] sm:$0xf] %vm4062, %v3951
  %4104 = vst.msk [vmem:[#allocation2 + $0xa4] sm:$0xf] %vm4062, %v3953
  %4105 = vst.msk [vmem:[#allocation2 + $0xa8] sm:$0xf] %vm4062, %v3955
  %4106 = vst.msk [vmem:[#allocation2 + $0xac] sm:$0xf] %vm4062, %v3957
  %4107 = vst.msk [vmem:[#allocation2 + $0xb0] sm:$0xf] %vm4062, %v3959
  %4108 = vst.msk [vmem:[#allocation2 + $0xb4] sm:$0xf] %vm4062, %v3961
  %4109 = vst.msk [vmem:[#allocation2 + $0xb8] sm:$0xf] %vm4062, %v3963
  %4110 = vst.msk [vmem:[#allocation2 + $0xbc] sm:$0xf] %vm4062, %v3965
  %4111 = vst.msk [vmem:[#allocation2 + $0xc0] sm:$0xf] %vm4062, %v3967
  %4112 = vst.msk [vmem:[#allocation2 + $0xc4] sm:$0xf] %vm4062, %v3969
  %4113 = vst.msk [vmem:[#allocation2 + $0xc8] sm:$0xf] %vm4062, %v3971
  %4114 = vst.msk [vmem:[#allocation2 + $0xcc] sm:$0xf] %vm4062, %v3973
  %4115 = vst.msk [vmem:[#allocation2 + $0xd0] sm:$0xf] %vm4062, %v3975
  %4116 = vst.msk [vmem:[#allocation2 + $0xd4] sm:$0xf] %vm4062, %v3977
  %4117 = vst.msk [vmem:[#allocation2 + $0xd8] sm:$0xf] %vm4062, %v3979
  %4118 = vst.msk [vmem:[#allocation2 + $0xdc] sm:$0xf] %vm4062, %v3981
  %4119 = vst.msk [vmem:[#allocation2 + $0xe0] sm:$0xf] %vm4062, %v3983
  %4120 = vst.msk [vmem:[#allocation2 + $0xe4] sm:$0xf] %vm4062, %v3985
  %4121 = vst.msk [vmem:[#allocation2 + $0xe8] sm:$0xf] %vm4062, %v3987
  %4122 = vst.msk [vmem:[#allocation2 + $0xec] sm:$0xf] %vm4062, %v3989
  %4123 = vst.msk [vmem:[#allocation2 + $0xf0] sm:$0xf] %vm4062, %v3991
  %4124 = vst.msk [vmem:[#allocation2 + $0xf4] sm:$0xf] %vm4062, %v3993
  %4125 = vst.msk [vmem:[#allocation2 + $0xf8] sm:$0xf] %vm4062, %v3995
  %4126 = vst.msk [vmem:[#allocation2 + $0xfc] sm:$0xf] %vm4062, %v3997
  %s4127 = scalar_lea.vmem %s0, 24
  %v4128 = vld [vmem:[%s4127] sm:$0xf]
  %v4129 = vld [vmem:[%s4127 + $0x4] sm:$0xf]
  %v4130 = vld [vmem:[%s4127 + $0xc] sm:$0xf]
  %v4131 = vld [vmem:[%s4127 + $0x10] sm:$0xf]
  %v4132 = vld [vmem:[%s4127 + $0x18] sm:$0xf]
  %v4133 = vld [vmem:[%s4127 + $0x1c] sm:$0xf]
  %v4134 = vld [vmem:[%s4127 + $0x24] sm:$0xf]
  %v4135 = vld [vmem:[%s4127 + $0x28] sm:$0xf]
  %v4136 = vld [vmem:[%s4127 + $0x30] sm:$0xf]
  %v4137 = vld [vmem:[%s4127 + $0x34] sm:$0xf]
  %v4138 = vld [vmem:[%s4127 + $0x3c] sm:$0xf]
  %v4139 = vld [vmem:[%s4127 + $0x40] sm:$0xf]
  %v4140 = vld [vmem:[%s4127 + $0x48] sm:$0xf]
  %v4141 = vld [vmem:[%s4127 + $0x4c] sm:$0xf]
  %v4142 = vld [vmem:[%s4127 + $0x54] sm:$0xf]
  %v4143 = vld [vmem:[%s4127 + $0x58] sm:$0xf]
  %v4144 = vld [vmem:[%s4127 + $0x60] sm:$0xf]
  %v4145 = vld [vmem:[%s4127 + $0x64] sm:$0xf]
  %v4146 = vld [vmem:[%s4127 + $0x6c] sm:$0xf]
  %v4147 = vld [vmem:[%s4127 + $0x70] sm:$0xf]
  %v4148 = vld [vmem:[%s4127 + $0x78] sm:$0xf]
  %v4149 = vld [vmem:[%s4127 + $0x7c] sm:$0xf]
  %v4150 = vld [vmem:[%s4127 + $0x84] sm:$0xf]
  %v4151 = vld [vmem:[%s4127 + $0x88] sm:$0xf]
  %v4152 = vld [vmem:[%s4127 + $0x90] sm:$0xf]
  %v4153 = vld [vmem:[%s4127 + $0x94] sm:$0xf]
  %v4154 = vld [vmem:[%s4127 + $0x9c] sm:$0xf]
  %v4155 = vld [vmem:[%s4127 + $0xa0] sm:$0xf]
  %v4156 = vld [vmem:[%s4127 + $0xa8] sm:$0xf]
  %v4157 = vld [vmem:[%s4127 + $0xac] sm:$0xf]
  %v4158 = vld [vmem:[%s4127 + $0xb4] sm:$0xf]
  %v4159 = vld [vmem:[%s4127 + $0xb8] sm:$0xf]
  %v4160 = vld [vmem:[%s4127 + $0xd8] sm:$0xf]
  %v4161 = vld [vmem:[%s4127 + $0xdc] sm:$0xf]
  %v4162 = vld [vmem:[%s4127 + $0xe4] sm:$0xf]
  %v4163 = vld [vmem:[%s4127 + $0xe8] sm:$0xf]
  %v4164 = vld [vmem:[%s4127 + $0xf0] sm:$0xf]
  %v4165 = vld [vmem:[%s4127 + $0xf4] sm:$0xf]
  %v4166 = vld [vmem:[%s4127 + $0xfc] sm:$0xf]
  %v4167 = vld [vmem:[%s4127 + $0x100] sm:$0xf]
  %v4168 = vld [vmem:[%s4127 + $0x108] sm:$0xf]
  %v4169 = vld [vmem:[%s4127 + $0x10c] sm:$0xf]
  %v4170 = vld [vmem:[%s4127 + $0x114] sm:$0xf]
  %v4171 = vld [vmem:[%s4127 + $0x118] sm:$0xf]
  %v4172 = vld [vmem:[%s4127 + $0x120] sm:$0xf]
  %v4173 = vld [vmem:[%s4127 + $0x124] sm:$0xf]
  %v4174 = vld [vmem:[%s4127 + $0x12c] sm:$0xf]
  %v4175 = vld [vmem:[%s4127 + $0x130] sm:$0xf]
  %v4176 = vld [vmem:[%s4127 + $0x138] sm:$0xf]
  %v4177 = vld [vmem:[%s4127 + $0x13c] sm:$0xf]
  %v4178 = vld [vmem:[%s4127 + $0x144] sm:$0xf]
  %v4179 = vld [vmem:[%s4127 + $0x148] sm:$0xf]
  %v4180 = vld [vmem:[%s4127 + $0x150] sm:$0xf]
  %v4181 = vld [vmem:[%s4127 + $0x154] sm:$0xf]
  %v4182 = vld [vmem:[%s4127 + $0x15c] sm:$0xf]
  %v4183 = vld [vmem:[%s4127 + $0x160] sm:$0xf]
  %v4184 = vld [vmem:[%s4127 + $0x168] sm:$0xf]
  %v4185 = vld [vmem:[%s4127 + $0x16c] sm:$0xf]
  %v4186 = vld [vmem:[%s4127 + $0x174] sm:$0xf]
  %v4187 = vld [vmem:[%s4127 + $0x178] sm:$0xf]
  %v4188 = vld [vmem:[%s4127 + $0x180] sm:$0xf]
  %v4189 = vld [vmem:[%s4127 + $0x184] sm:$0xf]
  %v4190 = vld [vmem:[%s4127 + $0x18c] sm:$0xf]
  %v4191 = vld [vmem:[%s4127 + $0x190] sm:$0xf]
  %4256 = vrot.lane.b32.xlu0 %v4128, 24
  %v4257 = vpop.permute.xlu0 %4256
  %4258 = vrot.lane.b32.xlu0 %v4129, 24
  %v4259 = vpop.permute.xlu0 %4258
  %4260 = vrot.lane.b32.xlu0 %v4130, 24
  %v4261 = vpop.permute.xlu0 %4260
  %4262 = vrot.lane.b32.xlu0 %v4131, 24
  %v4263 = vpop.permute.xlu0 %4262
  %4264 = vrot.lane.b32.xlu0 %v4132, 24
  %v4265 = vpop.permute.xlu0 %4264
  %4266 = vrot.lane.b32.xlu0 %v4133, 24
  %v4267 = vpop.permute.xlu0 %4266
  %4268 = vrot.lane.b32.xlu0 %v4134, 24
  %v4269 = vpop.permute.xlu0 %4268
  %4270 = vrot.lane.b32.xlu0 %v4135, 24
  %v4271 = vpop.permute.xlu0 %4270
  %4272 = vrot.lane.b32.xlu0 %v4136, 24
  %v4273 = vpop.permute.xlu0 %4272
  %4274 = vrot.lane.b32.xlu0 %v4137, 24
  %v4275 = vpop.permute.xlu0 %4274
  %4276 = vrot.lane.b32.xlu0 %v4138, 24
  %v4277 = vpop.permute.xlu0 %4276
  %4278 = vrot.lane.b32.xlu0 %v4139, 24
  %v4279 = vpop.permute.xlu0 %4278
  %4280 = vrot.lane.b32.xlu0 %v4140, 24
  %v4281 = vpop.permute.xlu0 %4280
  %4282 = vrot.lane.b32.xlu0 %v4141, 24
  %v4283 = vpop.permute.xlu0 %4282
  %4284 = vrot.lane.b32.xlu0 %v4142, 24
  %v4285 = vpop.permute.xlu0 %4284
  %4286 = vrot.lane.b32.xlu0 %v4143, 24
  %v4287 = vpop.permute.xlu0 %4286
  %4288 = vrot.lane.b32.xlu0 %v4144, 24
  %v4289 = vpop.permute.xlu0 %4288
  %4290 = vrot.lane.b32.xlu0 %v4145, 24
  %v4291 = vpop.permute.xlu0 %4290
  %4292 = vrot.lane.b32.xlu0 %v4146, 24
  %v4293 = vpop.permute.xlu0 %4292
  %4294 = vrot.lane.b32.xlu0 %v4147, 24
  %v4295 = vpop.permute.xlu0 %4294
  %4296 = vrot.lane.b32.xlu0 %v4148, 24
  %v4297 = vpop.permute.xlu0 %4296
  %4298 = vrot.lane.b32.xlu0 %v4149, 24
  %v4299 = vpop.permute.xlu0 %4298
  %4300 = vrot.lane.b32.xlu0 %v4150, 24
  %v4301 = vpop.permute.xlu0 %4300
  %4302 = vrot.lane.b32.xlu0 %v4151, 24
  %v4303 = vpop.permute.xlu0 %4302
  %4304 = vrot.lane.b32.xlu0 %v4152, 24
  %v4305 = vpop.permute.xlu0 %4304
  %4306 = vrot.lane.b32.xlu0 %v4153, 24
  %v4307 = vpop.permute.xlu0 %4306
  %4308 = vrot.lane.b32.xlu0 %v4154, 24
  %v4309 = vpop.permute.xlu0 %4308
  %4310 = vrot.lane.b32.xlu0 %v4155, 24
  %v4311 = vpop.permute.xlu0 %4310
  %4312 = vrot.lane.b32.xlu0 %v4156, 24
  %v4313 = vpop.permute.xlu0 %4312
  %4314 = vrot.lane.b32.xlu0 %v4157, 24
  %v4315 = vpop.permute.xlu0 %4314
  %4316 = vrot.lane.b32.xlu0 %v4158, 24
  %v4317 = vpop.permute.xlu0 %4316
  %4318 = vrot.lane.b32.xlu0 %v4159, 24
  %v4319 = vpop.permute.xlu0 %4318
  %4320 = vrot.lane.b32.xlu0 %v4160, 24
  %v4321 = vpop.permute.xlu0 %4320
  %4322 = vrot.lane.b32.xlu0 %v4161, 24
  %v4323 = vpop.permute.xlu0 %4322
  %4324 = vrot.lane.b32.xlu0 %v4162, 24
  %v4325 = vpop.permute.xlu0 %4324
  %4326 = vrot.lane.b32.xlu0 %v4163, 24
  %v4327 = vpop.permute.xlu0 %4326
  %4328 = vrot.lane.b32.xlu0 %v4164, 24
  %v4329 = vpop.permute.xlu0 %4328
  %4330 = vrot.lane.b32.xlu0 %v4165, 24
  %v4331 = vpop.permute.xlu0 %4330
  %4332 = vrot.lane.b32.xlu0 %v4166, 24
  %v4333 = vpop.permute.xlu0 %4332
  %4334 = vrot.lane.b32.xlu0 %v4167, 24
  %v4335 = vpop.permute.xlu0 %4334
  %4336 = vrot.lane.b32.xlu0 %v4168, 24
  %v4337 = vpop.permute.xlu0 %4336
  %4338 = vrot.lane.b32.xlu0 %v4169, 24
  %v4339 = vpop.permute.xlu0 %4338
  %4340 = vrot.lane.b32.xlu0 %v4170, 24
  %v4341 = vpop.permute.xlu0 %4340
  %4342 = vrot.lane.b32.xlu0 %v4171, 24
  %v4343 = vpop.permute.xlu0 %4342
  %4344 = vrot.lane.b32.xlu0 %v4172, 24
  %v4345 = vpop.permute.xlu0 %4344
  %4346 = vrot.lane.b32.xlu0 %v4173, 24
  %v4347 = vpop.permute.xlu0 %4346
  %4348 = vrot.lane.b32.xlu0 %v4174, 24
  %v4349 = vpop.permute.xlu0 %4348
  %4350 = vrot.lane.b32.xlu0 %v4175, 24
  %v4351 = vpop.permute.xlu0 %4350
  %4352 = vrot.lane.b32.xlu0 %v4176, 24
  %v4353 = vpop.permute.xlu0 %4352
  %4354 = vrot.lane.b32.xlu0 %v4177, 24
  %v4355 = vpop.permute.xlu0 %4354
  %4356 = vrot.lane.b32.xlu0 %v4178, 24
  %v4357 = vpop.permute.xlu0 %4356
  %4358 = vrot.lane.b32.xlu0 %v4179, 24
  %v4359 = vpop.permute.xlu0 %4358
  %4360 = vrot.lane.b32.xlu0 %v4180, 24
  %v4361 = vpop.permute.xlu0 %4360
  %4362 = vrot.lane.b32.xlu0 %v4181, 24
  %v4363 = vpop.permute.xlu0 %4362
  %4364 = vrot.lane.b32.xlu0 %v4182, 24
  %v4365 = vpop.permute.xlu0 %4364
  %4366 = vrot.lane.b32.xlu0 %v4183, 24
  %v4367 = vpop.permute.xlu0 %4366
  %4368 = vrot.lane.b32.xlu0 %v4184, 24
  %v4369 = vpop.permute.xlu0 %4368
  %4370 = vrot.lane.b32.xlu0 %v4185, 24
  %v4371 = vpop.permute.xlu0 %4370
  %4372 = vrot.lane.b32.xlu0 %v4186, 24
  %v4373 = vpop.permute.xlu0 %4372
  %4374 = vrot.lane.b32.xlu0 %v4187, 24
  %v4375 = vpop.permute.xlu0 %4374
  %4376 = vrot.lane.b32.xlu0 %v4188, 24
  %v4377 = vpop.permute.xlu0 %4376
  %4378 = vrot.lane.b32.xlu0 %v4189, 24
  %v4379 = vpop.permute.xlu0 %4378
  %4380 = vrot.lane.b32.xlu0 %v4190, 24
  %v4381 = vpop.permute.xlu0 %4380
  %4382 = vrot.lane.b32.xlu0 %v4191, 24
  %v4383 = vpop.permute.xlu0 %4382
  %vm4448 = vcmask 224448
  %4449 = vst.msk [vmem:[#allocation2] sm:$0xf] %vm4448, %v4257
  %4450 = vst.msk [vmem:[#allocation2 + $0x4] sm:$0xf] %vm4448, %v4259
  %4451 = vst.msk [vmem:[#allocation2 + $0x8] sm:$0xf] %vm4448, %v4261
  %4452 = vst.msk [vmem:[#allocation2 + $0xc] sm:$0xf] %vm4448, %v4263
  %4453 = vst.msk [vmem:[#allocation2 + $0x10] sm:$0xf] %vm4448, %v4265
  %4454 = vst.msk [vmem:[#allocation2 + $0x14] sm:$0xf] %vm4448, %v4267
  %4455 = vst.msk [vmem:[#allocation2 + $0x18] sm:$0xf] %vm4448, %v4269
  %4456 = vst.msk [vmem:[#allocation2 + $0x1c] sm:$0xf] %vm4448, %v4271
  %4457 = vst.msk [vmem:[#allocation2 + $0x20] sm:$0xf] %vm4448, %v4273
  %4458 = vst.msk [vmem:[#allocation2 + $0x24] sm:$0xf] %vm4448, %v4275
  %4459 = vst.msk [vmem:[#allocation2 + $0x28] sm:$0xf] %vm4448, %v4277
  %4460 = vst.msk [vmem:[#allocation2 + $0x2c] sm:$0xf] %vm4448, %v4279
  %4461 = vst.msk [vmem:[#allocation2 + $0x30] sm:$0xf] %vm4448, %v4281
  %4462 = vst.msk [vmem:[#allocation2 + $0x34] sm:$0xf] %vm4448, %v4283
  %4463 = vst.msk [vmem:[#allocation2 + $0x38] sm:$0xf] %vm4448, %v4285
  %4464 = vst.msk [vmem:[#allocation2 + $0x3c] sm:$0xf] %vm4448, %v4287
  %4465 = vst.msk [vmem:[#allocation2 + $0x40] sm:$0xf] %vm4448, %v4289
  %4466 = vst.msk [vmem:[#allocation2 + $0x44] sm:$0xf] %vm4448, %v4291
  %4467 = vst.msk [vmem:[#allocation2 + $0x48] sm:$0xf] %vm4448, %v4293
  %4468 = vst.msk [vmem:[#allocation2 + $0x4c] sm:$0xf] %vm4448, %v4295
  %4469 = vst.msk [vmem:[#allocation2 + $0x50] sm:$0xf] %vm4448, %v4297
  %4470 = vst.msk [vmem:[#allocation2 + $0x54] sm:$0xf] %vm4448, %v4299
  %4471 = vst.msk [vmem:[#allocation2 + $0x58] sm:$0xf] %vm4448, %v4301
  %4472 = vst.msk [vmem:[#allocation2 + $0x5c] sm:$0xf] %vm4448, %v4303
  %4473 = vst.msk [vmem:[#allocation2 + $0x60] sm:$0xf] %vm4448, %v4305
  %4474 = vst.msk [vmem:[#allocation2 + $0x64] sm:$0xf] %vm4448, %v4307
  %4475 = vst.msk [vmem:[#allocation2 + $0x68] sm:$0xf] %vm4448, %v4309
  %4476 = vst.msk [vmem:[#allocation2 + $0x6c] sm:$0xf] %vm4448, %v4311
  %4477 = vst.msk [vmem:[#allocation2 + $0x70] sm:$0xf] %vm4448, %v4313
  %4478 = vst.msk [vmem:[#allocation2 + $0x74] sm:$0xf] %vm4448, %v4315
  %4479 = vst.msk [vmem:[#allocation2 + $0x78] sm:$0xf] %vm4448, %v4317
  %4480 = vst.msk [vmem:[#allocation2 + $0x7c] sm:$0xf] %vm4448, %v4319
  %4481 = vst.msk [vmem:[#allocation2 + $0x80] sm:$0xf] %vm4448, %v4321
  %4482 = vst.msk [vmem:[#allocation2 + $0x84] sm:$0xf] %vm4448, %v4323
  %4483 = vst.msk [vmem:[#allocation2 + $0x88] sm:$0xf] %vm4448, %v4325
  %4484 = vst.msk [vmem:[#allocation2 + $0x8c] sm:$0xf] %vm4448, %v4327
  %4485 = vst.msk [vmem:[#allocation2 + $0x90] sm:$0xf] %vm4448, %v4329
  %4486 = vst.msk [vmem:[#allocation2 + $0x94] sm:$0xf] %vm4448, %v4331
  %4487 = vst.msk [vmem:[#allocation2 + $0x98] sm:$0xf] %vm4448, %v4333
  %4488 = vst.msk [vmem:[#allocation2 + $0x9c] sm:$0xf] %vm4448, %v4335
  %4489 = vst.msk [vmem:[#allocation2 + $0xa0] sm:$0xf] %vm4448, %v4337
  %4490 = vst.msk [vmem:[#allocation2 + $0xa4] sm:$0xf] %vm4448, %v4339
  %4491 = vst.msk [vmem:[#allocation2 + $0xa8] sm:$0xf] %vm4448, %v4341
  %4492 = vst.msk [vmem:[#allocation2 + $0xac] sm:$0xf] %vm4448, %v4343
  %4493 = vst.msk [vmem:[#allocation2 + $0xb0] sm:$0xf] %vm4448, %v4345
  %4494 = vst.msk [vmem:[#allocation2 + $0xb4] sm:$0xf] %vm4448, %v4347
  %4495 = vst.msk [vmem:[#allocation2 + $0xb8] sm:$0xf] %vm4448, %v4349
  %4496 = vst.msk [vmem:[#allocation2 + $0xbc] sm:$0xf] %vm4448, %v4351
  %4497 = vst.msk [vmem:[#allocation2 + $0xc0] sm:$0xf] %vm4448, %v4353
  %4498 = vst.msk [vmem:[#allocation2 + $0xc4] sm:$0xf] %vm4448, %v4355
  %4499 = vst.msk [vmem:[#allocation2 + $0xc8] sm:$0xf] %vm4448, %v4357
  %4500 = vst.msk [vmem:[#allocation2 + $0xcc] sm:$0xf] %vm4448, %v4359
  %4501 = vst.msk [vmem:[#allocation2 + $0xd0] sm:$0xf] %vm4448, %v4361
  %4502 = vst.msk [vmem:[#allocation2 + $0xd4] sm:$0xf] %vm4448, %v4363
  %4503 = vst.msk [vmem:[#allocation2 + $0xd8] sm:$0xf] %vm4448, %v4365
  %4504 = vst.msk [vmem:[#allocation2 + $0xdc] sm:$0xf] %vm4448, %v4367
  %4505 = vst.msk [vmem:[#allocation2 + $0xe0] sm:$0xf] %vm4448, %v4369
  %4506 = vst.msk [vmem:[#allocation2 + $0xe4] sm:$0xf] %vm4448, %v4371
  %4507 = vst.msk [vmem:[#allocation2 + $0xe8] sm:$0xf] %vm4448, %v4373
  %4508 = vst.msk [vmem:[#allocation2 + $0xec] sm:$0xf] %vm4448, %v4375
  %4509 = vst.msk [vmem:[#allocation2 + $0xf0] sm:$0xf] %vm4448, %v4377
  %4510 = vst.msk [vmem:[#allocation2 + $0xf4] sm:$0xf] %vm4448, %v4379
  %4511 = vst.msk [vmem:[#allocation2 + $0xf8] sm:$0xf] %vm4448, %v4381
  %4512 = vst.msk [vmem:[#allocation2 + $0xfc] sm:$0xf] %vm4448, %v4383
  %v4513 = vld [vmem:[%s4127] sm:$0xf]
  %v4514 = vld [vmem:[%s4127 + $0x4] sm:$0xf]
  %v4515 = vld [vmem:[%s4127 + $0x8] sm:$0x1]
  %v4516 = vld [vmem:[%s4127 + $0xc] sm:$0xf]
  %v4517 = vld [vmem:[%s4127 + $0x10] sm:$0xf]
  %v4518 = vld [vmem:[%s4127 + $0x14] sm:$0x1]
  %v4519 = vld [vmem:[%s4127 + $0x18] sm:$0xf]
  %v4520 = vld [vmem:[%s4127 + $0x1c] sm:$0xf]
  %v4521 = vld [vmem:[%s4127 + $0x20] sm:$0x1]
  %v4522 = vld [vmem:[%s4127 + $0x24] sm:$0xf]
  %v4523 = vld [vmem:[%s4127 + $0x28] sm:$0xf]
  %v4524 = vld [vmem:[%s4127 + $0x2c] sm:$0x1]
  %v4525 = vld [vmem:[%s4127 + $0x30] sm:$0xf]
  %v4526 = vld [vmem:[%s4127 + $0x34] sm:$0xf]
  %v4527 = vld [vmem:[%s4127 + $0x38] sm:$0x1]
  %v4528 = vld [vmem:[%s4127 + $0x3c] sm:$0xf]
  %v4529 = vld [vmem:[%s4127 + $0x40] sm:$0xf]
  %v4530 = vld [vmem:[%s4127 + $0x44] sm:$0x1]
  %v4531 = vld [vmem:[%s4127 + $0x48] sm:$0xf]
  %v4532 = vld [vmem:[%s4127 + $0x4c] sm:$0xf]
  %v4533 = vld [vmem:[%s4127 + $0x50] sm:$0x1]
  %v4534 = vld [vmem:[%s4127 + $0x54] sm:$0xf]
  %v4535 = vld [vmem:[%s4127 + $0x58] sm:$0xf]
  %v4536 = vld [vmem:[%s4127 + $0x5c] sm:$0x1]
  %v4537 = vld [vmem:[%s4127 + $0x60] sm:$0xf]
  %v4538 = vld [vmem:[%s4127 + $0x64] sm:$0xf]
  %v4539 = vld [vmem:[%s4127 + $0x68] sm:$0x1]
  %v4540 = vld [vmem:[%s4127 + $0x6c] sm:$0xf]
  %v4541 = vld [vmem:[%s4127 + $0x70] sm:$0xf]
  %v4542 = vld [vmem:[%s4127 + $0x74] sm:$0x1]
  %v4543 = vld [vmem:[%s4127 + $0x78] sm:$0xf]
  %v4544 = vld [vmem:[%s4127 + $0x7c] sm:$0xf]
  %v4545 = vld [vmem:[%s4127 + $0x80] sm:$0x1]
  %v4546 = vld [vmem:[%s4127 + $0x84] sm:$0xf]
  %v4547 = vld [vmem:[%s4127 + $0x88] sm:$0xf]
  %v4548 = vld [vmem:[%s4127 + $0x8c] sm:$0x1]
  %v4549 = vld [vmem:[%s4127 + $0x90] sm:$0xf]
  %v4550 = vld [vmem:[%s4127 + $0x94] sm:$0xf]
  %v4551 = vld [vmem:[%s4127 + $0x98] sm:$0x1]
  %v4552 = vld [vmem:[%s4127 + $0x9c] sm:$0xf]
  %v4553 = vld [vmem:[%s4127 + $0xa0] sm:$0xf]
  %v4554 = vld [vmem:[%s4127 + $0xa4] sm:$0x1]
  %v4555 = vld [vmem:[%s4127 + $0xa8] sm:$0xf]
  %v4556 = vld [vmem:[%s4127 + $0xac] sm:$0xf]
  %v4557 = vld [vmem:[%s4127 + $0xb0] sm:$0x1]
  %v4558 = vld [vmem:[%s4127 + $0xb4] sm:$0xf]
  %v4559 = vld [vmem:[%s4127 + $0xb8] sm:$0xf]
  %v4560 = vld [vmem:[%s4127 + $0xbc] sm:$0x1]
  %v4561 = vld [vmem:[%s4127 + $0xd8] sm:$0xf]
  %v4562 = vld [vmem:[%s4127 + $0xdc] sm:$0xf]
  %v4563 = vld [vmem:[%s4127 + $0xe0] sm:$0x1]
  %v4564 = vld [vmem:[%s4127 + $0xe4] sm:$0xf]
  %v4565 = vld [vmem:[%s4127 + $0xe8] sm:$0xf]
  %v4566 = vld [vmem:[%s4127 + $0xec] sm:$0x1]
  %v4567 = vld [vmem:[%s4127 + $0xf0] sm:$0xf]
  %v4568 = vld [vmem:[%s4127 + $0xf4] sm:$0xf]
  %v4569 = vld [vmem:[%s4127 + $0xf8] sm:$0x1]
  %v4570 = vld [vmem:[%s4127 + $0xfc] sm:$0xf]
  %v4571 = vld [vmem:[%s4127 + $0x100] sm:$0xf]
  %v4572 = vld [vmem:[%s4127 + $0x104] sm:$0x1]
  %v4573 = vld [vmem:[%s4127 + $0x108] sm:$0xf]
  %v4574 = vld [vmem:[%s4127 + $0x10c] sm:$0xf]
  %v4575 = vld [vmem:[%s4127 + $0x110] sm:$0x1]
  %v4576 = vld [vmem:[%s4127 + $0x114] sm:$0xf]
  %v4577 = vld [vmem:[%s4127 + $0x118] sm:$0xf]
  %v4578 = vld [vmem:[%s4127 + $0x11c] sm:$0x1]
  %v4579 = vld [vmem:[%s4127 + $0x120] sm:$0xf]
  %v4580 = vld [vmem:[%s4127 + $0x124] sm:$0xf]
  %v4581 = vld [vmem:[%s4127 + $0x128] sm:$0x1]
  %v4582 = vld [vmem:[%s4127 + $0x12c] sm:$0xf]
  %v4583 = vld [vmem:[%s4127 + $0x130] sm:$0xf]
  %v4584 = vld [vmem:[%s4127 + $0x134] sm:$0x1]
  %v4585 = vld [vmem:[%s4127 + $0x138] sm:$0xf]
  %v4586 = vld [vmem:[%s4127 + $0x13c] sm:$0xf]
  %v4587 = vld [vmem:[%s4127 + $0x140] sm:$0x1]
  %v4588 = vld [vmem:[%s4127 + $0x144] sm:$0xf]
  %v4589 = vld [vmem:[%s4127 + $0x148] sm:$0xf]
  %v4590 = vld [vmem:[%s4127 + $0x14c] sm:$0x1]
  %v4591 = vld [vmem:[%s4127 + $0x150] sm:$0xf]
  %v4592 = vld [vmem:[%s4127 + $0x154] sm:$0xf]
  %v4593 = vld [vmem:[%s4127 + $0x158] sm:$0x1]
  %v4594 = vld [vmem:[%s4127 + $0x15c] sm:$0xf]
  %v4595 = vld [vmem:[%s4127 + $0x160] sm:$0xf]
  %v4596 = vld [vmem:[%s4127 + $0x164] sm:$0x1]
  %v4597 = vld [vmem:[%s4127 + $0x168] sm:$0xf]
  %v4598 = vld [vmem:[%s4127 + $0x16c] sm:$0xf]
  %v4599 = vld [vmem:[%s4127 + $0x170] sm:$0x1]
  %v4600 = vld [vmem:[%s4127 + $0x174] sm:$0xf]
  %v4601 = vld [vmem:[%s4127 + $0x178] sm:$0xf]
  %v4602 = vld [vmem:[%s4127 + $0x17c] sm:$0x1]
  %v4603 = vld [vmem:[%s4127 + $0x180] sm:$0xf]
  %v4604 = vld [vmem:[%s4127 + $0x184] sm:$0xf]
  %v4605 = vld [vmem:[%s4127 + $0x188] sm:$0x1]
  %v4606 = vld [vmem:[%s4127 + $0x18c] sm:$0xf]
  %v4607 = vld [vmem:[%s4127 + $0x190] sm:$0xf]
  %v4608 = vld [vmem:[%s4127 + $0x194] sm:$0x1]
  %v4610 = vshrl.u32 %v4513, 16
  %v4612 = vrot.slane %v4610, 4
  %v4613 = vshll.u32 %v4513, 16
  %v4615 = vrot.slane %v4613, 5
  %v4616 = vor.u32 %v4612, %v4615
  %v4617 = vrot.slane %v4616, 4
  %v4619 = vshll.u32 %v4514, 16
  %v4621 = vrot.slane %v4619, 5
  %v4622 = vsel %vm245, %v4617, %v4621
  %v4623 = vshrl.u32 %v4514, 16
  %v4625 = vrot.slane %v4623, 4
  %v4626 = vor.u32 %v4625, %v4621
  %v4627 = vrot.slane %v4626, 4
  %v4629 = vshll.u32 %v4515, 16
  %v4631 = vrot.slane %v4629, 5
  %v4632 = vsel %vm245, %v4627, %v4631
  %v4634 = vshrl.u32 %v4516, 16
  %v4636 = vrot.slane %v4634, 4
  %v4637 = vshll.u32 %v4516, 16
  %v4639 = vrot.slane %v4637, 5
  %v4640 = vor.u32 %v4636, %v4639
  %v4641 = vrot.slane %v4640, 4
  %v4643 = vshll.u32 %v4517, 16
  %v4645 = vrot.slane %v4643, 5
  %v4646 = vsel %vm245, %v4641, %v4645
  %v4647 = vshrl.u32 %v4517, 16
  %v4649 = vrot.slane %v4647, 4
  %v4650 = vor.u32 %v4649, %v4645
  %v4651 = vrot.slane %v4650, 4
  %v4653 = vshll.u32 %v4518, 16
  %v4655 = vrot.slane %v4653, 5
  %v4656 = vsel %vm245, %v4651, %v4655
  %v4658 = vshrl.u32 %v4519, 16
  %v4660 = vrot.slane %v4658, 4
  %v4661 = vshll.u32 %v4519, 16
  %v4663 = vrot.slane %v4661, 5
  %v4664 = vor.u32 %v4660, %v4663
  %v4665 = vrot.slane %v4664, 4
  %v4667 = vshll.u32 %v4520, 16
  %v4669 = vrot.slane %v4667, 5
  %v4670 = vsel %vm245, %v4665, %v4669
  %v4671 = vshrl.u32 %v4520, 16
  %v4673 = vrot.slane %v4671, 4
  %v4674 = vor.u32 %v4673, %v4669
  %v4675 = vrot.slane %v4674, 4
  %v4677 = vshll.u32 %v4521, 16
  %v4679 = vrot.slane %v4677, 5
  %v4680 = vsel %vm245, %v4675, %v4679
  %v4682 = vshrl.u32 %v4522, 16
  %v4684 = vrot.slane %v4682, 4
  %v4685 = vshll.u32 %v4522, 16
  %v4687 = vrot.slane %v4685, 5
  %v4688 = vor.u32 %v4684, %v4687
  %v4689 = vrot.slane %v4688, 4
  %v4691 = vshll.u32 %v4523, 16
  %v4693 = vrot.slane %v4691, 5
  %v4694 = vsel %vm245, %v4689, %v4693
  %v4695 = vshrl.u32 %v4523, 16
  %v4697 = vrot.slane %v4695, 4
  %v4698 = vor.u32 %v4697, %v4693
  %v4699 = vrot.slane %v4698, 4
  %v4701 = vshll.u32 %v4524, 16
  %v4703 = vrot.slane %v4701, 5
  %v4704 = vsel %vm245, %v4699, %v4703
  %v4706 = vshrl.u32 %v4525, 16
  %v4708 = vrot.slane %v4706, 4
  %v4709 = vshll.u32 %v4525, 16
  %v4711 = vrot.slane %v4709, 5
  %v4712 = vor.u32 %v4708, %v4711
  %v4713 = vrot.slane %v4712, 4
  %v4715 = vshll.u32 %v4526, 16
  %v4717 = vrot.slane %v4715, 5
  %v4718 = vsel %vm245, %v4713, %v4717
  %v4719 = vshrl.u32 %v4526, 16
  %v4721 = vrot.slane %v4719, 4
  %v4722 = vor.u32 %v4721, %v4717
  %v4723 = vrot.slane %v4722, 4
  %v4725 = vshll.u32 %v4527, 16
  %v4727 = vrot.slane %v4725, 5
  %v4728 = vsel %vm245, %v4723, %v4727
  %v4730 = vshrl.u32 %v4528, 16
  %v4732 = vrot.slane %v4730, 4
  %v4733 = vshll.u32 %v4528, 16
  %v4735 = vrot.slane %v4733, 5
  %v4736 = vor.u32 %v4732, %v4735
  %v4737 = vrot.slane %v4736, 4
  %v4739 = vshll.u32 %v4529, 16
  %v4741 = vrot.slane %v4739, 5
  %v4742 = vsel %vm245, %v4737, %v4741
  %v4743 = vshrl.u32 %v4529, 16
  %v4745 = vrot.slane %v4743, 4
  %v4746 = vor.u32 %v4745, %v4741
  %v4747 = vrot.slane %v4746, 4
  %v4749 = vshll.u32 %v4530, 16
  %v4751 = vrot.slane %v4749, 5
  %v4752 = vsel %vm245, %v4747, %v4751
  %v4754 = vshrl.u32 %v4531, 16
  %v4756 = vrot.slane %v4754, 4
  %v4757 = vshll.u32 %v4531, 16
  %v4759 = vrot.slane %v4757, 5
  %v4760 = vor.u32 %v4756, %v4759
  %v4761 = vrot.slane %v4760, 4
  %v4763 = vshll.u32 %v4532, 16
  %v4765 = vrot.slane %v4763, 5
  %v4766 = vsel %vm245, %v4761, %v4765
  %v4767 = vshrl.u32 %v4532, 16
  %v4769 = vrot.slane %v4767, 4
  %v4770 = vor.u32 %v4769, %v4765
  %v4771 = vrot.slane %v4770, 4
  %v4773 = vshll.u32 %v4533, 16
  %v4775 = vrot.slane %v4773, 5
  %v4776 = vsel %vm245, %v4771, %v4775
  %v4778 = vshrl.u32 %v4534, 16
  %v4780 = vrot.slane %v4778, 4
  %v4781 = vshll.u32 %v4534, 16
  %v4783 = vrot.slane %v4781, 5
  %v4784 = vor.u32 %v4780, %v4783
  %v4785 = vrot.slane %v4784, 4
  %v4787 = vshll.u32 %v4535, 16
  %v4789 = vrot.slane %v4787, 5
  %v4790 = vsel %vm245, %v4785, %v4789
  %v4791 = vshrl.u32 %v4535, 16
  %v4793 = vrot.slane %v4791, 4
  %v4794 = vor.u32 %v4793, %v4789
  %v4795 = vrot.slane %v4794, 4
  %v4797 = vshll.u32 %v4536, 16
  %v4799 = vrot.slane %v4797, 5
  %v4800 = vsel %vm245, %v4795, %v4799
  %v4802 = vshrl.u32 %v4537, 16
  %v4804 = vrot.slane %v4802, 4
  %v4805 = vshll.u32 %v4537, 16
  %v4807 = vrot.slane %v4805, 5
  %v4808 = vor.u32 %v4804, %v4807
  %v4809 = vrot.slane %v4808, 4
  %v4811 = vshll.u32 %v4538, 16
  %v4813 = vrot.slane %v4811, 5
  %v4814 = vsel %vm245, %v4809, %v4813
  %v4815 = vshrl.u32 %v4538, 16
  %v4817 = vrot.slane %v4815, 4
  %v4818 = vor.u32 %v4817, %v4813
  %v4819 = vrot.slane %v4818, 4
  %v4821 = vshll.u32 %v4539, 16
  %v4823 = vrot.slane %v4821, 5
  %v4824 = vsel %vm245, %v4819, %v4823
  %v4826 = vshrl.u32 %v4540, 16
  %v4828 = vrot.slane %v4826, 4
  %v4829 = vshll.u32 %v4540, 16
  %v4831 = vrot.slane %v4829, 5
  %v4832 = vor.u32 %v4828, %v4831
  %v4833 = vrot.slane %v4832, 4
  %v4835 = vshll.u32 %v4541, 16
  %v4837 = vrot.slane %v4835, 5
  %v4838 = vsel %vm245, %v4833, %v4837
  %v4839 = vshrl.u32 %v4541, 16
  %v4841 = vrot.slane %v4839, 4
  %v4842 = vor.u32 %v4841, %v4837
  %v4843 = vrot.slane %v4842, 4
  %v4845 = vshll.u32 %v4542, 16
  %v4847 = vrot.slane %v4845, 5
  %v4848 = vsel %vm245, %v4843, %v4847
  %v4850 = vshrl.u32 %v4543, 16
  %v4852 = vrot.slane %v4850, 4
  %v4853 = vshll.u32 %v4543, 16
  %v4855 = vrot.slane %v4853, 5
  %v4856 = vor.u32 %v4852, %v4855
  %v4857 = vrot.slane %v4856, 4
  %v4859 = vshll.u32 %v4544, 16
  %v4861 = vrot.slane %v4859, 5
  %v4862 = vsel %vm245, %v4857, %v4861
  %v4863 = vshrl.u32 %v4544, 16
  %v4865 = vrot.slane %v4863, 4
  %v4866 = vor.u32 %v4865, %v4861
  %v4867 = vrot.slane %v4866, 4
  %v4869 = vshll.u32 %v4545, 16
  %v4871 = vrot.slane %v4869, 5
  %v4872 = vsel %vm245, %v4867, %v4871
  %v4874 = vshrl.u32 %v4546, 16
  %v4876 = vrot.slane %v4874, 4
  %v4877 = vshll.u32 %v4546, 16
  %v4879 = vrot.slane %v4877, 5
  %v4880 = vor.u32 %v4876, %v4879
  %v4881 = vrot.slane %v4880, 4
  %v4883 = vshll.u32 %v4547, 16
  %v4885 = vrot.slane %v4883, 5
  %v4886 = vsel %vm245, %v4881, %v4885
  %v4887 = vshrl.u32 %v4547, 16
  %v4889 = vrot.slane %v4887, 4
  %v4890 = vor.u32 %v4889, %v4885
  %v4891 = vrot.slane %v4890, 4
  %v4893 = vshll.u32 %v4548, 16
  %v4895 = vrot.slane %v4893, 5
  %v4896 = vsel %vm245, %v4891, %v4895
  %v4898 = vshrl.u32 %v4549, 16
  %v4900 = vrot.slane %v4898, 4
  %v4901 = vshll.u32 %v4549, 16
  %v4903 = vrot.slane %v4901, 5
  %v4904 = vor.u32 %v4900, %v4903
  %v4905 = vrot.slane %v4904, 4
  %v4907 = vshll.u32 %v4550, 16
  %v4909 = vrot.slane %v4907, 5
  %v4910 = vsel %vm245, %v4905, %v4909
  %v4911 = vshrl.u32 %v4550, 16
  %v4913 = vrot.slane %v4911, 4
  %v4914 = vor.u32 %v4913, %v4909
  %v4915 = vrot.slane %v4914, 4
  %v4917 = vshll.u32 %v4551, 16
  %v4919 = vrot.slane %v4917, 5
  %v4920 = vsel %vm245, %v4915, %v4919
  %v4922 = vshrl.u32 %v4552, 16
  %v4924 = vrot.slane %v4922, 4
  %v4925 = vshll.u32 %v4552, 16
  %v4927 = vrot.slane %v4925, 5
  %v4928 = vor.u32 %v4924, %v4927
  %v4929 = vrot.slane %v4928, 4
  %v4931 = vshll.u32 %v4553, 16
  %v4933 = vrot.slane %v4931, 5
  %v4934 = vsel %vm245, %v4929, %v4933
  %v4935 = vshrl.u32 %v4553, 16
  %v4937 = vrot.slane %v4935, 4
  %v4938 = vor.u32 %v4937, %v4933
  %v4939 = vrot.slane %v4938, 4
  %v4941 = vshll.u32 %v4554, 16
  %v4943 = vrot.slane %v4941, 5
  %v4944 = vsel %vm245, %v4939, %v4943
  %v4946 = vshrl.u32 %v4555, 16
  %v4948 = vrot.slane %v4946, 4
  %v4949 = vshll.u32 %v4555, 16
  %v4951 = vrot.slane %v4949, 5
  %v4952 = vor.u32 %v4948, %v4951
  %v4953 = vrot.slane %v4952, 4
  %v4955 = vshll.u32 %v4556, 16
  %v4957 = vrot.slane %v4955, 5
  %v4958 = vsel %vm245, %v4953, %v4957
  %v4959 = vshrl.u32 %v4556, 16
  %v4961 = vrot.slane %v4959, 4
  %v4962 = vor.u32 %v4961, %v4957
  %v4963 = vrot.slane %v4962, 4
  %v4965 = vshll.u32 %v4557, 16
  %v4967 = vrot.slane %v4965, 5
  %v4968 = vsel %vm245, %v4963, %v4967
  %v4970 = vshrl.u32 %v4558, 16
  %v4972 = vrot.slane %v4970, 4
  %v4973 = vshll.u32 %v4558, 16
  %v4975 = vrot.slane %v4973, 5
  %v4976 = vor.u32 %v4972, %v4975
  %v4977 = vrot.slane %v4976, 4
  %v4979 = vshll.u32 %v4559, 16
  %v4981 = vrot.slane %v4979, 5
  %v4982 = vsel %vm245, %v4977, %v4981
  %v4983 = vshrl.u32 %v4559, 16
  %v4985 = vrot.slane %v4983, 4
  %v4986 = vor.u32 %v4985, %v4981
  %v4987 = vrot.slane %v4986, 4
  %v4989 = vshll.u32 %v4560, 16
  %v4991 = vrot.slane %v4989, 5
  %v4992 = vsel %vm245, %v4987, %v4991
  %v4994 = vshrl.u32 %v4561, 16
  %v4996 = vrot.slane %v4994, 4
  %v4997 = vshll.u32 %v4561, 16
  %v4999 = vrot.slane %v4997, 5
  %v5000 = vor.u32 %v4996, %v4999
  %v5001 = vrot.slane %v5000, 4
  %v5003 = vshll.u32 %v4562, 16
  %v5005 = vrot.slane %v5003, 5
  %v5006 = vsel %vm245, %v5001, %v5005
  %v5007 = vshrl.u32 %v4562, 16
  %v5009 = vrot.slane %v5007, 4
  %v5010 = vor.u32 %v5009, %v5005
  %v5011 = vrot.slane %v5010, 4
  %v5013 = vshll.u32 %v4563, 16
  %v5015 = vrot.slane %v5013, 5
  %v5016 = vsel %vm245, %v5011, %v5015
  %v5018 = vshrl.u32 %v4564, 16
  %v5020 = vrot.slane %v5018, 4
  %v5021 = vshll.u32 %v4564, 16
  %v5023 = vrot.slane %v5021, 5
  %v5024 = vor.u32 %v5020, %v5023
  %v5025 = vrot.slane %v5024, 4
  %v5027 = vshll.u32 %v4565, 16
  %v5029 = vrot.slane %v5027, 5
  %v5030 = vsel %vm245, %v5025, %v5029
  %v5031 = vshrl.u32 %v4565, 16
  %v5033 = vrot.slane %v5031, 4
  %v5034 = vor.u32 %v5033, %v5029
  %v5035 = vrot.slane %v5034, 4
  %v5037 = vshll.u32 %v4566, 16
  %v5039 = vrot.slane %v5037, 5
  %v5040 = vsel %vm245, %v5035, %v5039
  %v5042 = vshrl.u32 %v4567, 16
  %v5044 = vrot.slane %v5042, 4
  %v5045 = vshll.u32 %v4567, 16
  %v5047 = vrot.slane %v5045, 5
  %v5048 = vor.u32 %v5044, %v5047
  %v5049 = vrot.slane %v5048, 4
  %v5051 = vshll.u32 %v4568, 16
  %v5053 = vrot.slane %v5051, 5
  %v5054 = vsel %vm245, %v5049, %v5053
  %v5055 = vshrl.u32 %v4568, 16
  %v5057 = vrot.slane %v5055, 4
  %v5058 = vor.u32 %v5057, %v5053
  %v5059 = vrot.slane %v5058, 4
  %v5061 = vshll.u32 %v4569, 16
  %v5063 = vrot.slane %v5061, 5
  %v5064 = vsel %vm245, %v5059, %v5063
  %v5066 = vshrl.u32 %v4570, 16
  %v5068 = vrot.slane %v5066, 4
  %v5069 = vshll.u32 %v4570, 16
  %v5071 = vrot.slane %v5069, 5
  %v5072 = vor.u32 %v5068, %v5071
  %v5073 = vrot.slane %v5072, 4
  %v5075 = vshll.u32 %v4571, 16
  %v5077 = vrot.slane %v5075, 5
  %v5078 = vsel %vm245, %v5073, %v5077
  %v5079 = vshrl.u32 %v4571, 16
  %v5081 = vrot.slane %v5079, 4
  %v5082 = vor.u32 %v5081, %v5077
  %v5083 = vrot.slane %v5082, 4
  %v5085 = vshll.u32 %v4572, 16
  %v5087 = vrot.slane %v5085, 5
  %v5088 = vsel %vm245, %v5083, %v5087
  %v5090 = vshrl.u32 %v4573, 16
  %v5092 = vrot.slane %v5090, 4
  %v5093 = vshll.u32 %v4573, 16
  %v5095 = vrot.slane %v5093, 5
  %v5096 = vor.u32 %v5092, %v5095
  %v5097 = vrot.slane %v5096, 4
  %v5099 = vshll.u32 %v4574, 16
  %v5101 = vrot.slane %v5099, 5
  %v5102 = vsel %vm245, %v5097, %v5101
  %v5103 = vshrl.u32 %v4574, 16
  %v5105 = vrot.slane %v5103, 4
  %v5106 = vor.u32 %v5105, %v5101
  %v5107 = vrot.slane %v5106, 4
  %v5109 = vshll.u32 %v4575, 16
  %v5111 = vrot.slane %v5109, 5
  %v5112 = vsel %vm245, %v5107, %v5111
  %v5114 = vshrl.u32 %v4576, 16
  %v5116 = vrot.slane %v5114, 4
  %v5117 = vshll.u32 %v4576, 16
  %v5119 = vrot.slane %v5117, 5
  %v5120 = vor.u32 %v5116, %v5119
  %v5121 = vrot.slane %v5120, 4
  %v5123 = vshll.u32 %v4577, 16
  %v5125 = vrot.slane %v5123, 5
  %v5126 = vsel %vm245, %v5121, %v5125
  %v5127 = vshrl.u32 %v4577, 16
  %v5129 = vrot.slane %v5127, 4
  %v5130 = vor.u32 %v5129, %v5125
  %v5131 = vrot.slane %v5130, 4
  %v5133 = vshll.u32 %v4578, 16
  %v5135 = vrot.slane %v5133, 5
  %v5136 = vsel %vm245, %v5131, %v5135
  %v5138 = vshrl.u32 %v4579, 16
  %v5140 = vrot.slane %v5138, 4
  %v5141 = vshll.u32 %v4579, 16
  %v5143 = vrot.slane %v5141, 5
  %v5144 = vor.u32 %v5140, %v5143
  %v5145 = vrot.slane %v5144, 4
  %v5147 = vshll.u32 %v4580, 16
  %v5149 = vrot.slane %v5147, 5
  %v5150 = vsel %vm245, %v5145, %v5149
  %v5151 = vshrl.u32 %v4580, 16
  %v5153 = vrot.slane %v5151, 4
  %v5154 = vor.u32 %v5153, %v5149
  %v5155 = vrot.slane %v5154, 4
  %v5157 = vshll.u32 %v4581, 16
  %v5159 = vrot.slane %v5157, 5
  %v5160 = vsel %vm245, %v5155, %v5159
  %v5162 = vshrl.u32 %v4582, 16
  %v5164 = vrot.slane %v5162, 4
  %v5165 = vshll.u32 %v4582, 16
  %v5167 = vrot.slane %v5165, 5
  %v5168 = vor.u32 %v5164, %v5167
  %v5169 = vrot.slane %v5168, 4
  %v5171 = vshll.u32 %v4583, 16
  %v5173 = vrot.slane %v5171, 5
  %v5174 = vsel %vm245, %v5169, %v5173
  %v5175 = vshrl.u32 %v4583, 16
  %v5177 = vrot.slane %v5175, 4
  %v5178 = vor.u32 %v5177, %v5173
  %v5179 = vrot.slane %v5178, 4
  %v5181 = vshll.u32 %v4584, 16
  %v5183 = vrot.slane %v5181, 5
  %v5184 = vsel %vm245, %v5179, %v5183
  %v5186 = vshrl.u32 %v4585, 16
  %v5188 = vrot.slane %v5186, 4
  %v5189 = vshll.u32 %v4585, 16
  %v5191 = vrot.slane %v5189, 5
  %v5192 = vor.u32 %v5188, %v5191
  %v5193 = vrot.slane %v5192, 4
  %v5195 = vshll.u32 %v4586, 16
  %v5197 = vrot.slane %v5195, 5
  %v5198 = vsel %vm245, %v5193, %v5197
  %v5199 = vshrl.u32 %v4586, 16
  %v5201 = vrot.slane %v5199, 4
  %v5202 = vor.u32 %v5201, %v5197
  %v5203 = vrot.slane %v5202, 4
  %v5205 = vshll.u32 %v4587, 16
  %v5207 = vrot.slane %v5205, 5
  %v5208 = vsel %vm245, %v5203, %v5207
  %v5210 = vshrl.u32 %v4588, 16
  %v5212 = vrot.slane %v5210, 4
  %v5213 = vshll.u32 %v4588, 16
  %v5215 = vrot.slane %v5213, 5
  %v5216 = vor.u32 %v5212, %v5215
  %v5217 = vrot.slane %v5216, 4
  %v5219 = vshll.u32 %v4589, 16
  %v5221 = vrot.slane %v5219, 5
  %v5222 = vsel %vm245, %v5217, %v5221
  %v5223 = vshrl.u32 %v4589, 16
  %v5225 = vrot.slane %v5223, 4
  %v5226 = vor.u32 %v5225, %v5221
  %v5227 = vrot.slane %v5226, 4
  %v5229 = vshll.u32 %v4590, 16
  %v5231 = vrot.slane %v5229, 5
  %v5232 = vsel %vm245, %v5227, %v5231
  %v5234 = vshrl.u32 %v4591, 16
  %v5236 = vrot.slane %v5234, 4
  %v5237 = vshll.u32 %v4591, 16
  %v5239 = vrot.slane %v5237, 5
  %v5240 = vor.u32 %v5236, %v5239
  %v5241 = vrot.slane %v5240, 4
  %v5243 = vshll.u32 %v4592, 16
  %v5245 = vrot.slane %v5243, 5
  %v5246 = vsel %vm245, %v5241, %v5245
  %v5247 = vshrl.u32 %v4592, 16
  %v5249 = vrot.slane %v5247, 4
  %v5250 = vor.u32 %v5249, %v5245
  %v5251 = vrot.slane %v5250, 4
  %v5253 = vshll.u32 %v4593, 16
  %v5255 = vrot.slane %v5253, 5
  %v5256 = vsel %vm245, %v5251, %v5255
  %v5258 = vshrl.u32 %v4594, 16
  %v5260 = vrot.slane %v5258, 4
  %v5261 = vshll.u32 %v4594, 16
  %v5263 = vrot.slane %v5261, 5
  %v5264 = vor.u32 %v5260, %v5263
  %v5265 = vrot.slane %v5264, 4
  %v5267 = vshll.u32 %v4595, 16
  %v5269 = vrot.slane %v5267, 5
  %v5270 = vsel %vm245, %v5265, %v5269
  %v5271 = vshrl.u32 %v4595, 16
  %v5273 = vrot.slane %v5271, 4
  %v5274 = vor.u32 %v5273, %v5269
  %v5275 = vrot.slane %v5274, 4
  %v5277 = vshll.u32 %v4596, 16
  %v5279 = vrot.slane %v5277, 5
  %v5280 = vsel %vm245, %v5275, %v5279
  %v5282 = vshrl.u32 %v4597, 16
  %v5284 = vrot.slane %v5282, 4
  %v5285 = vshll.u32 %v4597, 16
  %v5287 = vrot.slane %v5285, 5
  %v5288 = vor.u32 %v5284, %v5287
  %v5289 = vrot.slane %v5288, 4
  %v5291 = vshll.u32 %v4598, 16
  %v5293 = vrot.slane %v5291, 5
  %v5294 = vsel %vm245, %v5289, %v5293
  %v5295 = vshrl.u32 %v4598, 16
  %v5297 = vrot.slane %v5295, 4
  %v5298 = vor.u32 %v5297, %v5293
  %v5299 = vrot.slane %v5298, 4
  %v5301 = vshll.u32 %v4599, 16
  %v5303 = vrot.slane %v5301, 5
  %v5304 = vsel %vm245, %v5299, %v5303
  %v5306 = vshrl.u32 %v4600, 16
  %v5308 = vrot.slane %v5306, 4
  %v5309 = vshll.u32 %v4600, 16
  %v5311 = vrot.slane %v5309, 5
  %v5312 = vor.u32 %v5308, %v5311
  %v5313 = vrot.slane %v5312, 4
  %v5315 = vshll.u32 %v4601, 16
  %v5317 = vrot.slane %v5315, 5
  %v5318 = vsel %vm245, %v5313, %v5317
  %v5319 = vshrl.u32 %v4601, 16
  %v5321 = vrot.slane %v5319, 4
  %v5322 = vor.u32 %v5321, %v5317
  %v5323 = vrot.slane %v5322, 4
  %v5325 = vshll.u32 %v4602, 16
  %v5327 = vrot.slane %v5325, 5
  %v5328 = vsel %vm245, %v5323, %v5327
  %v5330 = vshrl.u32 %v4603, 16
  %v5332 = vrot.slane %v5330, 4
  %v5333 = vshll.u32 %v4603, 16
  %v5335 = vrot.slane %v5333, 5
  %v5336 = vor.u32 %v5332, %v5335
  %v5337 = vrot.slane %v5336, 4
  %v5339 = vshll.u32 %v4604, 16
  %v5341 = vrot.slane %v5339, 5
  %v5342 = vsel %vm245, %v5337, %v5341
  %v5343 = vshrl.u32 %v4604, 16
  %v5345 = vrot.slane %v5343, 4
  %v5346 = vor.u32 %v5345, %v5341
  %v5347 = vrot.slane %v5346, 4
  %v5349 = vshll.u32 %v4605, 16
  %v5351 = vrot.slane %v5349, 5
  %v5352 = vsel %vm245, %v5347, %v5351
  %v5354 = vshrl.u32 %v4606, 16
  %v5356 = vrot.slane %v5354, 4
  %v5357 = vshll.u32 %v4606, 16
  %v5359 = vrot.slane %v5357, 5
  %v5360 = vor.u32 %v5356, %v5359
  %v5361 = vrot.slane %v5360, 4
  %v5363 = vshll.u32 %v4607, 16
  %v5365 = vrot.slane %v5363, 5
  %v5366 = vsel %vm245, %v5361, %v5365
  %v5367 = vshrl.u32 %v4607, 16
  %v5369 = vrot.slane %v5367, 4
  %v5370 = vor.u32 %v5369, %v5365
  %v5371 = vrot.slane %v5370, 4
  %v5373 = vshll.u32 %v4608, 16
  %v5375 = vrot.slane %v5373, 5
  %v5376 = vsel %vm245, %v5371, %v5375
  %5377 = vrot.lane.b32.xlu0 %v4622, 28
  %v5378 = vpop.permute.xlu0 %5377
  %5379 = vrot.lane.b32.xlu0 %v4632, 28
  %v5380 = vpop.permute.xlu0 %5379
  %5381 = vrot.lane.b32.xlu0 %v4646, 28
  %v5382 = vpop.permute.xlu0 %5381
  %5383 = vrot.lane.b32.xlu0 %v4656, 28
  %v5384 = vpop.permute.xlu0 %5383
  %5385 = vrot.lane.b32.xlu0 %v4670, 28
  %v5386 = vpop.permute.xlu0 %5385
  %5387 = vrot.lane.b32.xlu0 %v4680, 28
  %v5388 = vpop.permute.xlu0 %5387
  %5389 = vrot.lane.b32.xlu0 %v4694, 28
  %v5390 = vpop.permute.xlu0 %5389
  %5391 = vrot.lane.b32.xlu0 %v4704, 28
  %v5392 = vpop.permute.xlu0 %5391
  %5393 = vrot.lane.b32.xlu0 %v4718, 28
  %v5394 = vpop.permute.xlu0 %5393
  %5395 = vrot.lane.b32.xlu0 %v4728, 28
  %v5396 = vpop.permute.xlu0 %5395
  %5397 = vrot.lane.b32.xlu0 %v4742, 28
  %v5398 = vpop.permute.xlu0 %5397
  %5399 = vrot.lane.b32.xlu0 %v4752, 28
  %v5400 = vpop.permute.xlu0 %5399
  %5401 = vrot.lane.b32.xlu0 %v4766, 28
  %v5402 = vpop.permute.xlu0 %5401
  %5403 = vrot.lane.b32.xlu0 %v4776, 28
  %v5404 = vpop.permute.xlu0 %5403
  %5405 = vrot.lane.b32.xlu0 %v4790, 28
  %v5406 = vpop.permute.xlu0 %5405
  %5407 = vrot.lane.b32.xlu0 %v4800, 28
  %v5408 = vpop.permute.xlu0 %5407
  %5409 = vrot.lane.b32.xlu0 %v4814, 28
  %v5410 = vpop.permute.xlu0 %5409
  %5411 = vrot.lane.b32.xlu0 %v4824, 28
  %v5412 = vpop.permute.xlu0 %5411
  %5413 = vrot.lane.b32.xlu0 %v4838, 28
  %v5414 = vpop.permute.xlu0 %5413
  %5415 = vrot.lane.b32.xlu0 %v4848, 28
  %v5416 = vpop.permute.xlu0 %5415
  %5417 = vrot.lane.b32.xlu0 %v4862, 28
  %v5418 = vpop.permute.xlu0 %5417
  %5419 = vrot.lane.b32.xlu0 %v4872, 28
  %v5420 = vpop.permute.xlu0 %5419
  %5421 = vrot.lane.b32.xlu0 %v4886, 28
  %v5422 = vpop.permute.xlu0 %5421
  %5423 = vrot.lane.b32.xlu0 %v4896, 28
  %v5424 = vpop.permute.xlu0 %5423
  %5425 = vrot.lane.b32.xlu0 %v4910, 28
  %v5426 = vpop.permute.xlu0 %5425
  %5427 = vrot.lane.b32.xlu0 %v4920, 28
  %v5428 = vpop.permute.xlu0 %5427
  %5429 = vrot.lane.b32.xlu0 %v4934, 28
  %v5430 = vpop.permute.xlu0 %5429
  %5431 = vrot.lane.b32.xlu0 %v4944, 28
  %v5432 = vpop.permute.xlu0 %5431
  %5433 = vrot.lane.b32.xlu0 %v4958, 28
  %v5434 = vpop.permute.xlu0 %5433
  %5435 = vrot.lane.b32.xlu0 %v4968, 28
  %v5436 = vpop.permute.xlu0 %5435
  %5437 = vrot.lane.b32.xlu0 %v4982, 28
  %v5438 = vpop.permute.xlu0 %5437
  %5439 = vrot.lane.b32.xlu0 %v4992, 28
  %v5440 = vpop.permute.xlu0 %5439
  %5441 = vrot.lane.b32.xlu0 %v5006, 28
  %v5442 = vpop.permute.xlu0 %5441
  %5443 = vrot.lane.b32.xlu0 %v5016, 28
  %v5444 = vpop.permute.xlu0 %5443
  %5445 = vrot.lane.b32.xlu0 %v5030, 28
  %v5446 = vpop.permute.xlu0 %5445
  %5447 = vrot.lane.b32.xlu0 %v5040, 28
  %v5448 = vpop.permute.xlu0 %5447
  %5449 = vrot.lane.b32.xlu0 %v5054, 28
  %v5450 = vpop.permute.xlu0 %5449
  %5451 = vrot.lane.b32.xlu0 %v5064, 28
  %v5452 = vpop.permute.xlu0 %5451
  %5453 = vrot.lane.b32.xlu0 %v5078, 28
  %v5454 = vpop.permute.xlu0 %5453
  %5455 = vrot.lane.b32.xlu0 %v5088, 28
  %v5456 = vpop.permute.xlu0 %5455
  %5457 = vrot.lane.b32.xlu0 %v5102, 28
  %v5458 = vpop.permute.xlu0 %5457
  %5459 = vrot.lane.b32.xlu0 %v5112, 28
  %v5460 = vpop.permute.xlu0 %5459
  %5461 = vrot.lane.b32.xlu0 %v5126, 28
  %v5462 = vpop.permute.xlu0 %5461
  %5463 = vrot.lane.b32.xlu0 %v5136, 28
  %v5464 = vpop.permute.xlu0 %5463
  %5465 = vrot.lane.b32.xlu0 %v5150, 28
  %v5466 = vpop.permute.xlu0 %5465
  %5467 = vrot.lane.b32.xlu0 %v5160, 28
  %v5468 = vpop.permute.xlu0 %5467
  %5469 = vrot.lane.b32.xlu0 %v5174, 28
  %v5470 = vpop.permute.xlu0 %5469
  %5471 = vrot.lane.b32.xlu0 %v5184, 28
  %v5472 = vpop.permute.xlu0 %5471
  %5473 = vrot.lane.b32.xlu0 %v5198, 28
  %v5474 = vpop.permute.xlu0 %5473
  %5475 = vrot.lane.b32.xlu0 %v5208, 28
  %v5476 = vpop.permute.xlu0 %5475
  %5477 = vrot.lane.b32.xlu0 %v5222, 28
  %v5478 = vpop.permute.xlu0 %5477
  %5479 = vrot.lane.b32.xlu0 %v5232, 28
  %v5480 = vpop.permute.xlu0 %5479
  %5481 = vrot.lane.b32.xlu0 %v5246, 28
  %v5482 = vpop.permute.xlu0 %5481
  %5483 = vrot.lane.b32.xlu0 %v5256, 28
  %v5484 = vpop.permute.xlu0 %5483
  %5485 = vrot.lane.b32.xlu0 %v5270, 28
  %v5486 = vpop.permute.xlu0 %5485
  %5487 = vrot.lane.b32.xlu0 %v5280, 28
  %v5488 = vpop.permute.xlu0 %5487
  %5489 = vrot.lane.b32.xlu0 %v5294, 28
  %v5490 = vpop.permute.xlu0 %5489
  %5491 = vrot.lane.b32.xlu0 %v5304, 28
  %v5492 = vpop.permute.xlu0 %5491
  %5493 = vrot.lane.b32.xlu0 %v5318, 28
  %v5494 = vpop.permute.xlu0 %5493
  %5495 = vrot.lane.b32.xlu0 %v5328, 28
  %v5496 = vpop.permute.xlu0 %5495
  %5497 = vrot.lane.b32.xlu0 %v5342, 28
  %v5498 = vpop.permute.xlu0 %5497
  %5499 = vrot.lane.b32.xlu0 %v5352, 28
  %v5500 = vpop.permute.xlu0 %5499
  %5501 = vrot.lane.b32.xlu0 %v5366, 28
  %v5502 = vpop.permute.xlu0 %5501
  %5503 = vrot.lane.b32.xlu0 %v5376, 28
  %v5504 = vpop.permute.xlu0 %5503
  %vm5569 = vcmask 257248
  %5570 = vst.msk [vmem:[#allocation2] sm:$0xf] %vm5569, %v5378
  %5571 = vst.msk [vmem:[#allocation2 + $0x4] sm:$0xf] %vm5569, %v5380
  %5572 = vst.msk [vmem:[#allocation2 + $0x8] sm:$0xf] %vm5569, %v5382
  %5573 = vst.msk [vmem:[#allocation2 + $0xc] sm:$0xf] %vm5569, %v5384
  %5574 = vst.msk [vmem:[#allocation2 + $0x10] sm:$0xf] %vm5569, %v5386
  %5575 = vst.msk [vmem:[#allocation2 + $0x14] sm:$0xf] %vm5569, %v5388
  %5576 = vst.msk [vmem:[#allocation2 + $0x18] sm:$0xf] %vm5569, %v5390
  %5577 = vst.msk [vmem:[#allocation2 + $0x1c] sm:$0xf] %vm5569, %v5392
  %5578 = vst.msk [vmem:[#allocation2 + $0x20] sm:$0xf] %vm5569, %v5394
  %5579 = vst.msk [vmem:[#allocation2 + $0x24] sm:$0xf] %vm5569, %v5396
  %5580 = vst.msk [vmem:[#allocation2 + $0x28] sm:$0xf] %vm5569, %v5398
  %5581 = vst.msk [vmem:[#allocation2 + $0x2c] sm:$0xf] %vm5569, %v5400
  %5582 = vst.msk [vmem:[#allocation2 + $0x30] sm:$0xf] %vm5569, %v5402
  %5583 = vst.msk [vmem:[#allocation2 + $0x34] sm:$0xf] %vm5569, %v5404
  %5584 = vst.msk [vmem:[#allocation2 + $0x38] sm:$0xf] %vm5569, %v5406
  %5585 = vst.msk [vmem:[#allocation2 + $0x3c] sm:$0xf] %vm5569, %v5408
  %5586 = vst.msk [vmem:[#allocation2 + $0x40] sm:$0xf] %vm5569, %v5410
  %5587 = vst.msk [vmem:[#allocation2 + $0x44] sm:$0xf] %vm5569, %v5412
  %5588 = vst.msk [vmem:[#allocation2 + $0x48] sm:$0xf] %vm5569, %v5414
  %5589 = vst.msk [vmem:[#allocation2 + $0x4c] sm:$0xf] %vm5569, %v5416
  %5590 = vst.msk [vmem:[#allocation2 + $0x50] sm:$0xf] %vm5569, %v5418
  %5591 = vst.msk [vmem:[#allocation2 + $0x54] sm:$0xf] %vm5569, %v5420
  %5592 = vst.msk [vmem:[#allocation2 + $0x58] sm:$0xf] %vm5569, %v5422
  %5593 = vst.msk [vmem:[#allocation2 + $0x5c] sm:$0xf] %vm5569, %v5424
  %5594 = vst.msk [vmem:[#allocation2 + $0x60] sm:$0xf] %vm5569, %v5426
  %5595 = vst.msk [vmem:[#allocation2 + $0x64] sm:$0xf] %vm5569, %v5428
  %5596 = vst.msk [vmem:[#allocation2 + $0x68] sm:$0xf] %vm5569, %v5430
  %5597 = vst.msk [vmem:[#allocation2 + $0x6c] sm:$0xf] %vm5569, %v5432
  %5598 = vst.msk [vmem:[#allocation2 + $0x70] sm:$0xf] %vm5569, %v5434
  %5599 = vst.msk [vmem:[#allocation2 + $0x74] sm:$0xf] %vm5569, %v5436
  %5600 = vst.msk [vmem:[#allocation2 + $0x78] sm:$0xf] %vm5569, %v5438
  %5601 = vst.msk [vmem:[#allocation2 + $0x7c] sm:$0xf] %vm5569, %v5440
  %5602 = vst.msk [vmem:[#allocation2 + $0x80] sm:$0xf] %vm5569, %v5442
  %5603 = vst.msk [vmem:[#allocation2 + $0x84] sm:$0xf] %vm5569, %v5444
  %5604 = vst.msk [vmem:[#allocation2 + $0x88] sm:$0xf] %vm5569, %v5446
  %5605 = vst.msk [vmem:[#allocation2 + $0x8c] sm:$0xf] %vm5569, %v5448
  %5606 = vst.msk [vmem:[#allocation2 + $0x90] sm:$0xf] %vm5569, %v5450
  %5607 = vst.msk [vmem:[#allocation2 + $0x94] sm:$0xf] %vm5569, %v5452
  %5608 = vst.msk [vmem:[#allocation2 + $0x98] sm:$0xf] %vm5569, %v5454
  %5609 = vst.msk [vmem:[#allocation2 + $0x9c] sm:$0xf] %vm5569, %v5456
  %5610 = vst.msk [vmem:[#allocation2 + $0xa0] sm:$0xf] %vm5569, %v5458
  %5611 = vst.msk [vmem:[#allocation2 + $0xa4] sm:$0xf] %vm5569, %v5460
  %5612 = vst.msk [vmem:[#allocation2 + $0xa8] sm:$0xf] %vm5569, %v5462
  %5613 = vst.msk [vmem:[#allocation2 + $0xac] sm:$0xf] %vm5569, %v5464
  %5614 = vst.msk [vmem:[#allocation2 + $0xb0] sm:$0xf] %vm5569, %v5466
  %5615 = vst.msk [vmem:[#allocation2 + $0xb4] sm:$0xf] %vm5569, %v5468
  %5616 = vst.msk [vmem:[#allocation2 + $0xb8] sm:$0xf] %vm5569, %v5470
  %5617 = vst.msk [vmem:[#allocation2 + $0xbc] sm:$0xf] %vm5569, %v5472
  %5618 = vst.msk [vmem:[#allocation2 + $0xc0] sm:$0xf] %vm5569, %v5474
  %5619 = vst.msk [vmem:[#allocation2 + $0xc4] sm:$0xf] %vm5569, %v5476
  %5620 = vst.msk [vmem:[#allocation2 + $0xc8] sm:$0xf] %vm5569, %v5478
  %5621 = vst.msk [vmem:[#allocation2 + $0xcc] sm:$0xf] %vm5569, %v5480
  %5622 = vst.msk [vmem:[#allocation2 + $0xd0] sm:$0xf] %vm5569, %v5482
  %5623 = vst.msk [vmem:[#allocation2 + $0xd4] sm:$0xf] %vm5569, %v5484
  %5624 = vst.msk [vmem:[#allocation2 + $0xd8] sm:$0xf] %vm5569, %v5486
  %5625 = vst.msk [vmem:[#allocation2 + $0xdc] sm:$0xf] %vm5569, %v5488
  %5626 = vst.msk [vmem:[#allocation2 + $0xe0] sm:$0xf] %vm5569, %v5490
  %5627 = vst.msk [vmem:[#allocation2 + $0xe4] sm:$0xf] %vm5569, %v5492
  %5628 = vst.msk [vmem:[#allocation2 + $0xe8] sm:$0xf] %vm5569, %v5494
  %5629 = vst.msk [vmem:[#allocation2 + $0xec] sm:$0xf] %vm5569, %v5496
  %5630 = vst.msk [vmem:[#allocation2 + $0xf0] sm:$0xf] %vm5569, %v5498
  %5631 = vst.msk [vmem:[#allocation2 + $0xf4] sm:$0xf] %vm5569, %v5500
  %5632 = vst.msk [vmem:[#allocation2 + $0xf8] sm:$0xf] %vm5569, %v5502
  %5633 = vst.msk [vmem:[#allocation2 + $0xfc] sm:$0xf] %vm5569, %v5504
  %v5634 = vld [vmem:[%s4127] sm:$0xe]
  %v5635 = vld [vmem:[%s4127 + $0x4] sm:$0xf]
  %v5636 = vld [vmem:[%s4127 + $0x8] sm:$0x1]
  %v5637 = vld [vmem:[%s4127 + $0xc] sm:$0xe]
  %v5638 = vld [vmem:[%s4127 + $0x10] sm:$0xf]
  %v5639 = vld [vmem:[%s4127 + $0x14] sm:$0x1]
  %v5640 = vld [vmem:[%s4127 + $0x18] sm:$0xe]
  %v5641 = vld [vmem:[%s4127 + $0x1c] sm:$0xf]
  %v5642 = vld [vmem:[%s4127 + $0x20] sm:$0x1]
  %v5643 = vld [vmem:[%s4127 + $0x24] sm:$0xe]
  %v5644 = vld [vmem:[%s4127 + $0x28] sm:$0xf]
  %v5645 = vld [vmem:[%s4127 + $0x2c] sm:$0x1]
  %v5646 = vld [vmem:[%s4127 + $0x30] sm:$0xe]
  %v5647 = vld [vmem:[%s4127 + $0x34] sm:$0xf]
  %v5648 = vld [vmem:[%s4127 + $0x38] sm:$0x1]
  %v5649 = vld [vmem:[%s4127 + $0x3c] sm:$0xe]
  %v5650 = vld [vmem:[%s4127 + $0x40] sm:$0xf]
  %v5651 = vld [vmem:[%s4127 + $0x44] sm:$0x1]
  %v5652 = vld [vmem:[%s4127 + $0x48] sm:$0xe]
  %v5653 = vld [vmem:[%s4127 + $0x4c] sm:$0xf]
  %v5654 = vld [vmem:[%s4127 + $0x50] sm:$0x1]
  %v5655 = vld [vmem:[%s4127 + $0x54] sm:$0xe]
  %v5656 = vld [vmem:[%s4127 + $0x58] sm:$0xf]
  %v5657 = vld [vmem:[%s4127 + $0x5c] sm:$0x1]
  %v5658 = vld [vmem:[%s4127 + $0x60] sm:$0xe]
  %v5659 = vld [vmem:[%s4127 + $0x64] sm:$0xf]
  %v5660 = vld [vmem:[%s4127 + $0x68] sm:$0x1]
  %v5661 = vld [vmem:[%s4127 + $0x6c] sm:$0xe]
  %v5662 = vld [vmem:[%s4127 + $0x70] sm:$0xf]
  %v5663 = vld [vmem:[%s4127 + $0x74] sm:$0x1]
  %v5664 = vld [vmem:[%s4127 + $0x78] sm:$0xe]
  %v5665 = vld [vmem:[%s4127 + $0x7c] sm:$0xf]
  %v5666 = vld [vmem:[%s4127 + $0x80] sm:$0x1]
  %v5667 = vld [vmem:[%s4127 + $0x84] sm:$0xe]
  %v5668 = vld [vmem:[%s4127 + $0x88] sm:$0xf]
  %v5669 = vld [vmem:[%s4127 + $0x8c] sm:$0x1]
  %v5670 = vld [vmem:[%s4127 + $0x90] sm:$0xe]
  %v5671 = vld [vmem:[%s4127 + $0x94] sm:$0xf]
  %v5672 = vld [vmem:[%s4127 + $0x98] sm:$0x1]
  %v5673 = vld [vmem:[%s4127 + $0x9c] sm:$0xe]
  %v5674 = vld [vmem:[%s4127 + $0xa0] sm:$0xf]
  %v5675 = vld [vmem:[%s4127 + $0xa4] sm:$0x1]
  %v5676 = vld [vmem:[%s4127 + $0xa8] sm:$0xe]
  %v5677 = vld [vmem:[%s4127 + $0xac] sm:$0xf]
  %v5678 = vld [vmem:[%s4127 + $0xb0] sm:$0x1]
  %v5679 = vld [vmem:[%s4127 + $0xb4] sm:$0xe]
  %v5680 = vld [vmem:[%s4127 + $0xb8] sm:$0xf]
  %v5681 = vld [vmem:[%s4127 + $0xbc] sm:$0x1]
  %v5682 = vld [vmem:[%s4127 + $0xd8] sm:$0xe]
  %v5683 = vld [vmem:[%s4127 + $0xdc] sm:$0xf]
  %v5684 = vld [vmem:[%s4127 + $0xe0] sm:$0x1]
  %v5685 = vld [vmem:[%s4127 + $0xe4] sm:$0xe]
  %v5686 = vld [vmem:[%s4127 + $0xe8] sm:$0xf]
  %v5687 = vld [vmem:[%s4127 + $0xec] sm:$0x1]
  %v5688 = vld [vmem:[%s4127 + $0xf0] sm:$0xe]
  %v5689 = vld [vmem:[%s4127 + $0xf4] sm:$0xf]
  %v5690 = vld [vmem:[%s4127 + $0xf8] sm:$0x1]
  %v5691 = vld [vmem:[%s4127 + $0xfc] sm:$0xe]
  %v5692 = vld [vmem:[%s4127 + $0x100] sm:$0xf]
  %v5693 = vld [vmem:[%s4127 + $0x104] sm:$0x1]
  %v5694 = vld [vmem:[%s4127 + $0x108] sm:$0xe]
  %v5695 = vld [vmem:[%s4127 + $0x10c] sm:$0xf]
  %v5696 = vld [vmem:[%s4127 + $0x110] sm:$0x1]
  %v5697 = vld [vmem:[%s4127 + $0x114] sm:$0xe]
  %v5698 = vld [vmem:[%s4127 + $0x118] sm:$0xf]
  %v5699 = vld [vmem:[%s4127 + $0x11c] sm:$0x1]
  %v5700 = vld [vmem:[%s4127 + $0x120] sm:$0xe]
  %v5701 = vld [vmem:[%s4127 + $0x124] sm:$0xf]
  %v5702 = vld [vmem:[%s4127 + $0x128] sm:$0x1]
  %v5703 = vld [vmem:[%s4127 + $0x12c] sm:$0xe]
  %v5704 = vld [vmem:[%s4127 + $0x130] sm:$0xf]
  %v5705 = vld [vmem:[%s4127 + $0x134] sm:$0x1]
  %v5706 = vld [vmem:[%s4127 + $0x138] sm:$0xe]
  %v5707 = vld [vmem:[%s4127 + $0x13c] sm:$0xf]
  %v5708 = vld [vmem:[%s4127 + $0x140] sm:$0x1]
  %v5709 = vld [vmem:[%s4127 + $0x144] sm:$0xe]
  %v5710 = vld [vmem:[%s4127 + $0x148] sm:$0xf]
  %v5711 = vld [vmem:[%s4127 + $0x14c] sm:$0x1]
  %v5712 = vld [vmem:[%s4127 + $0x150] sm:$0xe]
  %v5713 = vld [vmem:[%s4127 + $0x154] sm:$0xf]
  %v5714 = vld [vmem:[%s4127 + $0x158] sm:$0x1]
  %v5715 = vld [vmem:[%s4127 + $0x15c] sm:$0xe]
  %v5716 = vld [vmem:[%s4127 + $0x160] sm:$0xf]
  %v5717 = vld [vmem:[%s4127 + $0x164] sm:$0x1]
  %v5718 = vld [vmem:[%s4127 + $0x168] sm:$0xe]
  %v5719 = vld [vmem:[%s4127 + $0x16c] sm:$0xf]
  %v5720 = vld [vmem:[%s4127 + $0x170] sm:$0x1]
  %v5721 = vld [vmem:[%s4127 + $0x174] sm:$0xe]
  %v5722 = vld [vmem:[%s4127 + $0x178] sm:$0xf]
  %v5723 = vld [vmem:[%s4127 + $0x17c] sm:$0x1]
  %v5724 = vld [vmem:[%s4127 + $0x180] sm:$0xe]
  %v5725 = vld [vmem:[%s4127 + $0x184] sm:$0xf]
  %v5726 = vld [vmem:[%s4127 + $0x188] sm:$0x1]
  %v5727 = vld [vmem:[%s4127 + $0x18c] sm:$0xe]
  %v5728 = vld [vmem:[%s4127 + $0x190] sm:$0xf]
  %v5729 = vld [vmem:[%s4127 + $0x194] sm:$0x1]
  %v5826 = vrot.slane %v5634, 5
  %v5827 = vrot.slane %v5826, 4
  %v5828 = vrot.slane %v5635, 5
  %v5829 = vsel %vm1465, %v5827, %v5828
  %v5830 = vrot.slane %v5828, 4
  %v5831 = vrot.slane %v5636, 5
  %v5832 = vsel %vm1465, %v5830, %v5831
  %v5833 = vrot.slane %v5637, 5
  %v5834 = vrot.slane %v5833, 4
  %v5835 = vrot.slane %v5638, 5
  %v5836 = vsel %vm1465, %v5834, %v5835
  %v5837 = vrot.slane %v5835, 4
  %v5838 = vrot.slane %v5639, 5
  %v5839 = vsel %vm1465, %v5837, %v5838
  %v5840 = vrot.slane %v5640, 5
  %v5841 = vrot.slane %v5840, 4
  %v5842 = vrot.slane %v5641, 5
  %v5843 = vsel %vm1465, %v5841, %v5842
  %v5844 = vrot.slane %v5842, 4
  %v5845 = vrot.slane %v5642, 5
  %v5846 = vsel %vm1465, %v5844, %v5845
  %v5847 = vrot.slane %v5643, 5
  %v5848 = vrot.slane %v5847, 4
  %v5849 = vrot.slane %v5644, 5
  %v5850 = vsel %vm1465, %v5848, %v5849
  %v5851 = vrot.slane %v5849, 4
  %v5852 = vrot.slane %v5645, 5
  %v5853 = vsel %vm1465, %v5851, %v5852
  %v5854 = vrot.slane %v5646, 5
  %v5855 = vrot.slane %v5854, 4
  %v5856 = vrot.slane %v5647, 5
  %v5857 = vsel %vm1465, %v5855, %v5856
  %v5858 = vrot.slane %v5856, 4
  %v5859 = vrot.slane %v5648, 5
  %v5860 = vsel %vm1465, %v5858, %v5859
  %v5861 = vrot.slane %v5649, 5
  %v5862 = vrot.slane %v5861, 4
  %v5863 = vrot.slane %v5650, 5
  %v5864 = vsel %vm1465, %v5862, %v5863
  %v5865 = vrot.slane %v5863, 4
  %v5866 = vrot.slane %v5651, 5
  %v5867 = vsel %vm1465, %v5865, %v5866
  %v5868 = vrot.slane %v5652, 5
  %v5869 = vrot.slane %v5868, 4
  %v5870 = vrot.slane %v5653, 5
  %v5871 = vsel %vm1465, %v5869, %v5870
  %v5872 = vrot.slane %v5870, 4
  %v5873 = vrot.slane %v5654, 5
  %v5874 = vsel %vm1465, %v5872, %v5873
  %v5875 = vrot.slane %v5655, 5
  %v5876 = vrot.slane %v5875, 4
  %v5877 = vrot.slane %v5656, 5
  %v5878 = vsel %vm1465, %v5876, %v5877
  %v5879 = vrot.slane %v5877, 4
  %v5880 = vrot.slane %v5657, 5
  %v5881 = vsel %vm1465, %v5879, %v5880
  %v5882 = vrot.slane %v5658, 5
  %v5883 = vrot.slane %v5882, 4
  %v5884 = vrot.slane %v5659, 5
  %v5885 = vsel %vm1465, %v5883, %v5884
  %v5886 = vrot.slane %v5884, 4
  %v5887 = vrot.slane %v5660, 5
  %v5888 = vsel %vm1465, %v5886, %v5887
  %v5889 = vrot.slane %v5661, 5
  %v5890 = vrot.slane %v5889, 4
  %v5891 = vrot.slane %v5662, 5
  %v5892 = vsel %vm1465, %v5890, %v5891
  %v5893 = vrot.slane %v5891, 4
  %v5894 = vrot.slane %v5663, 5
  %v5895 = vsel %vm1465, %v5893, %v5894
  %v5896 = vrot.slane %v5664, 5
  %v5897 = vrot.slane %v5896, 4
  %v5898 = vrot.slane %v5665, 5
  %v5899 = vsel %vm1465, %v5897, %v5898
  %v5900 = vrot.slane %v5898, 4
  %v5901 = vrot.slane %v5666, 5
  %v5902 = vsel %vm1465, %v5900, %v5901
  %v5903 = vrot.slane %v5667, 5
  %v5904 = vrot.slane %v5903, 4
  %v5905 = vrot.slane %v5668, 5
  %v5906 = vsel %vm1465, %v5904, %v5905
  %v5907 = vrot.slane %v5905, 4
  %v5908 = vrot.slane %v5669, 5
  %v5909 = vsel %vm1465, %v5907, %v5908
  %v5910 = vrot.slane %v5670, 5
  %v5911 = vrot.slane %v5910, 4
  %v5912 = vrot.slane %v5671, 5
  %v5913 = vsel %vm1465, %v5911, %v5912
  %v5914 = vrot.slane %v5912, 4
  %v5915 = vrot.slane %v5672, 5
  %v5916 = vsel %vm1465, %v5914, %v5915
  %v5917 = vrot.slane %v5673, 5
  %v5918 = vrot.slane %v5917, 4
  %v5919 = vrot.slane %v5674, 5
  %v5920 = vsel %vm1465, %v5918, %v5919
  %v5921 = vrot.slane %v5919, 4
  %v5922 = vrot.slane %v5675, 5
  %v5923 = vsel %vm1465, %v5921, %v5922
  %v5924 = vrot.slane %v5676, 5
  %v5925 = vrot.slane %v5924, 4
  %v5926 = vrot.slane %v5677, 5
  %v5927 = vsel %vm1465, %v5925, %v5926
  %v5928 = vrot.slane %v5926, 4
  %v5929 = vrot.slane %v5678, 5
  %v5930 = vsel %vm1465, %v5928, %v5929
  %v5931 = vrot.slane %v5679, 5
  %v5932 = vrot.slane %v5931, 4
  %v5933 = vrot.slane %v5680, 5
  %v5934 = vsel %vm1465, %v5932, %v5933
  %v5935 = vrot.slane %v5933, 4
  %v5936 = vrot.slane %v5681, 5
  %v5937 = vsel %vm1465, %v5935, %v5936
  %v5938 = vrot.slane %v5682, 5
  %v5939 = vrot.slane %v5938, 4
  %v5940 = vrot.slane %v5683, 5
  %v5941 = vsel %vm1465, %v5939, %v5940
  %v5942 = vrot.slane %v5940, 4
  %v5943 = vrot.slane %v5684, 5
  %v5944 = vsel %vm1465, %v5942, %v5943
  %v5945 = vrot.slane %v5685, 5
  %v5946 = vrot.slane %v5945, 4
  %v5947 = vrot.slane %v5686, 5
  %v5948 = vsel %vm1465, %v5946, %v5947
  %v5949 = vrot.slane %v5947, 4
  %v5950 = vrot.slane %v5687, 5
  %v5951 = vsel %vm1465, %v5949, %v5950
  %v5952 = vrot.slane %v5688, 5
  %v5953 = vrot.slane %v5952, 4
  %v5954 = vrot.slane %v5689, 5
  %v5955 = vsel %vm1465, %v5953, %v5954
  %v5956 = vrot.slane %v5954, 4
  %v5957 = vrot.slane %v5690, 5
  %v5958 = vsel %vm1465, %v5956, %v5957
  %v5959 = vrot.slane %v5691, 5
  %v5960 = vrot.slane %v5959, 4
  %v5961 = vrot.slane %v5692, 5
  %v5962 = vsel %vm1465, %v5960, %v5961
  %v5963 = vrot.slane %v5961, 4
  %v5964 = vrot.slane %v5693, 5
  %v5965 = vsel %vm1465, %v5963, %v5964
  %v5966 = vrot.slane %v5694, 5
  %v5967 = vrot.slane %v5966, 4
  %v5968 = vrot.slane %v5695, 5
  %v5969 = vsel %vm1465, %v5967, %v5968
  %v5970 = vrot.slane %v5968, 4
  %v5971 = vrot.slane %v5696, 5
  %v5972 = vsel %vm1465, %v5970, %v5971
  %v5973 = vrot.slane %v5697, 5
  %v5974 = vrot.slane %v5973, 4
  %v5975 = vrot.slane %v5698, 5
  %v5976 = vsel %vm1465, %v5974, %v5975
  %v5977 = vrot.slane %v5975, 4
  %v5978 = vrot.slane %v5699, 5
  %v5979 = vsel %vm1465, %v5977, %v5978
  %v5980 = vrot.slane %v5700, 5
  %v5981 = vrot.slane %v5980, 4
  %v5982 = vrot.slane %v5701, 5
  %v5983 = vsel %vm1465, %v5981, %v5982
  %v5984 = vrot.slane %v5982, 4
  %v5985 = vrot.slane %v5702, 5
  %v5986 = vsel %vm1465, %v5984, %v5985
  %v5987 = vrot.slane %v5703, 5
  %v5988 = vrot.slane %v5987, 4
  %v5989 = vrot.slane %v5704, 5
  %v5990 = vsel %vm1465, %v5988, %v5989
  %v5991 = vrot.slane %v5989, 4
  %v5992 = vrot.slane %v5705, 5
  %v5993 = vsel %vm1465, %v5991, %v5992
  %v5994 = vrot.slane %v5706, 5
  %v5995 = vrot.slane %v5994, 4
  %v5996 = vrot.slane %v5707, 5
  %v5997 = vsel %vm1465, %v5995, %v5996
  %v5998 = vrot.slane %v5996, 4
  %v5999 = vrot.slane %v5708, 5
  %v6000 = vsel %vm1465, %v5998, %v5999
  %v6001 = vrot.slane %v5709, 5
  %v6002 = vrot.slane %v6001, 4
  %v6003 = vrot.slane %v5710, 5
  %v6004 = vsel %vm1465, %v6002, %v6003
  %v6005 = vrot.slane %v6003, 4
  %v6006 = vrot.slane %v5711, 5
  %v6007 = vsel %vm1465, %v6005, %v6006
  %v6008 = vrot.slane %v5712, 5
  %v6009 = vrot.slane %v6008, 4
  %v6010 = vrot.slane %v5713, 5
  %v6011 = vsel %vm1465, %v6009, %v6010
  %v6012 = vrot.slane %v6010, 4
  %v6013 = vrot.slane %v5714, 5
  %v6014 = vsel %vm1465, %v6012, %v6013
  %v6015 = vrot.slane %v5715, 5
  %v6016 = vrot.slane %v6015, 4
  %v6017 = vrot.slane %v5716, 5
  %v6018 = vsel %vm1465, %v6016, %v6017
  %v6019 = vrot.slane %v6017, 4
  %v6020 = vrot.slane %v5717, 5
  %v6021 = vsel %vm1465, %v6019, %v6020
  %v6022 = vrot.slane %v5718, 5
  %v6023 = vrot.slane %v6022, 4
  %v6024 = vrot.slane %v5719, 5
  %v6025 = vsel %vm1465, %v6023, %v6024
  %v6026 = vrot.slane %v6024, 4
  %v6027 = vrot.slane %v5720, 5
  %v6028 = vsel %vm1465, %v6026, %v6027
  %v6029 = vrot.slane %v5721, 5
  %v6030 = vrot.slane %v6029, 4
  %v6031 = vrot.slane %v5722, 5
  %v6032 = vsel %vm1465, %v6030, %v6031
  %v6033 = vrot.slane %v6031, 4
  %v6034 = vrot.slane %v5723, 5
  %v6035 = vsel %vm1465, %v6033, %v6034
  %v6036 = vrot.slane %v5724, 5
  %v6037 = vrot.slane %v6036, 4
  %v6038 = vrot.slane %v5725, 5
  %v6039 = vsel %vm1465, %v6037, %v6038
  %v6040 = vrot.slane %v6038, 4
  %v6041 = vrot.slane %v5726, 5
  %v6042 = vsel %vm1465, %v6040, %v6041
  %v6043 = vrot.slane %v5727, 5
  %v6044 = vrot.slane %v6043, 4
  %v6045 = vrot.slane %v5728, 5
  %v6046 = vsel %vm1465, %v6044, %v6045
  %v6047 = vrot.slane %v6045, 4
  %v6048 = vrot.slane %v5729, 5
  %v6049 = vsel %vm1465, %v6047, %v6048
  %6050 = vrot.lane.b32.xlu0 %v5829, 32
  %v6051 = vpop.permute.xlu0 %6050
  %6052 = vrot.lane.b32.xlu0 %v5832, 32
  %v6053 = vpop.permute.xlu0 %6052
  %6054 = vrot.lane.b32.xlu0 %v5836, 32
  %v6055 = vpop.permute.xlu0 %6054
  %6056 = vrot.lane.b32.xlu0 %v5839, 32
  %v6057 = vpop.permute.xlu0 %6056
  %6058 = vrot.lane.b32.xlu0 %v5843, 32
  %v6059 = vpop.permute.xlu0 %6058
  %6060 = vrot.lane.b32.xlu0 %v5846, 32
  %v6061 = vpop.permute.xlu0 %6060
  %6062 = vrot.lane.b32.xlu0 %v5850, 32
  %v6063 = vpop.permute.xlu0 %6062
  %6064 = vrot.lane.b32.xlu0 %v5853, 32
  %v6065 = vpop.permute.xlu0 %6064
  %6066 = vrot.lane.b32.xlu0 %v5857, 32
  %v6067 = vpop.permute.xlu0 %6066
  %6068 = vrot.lane.b32.xlu0 %v5860, 32
  %v6069 = vpop.permute.xlu0 %6068
  %6070 = vrot.lane.b32.xlu0 %v5864, 32
  %v6071 = vpop.permute.xlu0 %6070
  %6072 = vrot.lane.b32.xlu0 %v5867, 32
  %v6073 = vpop.permute.xlu0 %6072
  %6074 = vrot.lane.b32.xlu0 %v5871, 32
  %v6075 = vpop.permute.xlu0 %6074
  %6076 = vrot.lane.b32.xlu0 %v5874, 32
  %v6077 = vpop.permute.xlu0 %6076
  %6078 = vrot.lane.b32.xlu0 %v5878, 32
  %v6079 = vpop.permute.xlu0 %6078
  %6080 = vrot.lane.b32.xlu0 %v5881, 32
  %v6081 = vpop.permute.xlu0 %6080
  %6082 = vrot.lane.b32.xlu0 %v5885, 32
  %v6083 = vpop.permute.xlu0 %6082
  %6084 = vrot.lane.b32.xlu0 %v5888, 32
  %v6085 = vpop.permute.xlu0 %6084
  %6086 = vrot.lane.b32.xlu0 %v5892, 32
  %v6087 = vpop.permute.xlu0 %6086
  %6088 = vrot.lane.b32.xlu0 %v5895, 32
  %v6089 = vpop.permute.xlu0 %6088
  %6090 = vrot.lane.b32.xlu0 %v5899, 32
  %v6091 = vpop.permute.xlu0 %6090
  %6092 = vrot.lane.b32.xlu0 %v5902, 32
  %v6093 = vpop.permute.xlu0 %6092
  %6094 = vrot.lane.b32.xlu0 %v5906, 32
  %v6095 = vpop.permute.xlu0 %6094
  %6096 = vrot.lane.b32.xlu0 %v5909, 32
  %v6097 = vpop.permute.xlu0 %6096
  %6098 = vrot.lane.b32.xlu0 %v5913, 32
  %v6099 = vpop.permute.xlu0 %6098
  %6100 = vrot.lane.b32.xlu0 %v5916, 32
  %v6101 = vpop.permute.xlu0 %6100
  %6102 = vrot.lane.b32.xlu0 %v5920, 32
  %v6103 = vpop.permute.xlu0 %6102
  %6104 = vrot.lane.b32.xlu0 %v5923, 32
  %v6105 = vpop.permute.xlu0 %6104
  %6106 = vrot.lane.b32.xlu0 %v5927, 32
  %v6107 = vpop.permute.xlu0 %6106
  %6108 = vrot.lane.b32.xlu0 %v5930, 32
  %v6109 = vpop.permute.xlu0 %6108
  %6110 = vrot.lane.b32.xlu0 %v5934, 32
  %v6111 = vpop.permute.xlu0 %6110
  %6112 = vrot.lane.b32.xlu0 %v5937, 32
  %v6113 = vpop.permute.xlu0 %6112
  %6114 = vrot.lane.b32.xlu0 %v5941, 32
  %v6115 = vpop.permute.xlu0 %6114
  %6116 = vrot.lane.b32.xlu0 %v5944, 32
  %v6117 = vpop.permute.xlu0 %6116
  %6118 = vrot.lane.b32.xlu0 %v5948, 32
  %v6119 = vpop.permute.xlu0 %6118
  %6120 = vrot.lane.b32.xlu0 %v5951, 32
  %v6121 = vpop.permute.xlu0 %6120
  %6122 = vrot.lane.b32.xlu0 %v5955, 32
  %v6123 = vpop.permute.xlu0 %6122
  %6124 = vrot.lane.b32.xlu0 %v5958, 32
  %v6125 = vpop.permute.xlu0 %6124
  %6126 = vrot.lane.b32.xlu0 %v5962, 32
  %v6127 = vpop.permute.xlu0 %6126
  %6128 = vrot.lane.b32.xlu0 %v5965, 32
  %v6129 = vpop.permute.xlu0 %6128
  %6130 = vrot.lane.b32.xlu0 %v5969, 32
  %v6131 = vpop.permute.xlu0 %6130
  %6132 = vrot.lane.b32.xlu0 %v5972, 32
  %v6133 = vpop.permute.xlu0 %6132
  %6134 = vrot.lane.b32.xlu0 %v5976, 32
  %v6135 = vpop.permute.xlu0 %6134
  %6136 = vrot.lane.b32.xlu0 %v5979, 32
  %v6137 = vpop.permute.xlu0 %6136
  %6138 = vrot.lane.b32.xlu0 %v5983, 32
  %v6139 = vpop.permute.xlu0 %6138
  %6140 = vrot.lane.b32.xlu0 %v5986, 32
  %v6141 = vpop.permute.xlu0 %6140
  %6142 = vrot.lane.b32.xlu0 %v5990, 32
  %v6143 = vpop.permute.xlu0 %6142
  %6144 = vrot.lane.b32.xlu0 %v5993, 32
  %v6145 = vpop.permute.xlu0 %6144
  %6146 = vrot.lane.b32.xlu0 %v5997, 32
  %v6147 = vpop.permute.xlu0 %6146
  %6148 = vrot.lane.b32.xlu0 %v6000, 32
  %v6149 = vpop.permute.xlu0 %6148
  %6150 = vrot.lane.b32.xlu0 %v6004, 32
  %v6151 = vpop.permute.xlu0 %6150
  %6152 = vrot.lane.b32.xlu0 %v6007, 32
  %v6153 = vpop.permute.xlu0 %6152
  %6154 = vrot.lane.b32.xlu0 %v6011, 32
  %v6155 = vpop.permute.xlu0 %6154
  %6156 = vrot.lane.b32.xlu0 %v6014, 32
  %v6157 = vpop.permute.xlu0 %6156
  %6158 = vrot.lane.b32.xlu0 %v6018, 32
  %v6159 = vpop.permute.xlu0 %6158
  %6160 = vrot.lane.b32.xlu0 %v6021, 32
  %v6161 = vpop.permute.xlu0 %6160
  %6162 = vrot.lane.b32.xlu0 %v6025, 32
  %v6163 = vpop.permute.xlu0 %6162
  %6164 = vrot.lane.b32.xlu0 %v6028, 32
  %v6165 = vpop.permute.xlu0 %6164
  %6166 = vrot.lane.b32.xlu0 %v6032, 32
  %v6167 = vpop.permute.xlu0 %6166
  %6168 = vrot.lane.b32.xlu0 %v6035, 32
  %v6169 = vpop.permute.xlu0 %6168
  %6170 = vrot.lane.b32.xlu0 %v6039, 32
  %v6171 = vpop.permute.xlu0 %6170
  %6172 = vrot.lane.b32.xlu0 %v6042, 32
  %v6173 = vpop.permute.xlu0 %6172
  %6174 = vrot.lane.b32.xlu0 %v6046, 32
  %v6175 = vpop.permute.xlu0 %6174
  %6176 = vrot.lane.b32.xlu0 %v6049, 32
  %v6177 = vpop.permute.xlu0 %6176
  %vm6242 = vcmask 290048
  %6243 = vst.msk [vmem:[#allocation2] sm:$0xf] %vm6242, %v6051
  %6244 = vst.msk [vmem:[#allocation2 + $0x4] sm:$0xf] %vm6242, %v6053
  %6245 = vst.msk [vmem:[#allocation2 + $0x8] sm:$0xf] %vm6242, %v6055
  %6246 = vst.msk [vmem:[#allocation2 + $0xc] sm:$0xf] %vm6242, %v6057
  %6247 = vst.msk [vmem:[#allocation2 + $0x10] sm:$0xf] %vm6242, %v6059
  %6248 = vst.msk [vmem:[#allocation2 + $0x14] sm:$0xf] %vm6242, %v6061
  %6249 = vst.msk [vmem:[#allocation2 + $0x18] sm:$0xf] %vm6242, %v6063
  %6250 = vst.msk [vmem:[#allocation2 + $0x1c] sm:$0xf] %vm6242, %v6065
  %6251 = vst.msk [vmem:[#allocation2 + $0x20] sm:$0xf] %vm6242, %v6067
  %6252 = vst.msk [vmem:[#allocation2 + $0x24] sm:$0xf] %vm6242, %v6069
  %6253 = vst.msk [vmem:[#allocation2 + $0x28] sm:$0xf] %vm6242, %v6071
  %6254 = vst.msk [vmem:[#allocation2 + $0x2c] sm:$0xf] %vm6242, %v6073
  %6255 = vst.msk [vmem:[#allocation2 + $0x30] sm:$0xf] %vm6242, %v6075
  %6256 = vst.msk [vmem:[#allocation2 + $0x34] sm:$0xf] %vm6242, %v6077
  %6257 = vst.msk [vmem:[#allocation2 + $0x38] sm:$0xf] %vm6242, %v6079
  %6258 = vst.msk [vmem:[#allocation2 + $0x3c] sm:$0xf] %vm6242, %v6081
  %6259 = vst.msk [vmem:[#allocation2 + $0x40] sm:$0xf] %vm6242, %v6083
  %6260 = vst.msk [vmem:[#allocation2 + $0x44] sm:$0xf] %vm6242, %v6085
  %6261 = vst.msk [vmem:[#allocation2 + $0x48] sm:$0xf] %vm6242, %v6087
  %6262 = vst.msk [vmem:[#allocation2 + $0x4c] sm:$0xf] %vm6242, %v6089
  %6263 = vst.msk [vmem:[#allocation2 + $0x50] sm:$0xf] %vm6242, %v6091
  %6264 = vst.msk [vmem:[#allocation2 + $0x54] sm:$0xf] %vm6242, %v6093
  %6265 = vst.msk [vmem:[#allocation2 + $0x58] sm:$0xf] %vm6242, %v6095
  %6266 = vst.msk [vmem:[#allocation2 + $0x5c] sm:$0xf] %vm6242, %v6097
  %6267 = vst.msk [vmem:[#allocation2 + $0x60] sm:$0xf] %vm6242, %v6099
  %6268 = vst.msk [vmem:[#allocation2 + $0x64] sm:$0xf] %vm6242, %v6101
  %6269 = vst.msk [vmem:[#allocation2 + $0x68] sm:$0xf] %vm6242, %v6103
  %6270 = vst.msk [vmem:[#allocation2 + $0x6c] sm:$0xf] %vm6242, %v6105
  %6271 = vst.msk [vmem:[#allocation2 + $0x70] sm:$0xf] %vm6242, %v6107
  %6272 = vst.msk [vmem:[#allocation2 + $0x74] sm:$0xf] %vm6242, %v6109
  %6273 = vst.msk [vmem:[#allocation2 + $0x78] sm:$0xf] %vm6242, %v6111
  %6274 = vst.msk [vmem:[#allocation2 + $0x7c] sm:$0xf] %vm6242, %v6113
  %6275 = vst.msk [vmem:[#allocation2 + $0x80] sm:$0xf] %vm6242, %v6115
  %6276 = vst.msk [vmem:[#allocation2 + $0x84] sm:$0xf] %vm6242, %v6117
  %6277 = vst.msk [vmem:[#allocation2 + $0x88] sm:$0xf] %vm6242, %v6119
  %6278 = vst.msk [vmem:[#allocation2 + $0x8c] sm:$0xf] %vm6242, %v6121
  %6279 = vst.msk [vmem:[#allocation2 + $0x90] sm:$0xf] %vm6242, %v6123
  %6280 = vst.msk [vmem:[#allocation2 + $0x94] sm:$0xf] %vm6242, %v6125
  %6281 = vst.msk [vmem:[#allocation2 + $0x98] sm:$0xf] %vm6242, %v6127
  %6282 = vst.msk [vmem:[#allocation2 + $0x9c] sm:$0xf] %vm6242, %v6129
  %6283 = vst.msk [vmem:[#allocation2 + $0xa0] sm:$0xf] %vm6242, %v6131
  %6284 = vst.msk [vmem:[#allocation2 + $0xa4] sm:$0xf] %vm6242, %v6133
  %6285 = vst.msk [vmem:[#allocation2 + $0xa8] sm:$0xf] %vm6242, %v6135
  %6286 = vst.msk [vmem:[#allocation2 + $0xac] sm:$0xf] %vm6242, %v6137
  %6287 = vst.msk [vmem:[#allocation2 + $0xb0] sm:$0xf] %vm6242, %v6139
  %6288 = vst.msk [vmem:[#allocation2 + $0xb4] sm:$0xf] %vm6242, %v6141
  %6289 = vst.msk [vmem:[#allocation2 + $0xb8] sm:$0xf] %vm6242, %v6143
  %6290 = vst.msk [vmem:[#allocation2 + $0xbc] sm:$0xf] %vm6242, %v6145
  %6291 = vst.msk [vmem:[#allocation2 + $0xc0] sm:$0xf] %vm6242, %v6147
  %6292 = vst.msk [vmem:[#allocation2 + $0xc4] sm:$0xf] %vm6242, %v6149
  %6293 = vst.msk [vmem:[#allocation2 + $0xc8] sm:$0xf] %vm6242, %v6151
  %6294 = vst.msk [vmem:[#allocation2 + $0xcc] sm:$0xf] %vm6242, %v6153
  %6295 = vst.msk [vmem:[#allocation2 + $0xd0] sm:$0xf] %vm6242, %v6155
  %6296 = vst.msk [vmem:[#allocation2 + $0xd4] sm:$0xf] %vm6242, %v6157
  %6297 = vst.msk [vmem:[#allocation2 + $0xd8] sm:$0xf] %vm6242, %v6159
  %6298 = vst.msk [vmem:[#allocation2 + $0xdc] sm:$0xf] %vm6242, %v6161
  %6299 = vst.msk [vmem:[#allocation2 + $0xe0] sm:$0xf] %vm6242, %v6163
  %6300 = vst.msk [vmem:[#allocation2 + $0xe4] sm:$0xf] %vm6242, %v6165
  %6301 = vst.msk [vmem:[#allocation2 + $0xe8] sm:$0xf] %vm6242, %v6167
  %6302 = vst.msk [vmem:[#allocation2 + $0xec] sm:$0xf] %vm6242, %v6169
  %6303 = vst.msk [vmem:[#allocation2 + $0xf0] sm:$0xf] %vm6242, %v6171
  %6304 = vst.msk [vmem:[#allocation2 + $0xf4] sm:$0xf] %vm6242, %v6173
  %6305 = vst.msk [vmem:[#allocation2 + $0xf8] sm:$0xf] %vm6242, %v6175
  %6306 = vst.msk [vmem:[#allocation2 + $0xfc] sm:$0xf] %vm6242, %v6177
  %v6307 = vld [vmem:[#allocation2] sm:$0xf]
  %v6308 = vld [vmem:[#allocation2 + $0x4] sm:$0xf]
  %v6309 = vld [vmem:[#allocation2 + $0x8] sm:$0xf]
  %v6310 = vld [vmem:[#allocation2 + $0xc] sm:$0xf]
  %v6311 = vld [vmem:[#allocation2 + $0x10] sm:$0xf]
  %v6312 = vld [vmem:[#allocation2 + $0x14] sm:$0xf]
  %v6313 = vld [vmem:[#allocation2 + $0x18] sm:$0xf]
  %v6314 = vld [vmem:[#allocation2 + $0x1c] sm:$0xf]
  %v6315 = vld [vmem:[#allocation2 + $0x20] sm:$0xf]
  %v6316 = vld [vmem:[#allocation2 + $0x24] sm:$0xf]
  %v6317 = vld [vmem:[#allocation2 + $0x28] sm:$0xf]
  %v6318 = vld [vmem:[#allocation2 + $0x2c] sm:$0xf]
  %v6319 = vld [vmem:[#allocation2 + $0x30] sm:$0xf]
  %v6320 = vld [vmem:[#allocation2 + $0x34] sm:$0xf]
  %v6321 = vld [vmem:[#allocation2 + $0x38] sm:$0xf]
  %v6322 = vld [vmem:[#allocation2 + $0x3c] sm:$0xf]
  %v6323 = vld [vmem:[#allocation2 + $0x40] sm:$0xf]
  %v6324 = vld [vmem:[#allocation2 + $0x44] sm:$0xf]
  %v6325 = vld [vmem:[#allocation2 + $0x48] sm:$0xf]
  %v6326 = vld [vmem:[#allocation2 + $0x4c] sm:$0xf]
  %v6327 = vld [vmem:[#allocation2 + $0x50] sm:$0xf]
  %v6328 = vld [vmem:[#allocation2 + $0x54] sm:$0xf]
  %v6329 = vld [vmem:[#allocation2 + $0x58] sm:$0xf]
  %v6330 = vld [vmem:[#allocation2 + $0x5c] sm:$0xf]
  %v6331 = vld [vmem:[#allocation2 + $0x60] sm:$0xf]
  %v6332 = vld [vmem:[#allocation2 + $0x64] sm:$0xf]
  %v6333 = vld [vmem:[#allocation2 + $0x68] sm:$0xf]
  %v6334 = vld [vmem:[#allocation2 + $0x6c] sm:$0xf]
  %v6335 = vld [vmem:[#allocation2 + $0x70] sm:$0xf]
  %v6336 = vld [vmem:[#allocation2 + $0x74] sm:$0xf]
  %v6337 = vld [vmem:[#allocation2 + $0x78] sm:$0xf]
  %v6338 = vld [vmem:[#allocation2 + $0x7c] sm:$0xf]
  %v6339 = vld [vmem:[#allocation2 + $0x80] sm:$0xf]
  %v6340 = vld [vmem:[#allocation2 + $0x84] sm:$0xf]
  %v6341 = vld [vmem:[#allocation2 + $0x88] sm:$0xf]
  %v6342 = vld [vmem:[#allocation2 + $0x8c] sm:$0xf]
  %v6343 = vld [vmem:[#allocation2 + $0x90] sm:$0xf]
  %v6344 = vld [vmem:[#allocation2 + $0x94] sm:$0xf]
  %v6345 = vld [vmem:[#allocation2 + $0x98] sm:$0xf]
  %v6346 = vld [vmem:[#allocation2 + $0x9c] sm:$0xf]
  %v6347 = vld [vmem:[#allocation2 + $0xa0] sm:$0xf]
  %v6348 = vld [vmem:[#allocation2 + $0xa4] sm:$0xf]
  %v6349 = vld [vmem:[#allocation2 + $0xa8] sm:$0xf]
  %v6350 = vld [vmem:[#allocation2 + $0xac] sm:$0xf]
  %v6351 = vld [vmem:[#allocation2 + $0xb0] sm:$0xf]
  %v6352 = vld [vmem:[#allocation2 + $0xb4] sm:$0xf]
  %v6353 = vld [vmem:[#allocation2 + $0xb8] sm:$0xf]
  %v6354 = vld [vmem:[#allocation2 + $0xbc] sm:$0xf]
  %v6355 = vld [vmem:[#allocation2 + $0xc0] sm:$0xf]
  %v6356 = vld [vmem:[#allocation2 + $0xc4] sm:$0xf]
  %v6357 = vld [vmem:[#allocation2 + $0xc8] sm:$0xf]
  %v6358 = vld [vmem:[#allocation2 + $0xcc] sm:$0xf]
  %v6359 = vld [vmem:[#allocation2 + $0xd0] sm:$0xf]
  %v6360 = vld [vmem:[#allocation2 + $0xd4] sm:$0xf]
  %v6361 = vld [vmem:[#allocation2 + $0xd8] sm:$0xf]
  %v6362 = vld [vmem:[#allocation2 + $0xdc] sm:$0xf]
  %v6363 = vld [vmem:[#allocation2 + $0xe0] sm:$0xf]
  %v6364 = vld [vmem:[#allocation2 + $0xe4] sm:$0xf]
  %v6365 = vld [vmem:[#allocation2 + $0xe8] sm:$0xf]
  %v6366 = vld [vmem:[#allocation2 + $0xec] sm:$0xf]
  %v6367 = vld [vmem:[#allocation2 + $0xf0] sm:$0xf]
  %v6368 = vld [vmem:[#allocation2 + $0xf4] sm:$0xf]
  %v6369 = vld [vmem:[#allocation2 + $0xf8] sm:$0xf]
  %v6370 = vld [vmem:[#allocation2 + $0xfc] sm:$0xf]
  %v6371 = vld [vmem:[%s1] sm:$0xf]
  %v6372 = vld [vmem:[%s1 + $0x4] sm:$0xf]
  %v6373 = vld [vmem:[%s1 + $0x8] sm:$0xf]
  %v6374 = vld [vmem:[%s1 + $0xc] sm:$0xf]
  %v6375 = vld [vmem:[%s1 + $0x10] sm:$0x3]
  %v6440 = vunpack.c.l.b16 %v6307
  %v6441 = vunpack.c.l.b16 %v6308
  %v6442 = vunpack.c.l.b16 %v6309
  %v6443 = vunpack.c.l.b16 %v6310
  %v6444 = vunpack.c.l.b16 %v6311
  %v6445 = vunpack.c.l.b16 %v6312
  %v6446 = vunpack.c.l.b16 %v6313
  %v6447 = vunpack.c.l.b16 %v6314
  %v6448 = vunpack.c.l.b16 %v6315
  %v6449 = vunpack.c.l.b16 %v6316
  %v6450 = vunpack.c.l.b16 %v6317
  %v6451 = vunpack.c.l.b16 %v6318
  %v6452 = vunpack.c.l.b16 %v6319
  %v6453 = vunpack.c.l.b16 %v6320
  %v6454 = vunpack.c.l.b16 %v6321
  %v6455 = vunpack.c.l.b16 %v6322
  %v6456 = vunpack.c.l.b16 %v6323
  %v6457 = vunpack.c.l.b16 %v6324
  %v6458 = vunpack.c.l.b16 %v6325
  %v6459 = vunpack.c.l.b16 %v6326
  %v6460 = vunpack.c.l.b16 %v6327
  %v6461 = vunpack.c.l.b16 %v6328
  %v6462 = vunpack.c.l.b16 %v6329
  %v6463 = vunpack.c.l.b16 %v6330
  %v6464 = vunpack.c.l.b16 %v6331
  %v6465 = vunpack.c.l.b16 %v6332
  %v6466 = vunpack.c.l.b16 %v6333
  %v6467 = vunpack.c.l.b16 %v6334
  %v6468 = vunpack.c.l.b16 %v6335
  %v6469 = vunpack.c.l.b16 %v6336
  %v6470 = vunpack.c.l.b16 %v6337
  %v6471 = vunpack.c.l.b16 %v6338
  %v6472 = vunpack.c.l.b16 %v6339
  %v6473 = vunpack.c.l.b16 %v6340
  %v6474 = vunpack.c.l.b16 %v6341
  %v6475 = vunpack.c.l.b16 %v6342
  %v6476 = vunpack.c.l.b16 %v6343
  %v6477 = vunpack.c.l.b16 %v6344
  %v6478 = vunpack.c.l.b16 %v6345
  %v6479 = vunpack.c.l.b16 %v6346
  %v6480 = vunpack.c.l.b16 %v6347
  %v6481 = vunpack.c.l.b16 %v6348
  %v6482 = vunpack.c.l.b16 %v6349
  %v6483 = vunpack.c.l.b16 %v6350
  %v6484 = vunpack.c.l.b16 %v6351
  %v6485 = vunpack.c.l.b16 %v6352
  %v6486 = vunpack.c.l.b16 %v6353
  %v6487 = vunpack.c.l.b16 %v6354
  %v6488 = vunpack.c.l.b16 %v6355
  %v6489 = vunpack.c.l.b16 %v6356
  %v6490 = vunpack.c.l.b16 %v6357
  %v6491 = vunpack.c.l.b16 %v6358
  %v6492 = vunpack.c.l.b16 %v6359
  %v6493 = vunpack.c.l.b16 %v6360
  %v6494 = vunpack.c.l.b16 %v6361
  %v6495 = vunpack.c.l.b16 %v6362
  %v6496 = vunpack.c.l.b16 %v6363
  %v6497 = vunpack.c.l.b16 %v6364
  %v6498 = vunpack.c.l.b16 %v6365
  %v6499 = vunpack.c.l.b16 %v6366
  %v6500 = vunpack.c.l.b16 %v6367
  %v6501 = vunpack.c.l.b16 %v6368
  %v6502 = vunpack.c.l.b16 %v6369
  %v6503 = vunpack.c.l.b16 %v6370
  %v6504 = vpack.c.b16 %v6441, %v6440
  %v6505 = vpack.c.b16 %v6443, %v6442
  %v6506 = vpack.c.b16 %v6445, %v6444
  %v6507 = vpack.c.b16 %v6447, %v6446
  %v6508 = vpack.c.b16 %v6449, %v6448
  %v6509 = vpack.c.b16 %v6451, %v6450
  %v6510 = vpack.c.b16 %v6453, %v6452
  %v6511 = vpack.c.b16 %v6455, %v6454
  %v6512 = vpack.c.b16 %v6457, %v6456
  %v6513 = vpack.c.b16 %v6459, %v6458
  %v6514 = vpack.c.b16 %v6461, %v6460
  %v6515 = vpack.c.b16 %v6463, %v6462
  %v6516 = vpack.c.b16 %v6465, %v6464
  %v6517 = vpack.c.b16 %v6467, %v6466
  %v6518 = vpack.c.b16 %v6469, %v6468
  %v6519 = vpack.c.b16 %v6471, %v6470
  %v6520 = vpack.c.b16 %v6473, %v6472
  %v6521 = vpack.c.b16 %v6475, %v6474
  %v6522 = vpack.c.b16 %v6477, %v6476
  %v6523 = vpack.c.b16 %v6479, %v6478
  %v6524 = vpack.c.b16 %v6481, %v6480
  %v6525 = vpack.c.b16 %v6483, %v6482
  %v6526 = vpack.c.b16 %v6485, %v6484
  %v6527 = vpack.c.b16 %v6487, %v6486
  %v6528 = vpack.c.b16 %v6489, %v6488
  %v6529 = vpack.c.b16 %v6491, %v6490
  %v6530 = vpack.c.b16 %v6493, %v6492
  %v6531 = vpack.c.b16 %v6495, %v6494
  %v6532 = vpack.c.b16 %v6497, %v6496
  %v6533 = vpack.c.b16 %v6499, %v6498
  %v6534 = vpack.c.b16 %v6501, %v6500
  %v6535 = vpack.c.b16 %v6503, %v6502
  %v6541 = vunpack.c.l.b16 %v6371
  %v6542 = vunpack.c.l.b16 %v6372
  %v6543 = vunpack.c.l.b16 %v6373
  %v6544 = vunpack.c.l.b16 %v6374
  %v6545 = vunpack.c.l.b16 %v6375
  %v6546 = vpack.c.b16 %v6542, %v6541
  %v6547 = vpack.c.b16 %v6544, %v6543
  %v6548 = vpack.c.b16 %v6545, %v6545
  %vm6551 = vcmask 293888
  %v6553 = vsel %vm6551, %v6504, 0
  %v6556 = vsel %vm6551, %v6505, 0
  %v6559 = vsel %vm6551, %v6506, 0
  %v6562 = vsel %vm6551, %v6507, 0
  %v6565 = vsel %vm6551, %v6508, 0
  %v6568 = vsel %vm6551, %v6509, 0
  %v6571 = vsel %vm6551, %v6510, 0
  %v6574 = vsel %vm6551, %v6511, 0
  %v6577 = vsel %vm6551, %v6512, 0
  %v6580 = vsel %vm6551, %v6513, 0
  %v6583 = vsel %vm6551, %v6514, 0
  %v6586 = vsel %vm6551, %v6515, 0
  %v6589 = vsel %vm6551, %v6516, 0
  %v6592 = vsel %vm6551, %v6517, 0
  %v6595 = vsel %vm6551, %v6518, 0
  %v6598 = vsel %vm6551, %v6519, 0
  %v6601 = vsel %vm6551, %v6520, 0
  %v6604 = vsel %vm6551, %v6521, 0
  %v6607 = vsel %vm6551, %v6522, 0
  %v6610 = vsel %vm6551, %v6523, 0
  %v6613 = vsel %vm6551, %v6524, 0
  %v6616 = vsel %vm6551, %v6525, 0
  %v6619 = vsel %vm6551, %v6526, 0
  %v6622 = vsel %vm6551, %v6527, 0
  %v6625 = vsel %vm6551, %v6528, 0
  %v6628 = vsel %vm6551, %v6529, 0
  %v6631 = vsel %vm6551, %v6530, 0
  %v6634 = vsel %vm6551, %v6531, 0
  %v6637 = vsel %vm6551, %v6532, 0
  %v6640 = vsel %vm6551, %v6533, 0
  %v6643 = vsel %vm6551, %v6534, 0
  %v6646 = vsel %vm6551, %v6535, 0
  %vm6648 = vcmask 1041408
  %v6650 = vsel %vm6648, %v6548, 0
  %6652 = vmatpush.bf16.msra.mxu0 0
  %6653 = vmatpush.bf16.msra.mxu0 0
  %6654 = vmatpush.bf16.msra.mxu0 0
  %6655 = vmatpush.bf16.msra.mxu0 0
  %6656 = vmatpush.bf16.msra.mxu0 0
  %6657 = vmatpush.bf16.msra.mxu0 %v6650
  %6658 = vmatpush.bf16.msra.mxu0 %v6547
  %6659 = vmatpush.bf16.msra.mxu0 %v6546
  %6660 = vmatmul.bf16.gmra.mxu0 %v6553
  %v6661 = vpop.f32.mrf.mxu0
  %v6662 = vadd.f32 0.0, %v6661
  %v6663 = vpop.f32.mrf.mxu0
  %v6664 = vadd.f32 0.0, %v6663
  %6665 = vmatmul.bf16.gmra.mxu0 %v6556
  %v6666 = vpop.f32.mrf.mxu0
  %v6667 = vadd.f32 0.0, %v6666
  %v6668 = vpop.f32.mrf.mxu0
  %v6669 = vadd.f32 0.0, %v6668
  %6670 = vmatmul.bf16.gmra.mxu0 %v6559
  %v6671 = vpop.f32.mrf.mxu0
  %v6672 = vadd.f32 0.0, %v6671
  %v6673 = vpop.f32.mrf.mxu0
  %v6674 = vadd.f32 0.0, %v6673
  %6675 = vmatmul.bf16.gmra.mxu0 %v6562
  %v6676 = vpop.f32.mrf.mxu0
  %v6677 = vadd.f32 0.0, %v6676
  %v6678 = vpop.f32.mrf.mxu0
  %v6679 = vadd.f32 0.0, %v6678
  %6680 = vmatmul.bf16.gmra.mxu0 %v6565
  %v6681 = vpop.f32.mrf.mxu0
  %v6682 = vadd.f32 0.0, %v6681
  %v6683 = vpop.f32.mrf.mxu0
  %v6684 = vadd.f32 0.0, %v6683
  %6685 = vmatmul.bf16.gmra.mxu0 %v6568
  %v6686 = vpop.f32.mrf.mxu0
  %v6687 = vadd.f32 0.0, %v6686
  %v6688 = vpop.f32.mrf.mxu0
  %v6689 = vadd.f32 0.0, %v6688
  %6690 = vmatmul.bf16.gmra.mxu0 %v6571
  %v6691 = vpop.f32.mrf.mxu0
  %v6692 = vadd.f32 0.0, %v6691
  %v6693 = vpop.f32.mrf.mxu0
  %v6694 = vadd.f32 0.0, %v6693
  %6695 = vmatmul.bf16.gmra.mxu0 %v6574
  %v6696 = vpop.f32.mrf.mxu0
  %v6697 = vadd.f32 0.0, %v6696
  %v6698 = vpop.f32.mrf.mxu0
  %v6699 = vadd.f32 0.0, %v6698
  %6700 = vmatmul.bf16.gmra.mxu0 %v6577
  %v6701 = vpop.f32.mrf.mxu0
  %v6702 = vadd.f32 0.0, %v6701
  %v6703 = vpop.f32.mrf.mxu0
  %v6704 = vadd.f32 0.0, %v6703
  %6705 = vmatmul.bf16.gmra.mxu0 %v6580
  %v6706 = vpop.f32.mrf.mxu0
  %v6707 = vadd.f32 0.0, %v6706
  %v6708 = vpop.f32.mrf.mxu0
  %v6709 = vadd.f32 0.0, %v6708
  %6710 = vmatmul.bf16.gmra.mxu0 %v6583
  %v6711 = vpop.f32.mrf.mxu0
  %v6712 = vadd.f32 0.0, %v6711
  %v6713 = vpop.f32.mrf.mxu0
  %v6714 = vadd.f32 0.0, %v6713
  %6715 = vmatmul.bf16.gmra.mxu0 %v6586
  %v6716 = vpop.f32.mrf.mxu0
  %v6717 = vadd.f32 0.0, %v6716
  %v6718 = vpop.f32.mrf.mxu0
  %v6719 = vadd.f32 0.0, %v6718
  %6720 = vmatmul.bf16.gmra.mxu0 %v6589
  %v6721 = vpop.f32.mrf.mxu0
  %v6722 = vadd.f32 0.0, %v6721
  %v6723 = vpop.f32.mrf.mxu0
  %v6724 = vadd.f32 0.0, %v6723
  %6725 = vmatmul.bf16.gmra.mxu0 %v6592
  %v6726 = vpop.f32.mrf.mxu0
  %v6727 = vadd.f32 0.0, %v6726
  %v6728 = vpop.f32.mrf.mxu0
  %v6729 = vadd.f32 0.0, %v6728
  %6730 = vmatmul.bf16.gmra.mxu0 %v6595
  %v6731 = vpop.f32.mrf.mxu0
  %v6732 = vadd.f32 0.0, %v6731
  %v6733 = vpop.f32.mrf.mxu0
  %v6734 = vadd.f32 0.0, %v6733
  %6735 = vmatmul.bf16.gmra.mxu0 %v6598
  %v6736 = vpop.f32.mrf.mxu0
  %v6737 = vadd.f32 0.0, %v6736
  %v6738 = vpop.f32.mrf.mxu0
  %v6739 = vadd.f32 0.0, %v6738
  %6740 = vmatmul.bf16.gmra.mxu0 %v6601
  %v6741 = vpop.f32.mrf.mxu0
  %v6742 = vadd.f32 0.0, %v6741
  %v6743 = vpop.f32.mrf.mxu0
  %v6744 = vadd.f32 0.0, %v6743
  %6745 = vmatmul.bf16.gmra.mxu0 %v6604
  %v6746 = vpop.f32.mrf.mxu0
  %v6747 = vadd.f32 0.0, %v6746
  %v6748 = vpop.f32.mrf.mxu0
  %v6749 = vadd.f32 0.0, %v6748
  %6750 = vmatmul.bf16.gmra.mxu0 %v6607
  %v6751 = vpop.f32.mrf.mxu0
  %v6752 = vadd.f32 0.0, %v6751
  %v6753 = vpop.f32.mrf.mxu0
  %v6754 = vadd.f32 0.0, %v6753
  %6755 = vmatmul.bf16.gmra.mxu0 %v6610
  %v6756 = vpop.f32.mrf.mxu0
  %v6757 = vadd.f32 0.0, %v6756
  %v6758 = vpop.f32.mrf.mxu0
  %v6759 = vadd.f32 0.0, %v6758
  %6760 = vmatmul.bf16.gmra.mxu0 %v6613
  %v6761 = vpop.f32.mrf.mxu0
  %v6762 = vadd.f32 0.0, %v6761
  %v6763 = vpop.f32.mrf.mxu0
  %v6764 = vadd.f32 0.0, %v6763
  %6765 = vmatmul.bf16.gmra.mxu0 %v6616
  %v6766 = vpop.f32.mrf.mxu0
  %v6767 = vadd.f32 0.0, %v6766
  %v6768 = vpop.f32.mrf.mxu0
  %v6769 = vadd.f32 0.0, %v6768
  %6770 = vmatmul.bf16.gmra.mxu0 %v6619
  %v6771 = vpop.f32.mrf.mxu0
  %v6772 = vadd.f32 0.0, %v6771
  %v6773 = vpop.f32.mrf.mxu0
  %v6774 = vadd.f32 0.0, %v6773
  %6775 = vmatmul.bf16.gmra.mxu0 %v6622
  %v6776 = vpop.f32.mrf.mxu0
  %v6777 = vadd.f32 0.0, %v6776
  %v6778 = vpop.f32.mrf.mxu0
  %v6779 = vadd.f32 0.0, %v6778
  %6780 = vmatmul.bf16.gmra.mxu0 %v6625
  %v6781 = vpop.f32.mrf.mxu0
  %v6782 = vadd.f32 0.0, %v6781
  %v6783 = vpop.f32.mrf.mxu0
  %v6784 = vadd.f32 0.0, %v6783
  %6785 = vmatmul.bf16.gmra.mxu0 %v6628
  %v6786 = vpop.f32.mrf.mxu0
  %v6787 = vadd.f32 0.0, %v6786
  %v6788 = vpop.f32.mrf.mxu0
  %v6789 = vadd.f32 0.0, %v6788
  %6790 = vmatmul.bf16.gmra.mxu0 %v6631
  %v6791 = vpop.f32.mrf.mxu0
  %v6792 = vadd.f32 0.0, %v6791
  %v6793 = vpop.f32.mrf.mxu0
  %v6794 = vadd.f32 0.0, %v6793
  %6795 = vmatmul.bf16.gmra.mxu0 %v6634
  %v6796 = vpop.f32.mrf.mxu0
  %v6797 = vadd.f32 0.0, %v6796
  %v6798 = vpop.f32.mrf.mxu0
  %v6799 = vadd.f32 0.0, %v6798
  %6800 = vmatmul.bf16.gmra.mxu0 %v6637
  %v6801 = vpop.f32.mrf.mxu0
  %v6802 = vadd.f32 0.0, %v6801
  %v6803 = vpop.f32.mrf.mxu0
  %v6804 = vadd.f32 0.0, %v6803
  %6805 = vmatmul.bf16.gmra.mxu0 %v6640
  %v6806 = vpop.f32.mrf.mxu0
  %v6807 = vadd.f32 0.0, %v6806
  %v6808 = vpop.f32.mrf.mxu0
  %v6809 = vadd.f32 0.0, %v6808
  %6810 = vmatmul.bf16.gmra.mxu0 %v6643
  %v6811 = vpop.f32.mrf.mxu0
  %v6812 = vadd.f32 0.0, %v6811
  %v6813 = vpop.f32.mrf.mxu0
  %v6814 = vadd.f32 0.0, %v6813
  %6815 = vmatmul.bf16.gmra.mxu0 %v6646
  %v6816 = vpop.f32.mrf.mxu0
  %v6817 = vadd.f32 0.0, %v6816
  %v6818 = vpop.f32.mrf.mxu0
  %v6819 = vadd.f32 0.0, %v6818
  %6820 = vdwg.mxu0
  %v6821 = vld [vmem:[%s2] sm:$0x1]
  %v6823 = vperm.slane %v6821, 0
  %v6825 = vmul.f32 %v6662, %v6823
  %v6826 = vmul.f32 %v6664, %v6823
  %v6827 = vmul.f32 %v6667, %v6823
  %v6828 = vmul.f32 %v6669, %v6823
  %v6829 = vmul.f32 %v6672, %v6823
  %v6830 = vmul.f32 %v6674, %v6823
  %v6831 = vmul.f32 %v6677, %v6823
  %v6832 = vmul.f32 %v6679, %v6823
  %v6833 = vmul.f32 %v6682, %v6823
  %v6834 = vmul.f32 %v6684, %v6823
  %v6835 = vmul.f32 %v6687, %v6823
  %v6836 = vmul.f32 %v6689, %v6823
  %v6837 = vmul.f32 %v6692, %v6823
  %v6838 = vmul.f32 %v6694, %v6823
  %v6839 = vmul.f32 %v6697, %v6823
  %v6840 = vmul.f32 %v6699, %v6823
  %v6841 = vmul.f32 %v6702, %v6823
  %v6842 = vmul.f32 %v6704, %v6823
  %v6843 = vmul.f32 %v6707, %v6823
  %v6844 = vmul.f32 %v6709, %v6823
  %v6845 = vmul.f32 %v6712, %v6823
  %v6846 = vmul.f32 %v6714, %v6823
  %v6847 = vmul.f32 %v6717, %v6823
  %v6848 = vmul.f32 %v6719, %v6823
  %v6849 = vmul.f32 %v6722, %v6823
  %v6850 = vmul.f32 %v6724, %v6823
  %v6851 = vmul.f32 %v6727, %v6823
  %v6852 = vmul.f32 %v6729, %v6823
  %v6853 = vmul.f32 %v6732, %v6823
  %v6854 = vmul.f32 %v6734, %v6823
  %v6855 = vmul.f32 %v6737, %v6823
  %v6856 = vmul.f32 %v6739, %v6823
  %v6857 = vmul.f32 %v6742, %v6823
  %v6858 = vmul.f32 %v6744, %v6823
  %v6859 = vmul.f32 %v6747, %v6823
  %v6860 = vmul.f32 %v6749, %v6823
  %v6861 = vmul.f32 %v6752, %v6823
  %v6862 = vmul.f32 %v6754, %v6823
  %v6863 = vmul.f32 %v6757, %v6823
  %v6864 = vmul.f32 %v6759, %v6823
  %v6865 = vmul.f32 %v6762, %v6823
  %v6866 = vmul.f32 %v6764, %v6823
  %v6867 = vmul.f32 %v6767, %v6823
  %v6868 = vmul.f32 %v6769, %v6823
  %v6869 = vmul.f32 %v6772, %v6823
  %v6870 = vmul.f32 %v6774, %v6823
  %v6871 = vmul.f32 %v6777, %v6823
  %v6872 = vmul.f32 %v6779, %v6823
  %v6873 = vmul.f32 %v6782, %v6823
  %v6874 = vmul.f32 %v6784, %v6823
  %v6875 = vmul.f32 %v6787, %v6823
  %v6876 = vmul.f32 %v6789, %v6823
  %v6877 = vmul.f32 %v6792, %v6823
  %v6878 = vmul.f32 %v6794, %v6823
  %v6879 = vmul.f32 %v6797, %v6823
  %v6880 = vmul.f32 %v6799, %v6823
  %v6881 = vmul.f32 %v6802, %v6823
  %v6882 = vmul.f32 %v6804, %v6823
  %v6883 = vmul.f32 %v6807, %v6823
  %v6884 = vmul.f32 %v6809, %v6823
  %v6885 = vmul.f32 %v6812, %v6823
  %v6886 = vmul.f32 %v6814, %v6823
  %v6887 = vmul.f32 %v6817, %v6823
  %v6888 = vmul.f32 %v6819, %v6823
  %v6889 = vld [vmem:[%s3] sm:$0x1]
  %v6891 = vperm.slane %v6889, 0
  %v6893 = vadd.f32 %v6825, %v6891
  %v6894 = vadd.f32 %v6826, %v6891
  %v6895 = vadd.f32 %v6827, %v6891
  %v6896 = vadd.f32 %v6828, %v6891
  %v6897 = vadd.f32 %v6829, %v6891
  %v6898 = vadd.f32 %v6830, %v6891
  %v6899 = vadd.f32 %v6831, %v6891
  %v6900 = vadd.f32 %v6832, %v6891
  %v6901 = vadd.f32 %v6833, %v6891
  %v6902 = vadd.f32 %v6834, %v6891
  %v6903 = vadd.f32 %v6835, %v6891
  %v6904 = vadd.f32 %v6836, %v6891
  %v6905 = vadd.f32 %v6837, %v6891
  %v6906 = vadd.f32 %v6838, %v6891
  %v6907 = vadd.f32 %v6839, %v6891
  %v6908 = vadd.f32 %v6840, %v6891
  %v6909 = vadd.f32 %v6841, %v6891
  %v6910 = vadd.f32 %v6842, %v6891
  %v6911 = vadd.f32 %v6843, %v6891
  %v6912 = vadd.f32 %v6844, %v6891
  %v6913 = vadd.f32 %v6845, %v6891
  %v6914 = vadd.f32 %v6846, %v6891
  %v6915 = vadd.f32 %v6847, %v6891
  %v6916 = vadd.f32 %v6848, %v6891
  %v6917 = vadd.f32 %v6849, %v6891
  %v6918 = vadd.f32 %v6850, %v6891
  %v6919 = vadd.f32 %v6851, %v6891
  %v6920 = vadd.f32 %v6852, %v6891
  %v6921 = vadd.f32 %v6853, %v6891
  %v6922 = vadd.f32 %v6854, %v6891
  %v6923 = vadd.f32 %v6855, %v6891
  %v6924 = vadd.f32 %v6856, %v6891
  %v6925 = vadd.f32 %v6857, %v6891
  %v6926 = vadd.f32 %v6858, %v6891
  %v6927 = vadd.f32 %v6859, %v6891
  %v6928 = vadd.f32 %v6860, %v6891
  %v6929 = vadd.f32 %v6861, %v6891
  %v6930 = vadd.f32 %v6862, %v6891
  %v6931 = vadd.f32 %v6863, %v6891
  %v6932 = vadd.f32 %v6864, %v6891
  %v6933 = vadd.f32 %v6865, %v6891
  %v6934 = vadd.f32 %v6866, %v6891
  %v6935 = vadd.f32 %v6867, %v6891
  %v6936 = vadd.f32 %v6868, %v6891
  %v6937 = vadd.f32 %v6869, %v6891
  %v6938 = vadd.f32 %v6870, %v6891
  %v6939 = vadd.f32 %v6871, %v6891
  %v6940 = vadd.f32 %v6872, %v6891
  %v6941 = vadd.f32 %v6873, %v6891
  %v6942 = vadd.f32 %v6874, %v6891
  %v6943 = vadd.f32 %v6875, %v6891
  %v6944 = vadd.f32 %v6876, %v6891
  %v6945 = vadd.f32 %v6877, %v6891
  %v6946 = vadd.f32 %v6878, %v6891
  %v6947 = vadd.f32 %v6879, %v6891
  %v6948 = vadd.f32 %v6880, %v6891
  %v6949 = vadd.f32 %v6881, %v6891
  %v6950 = vadd.f32 %v6882, %v6891
  %v6951 = vadd.f32 %v6883, %v6891
  %v6952 = vadd.f32 %v6884, %v6891
  %v6953 = vadd.f32 %v6885, %v6891
  %v6954 = vadd.f32 %v6886, %v6891
  %v6955 = vadd.f32 %v6887, %v6891
  %v6956 = vadd.f32 %v6888, %v6891
  %v6957 = vmax.f32 %v6893, 0.0
  %v6958 = vmax.f32 %v6894, 0.0
  %v6959 = vmax.f32 %v6895, 0.0
  %v6960 = vmax.f32 %v6896, 0.0
  %v6961 = vmax.f32 %v6897, 0.0
  %v6962 = vmax.f32 %v6898, 0.0
  %v6963 = vmax.f32 %v6899, 0.0
  %v6964 = vmax.f32 %v6900, 0.0
  %v6965 = vmax.f32 %v6901, 0.0
  %v6966 = vmax.f32 %v6902, 0.0
  %v6967 = vmax.f32 %v6903, 0.0
  %v6968 = vmax.f32 %v6904, 0.0
  %v6969 = vmax.f32 %v6905, 0.0
  %v6970 = vmax.f32 %v6906, 0.0
  %v6971 = vmax.f32 %v6907, 0.0
  %v6972 = vmax.f32 %v6908, 0.0
  %v6973 = vmax.f32 %v6909, 0.0
  %v6974 = vmax.f32 %v6910, 0.0
  %v6975 = vmax.f32 %v6911, 0.0
  %v6976 = vmax.f32 %v6912, 0.0
  %v6977 = vmax.f32 %v6913, 0.0
  %v6978 = vmax.f32 %v6914, 0.0
  %v6979 = vmax.f32 %v6915, 0.0
  %v6980 = vmax.f32 %v6916, 0.0
  %v6981 = vmax.f32 %v6917, 0.0
  %v6982 = vmax.f32 %v6918, 0.0
  %v6983 = vmax.f32 %v6919, 0.0
  %v6984 = vmax.f32 %v6920, 0.0
  %v6985 = vmax.f32 %v6921, 0.0
  %v6986 = vmax.f32 %v6922, 0.0
  %v6987 = vmax.f32 %v6923, 0.0
  %v6988 = vmax.f32 %v6924, 0.0
  %v6989 = vmax.f32 %v6925, 0.0
  %v6990 = vmax.f32 %v6926, 0.0
  %v6991 = vmax.f32 %v6927, 0.0
  %v6992 = vmax.f32 %v6928, 0.0
  %v6993 = vmax.f32 %v6929, 0.0
  %v6994 = vmax.f32 %v6930, 0.0
  %v6995 = vmax.f32 %v6931, 0.0
  %v6996 = vmax.f32 %v6932, 0.0
  %v6997 = vmax.f32 %v6933, 0.0
  %v6998 = vmax.f32 %v6934, 0.0
  %v6999 = vmax.f32 %v6935, 0.0
  %v7000 = vmax.f32 %v6936, 0.0
  %v7001 = vmax.f32 %v6937, 0.0
  %v7002 = vmax.f32 %v6938, 0.0
  %v7003 = vmax.f32 %v6939, 0.0
  %v7004 = vmax.f32 %v6940, 0.0
  %v7005 = vmax.f32 %v6941, 0.0
  %v7006 = vmax.f32 %v6942, 0.0
  %v7007 = vmax.f32 %v6943, 0.0
  %v7008 = vmax.f32 %v6944, 0.0
  %v7009 = vmax.f32 %v6945, 0.0
  %v7010 = vmax.f32 %v6946, 0.0
  %v7011 = vmax.f32 %v6947, 0.0
  %v7012 = vmax.f32 %v6948, 0.0
  %v7013 = vmax.f32 %v6949, 0.0
  %v7014 = vmax.f32 %v6950, 0.0
  %v7015 = vmax.f32 %v6951, 0.0
  %v7016 = vmax.f32 %v6952, 0.0
  %v7017 = vmax.f32 %v6953, 0.0
  %v7018 = vmax.f32 %v6954, 0.0
  %v7019 = vmax.f32 %v6955, 0.0
  %v7020 = vmax.f32 %v6956, 0.0
  %7021 = vst [vmem:[%s4] sm:$0xff] %v6957
  %7022 = vst [vmem:[%s4 + $0x8] sm:$0xff] %v6958
  %7023 = vst [vmem:[%s4 + $0x10] sm:$0xff] %v6959
  %7024 = vst [vmem:[%s4 + $0x18] sm:$0xff] %v6960
  %7025 = vst [vmem:[%s4 + $0x20] sm:$0xff] %v6961
  %7026 = vst [vmem:[%s4 + $0x28] sm:$0xff] %v6962
  %7027 = vst [vmem:[%s4 + $0x30] sm:$0xff] %v6963
  %7028 = vst [vmem:[%s4 + $0x38] sm:$0xff] %v6964
  %7029 = vst [vmem:[%s4 + $0x40] sm:$0xff] %v6965
  %7030 = vst [vmem:[%s4 + $0x48] sm:$0xff] %v6966
  %7031 = vst [vmem:[%s4 + $0x50] sm:$0xff] %v6967
  %7032 = vst [vmem:[%s4 + $0x58] sm:$0xff] %v6968
  %7033 = vst [vmem:[%s4 + $0x60] sm:$0xff] %v6969
  %7034 = vst [vmem:[%s4 + $0x68] sm:$0xff] %v6970
  %7035 = vst [vmem:[%s4 + $0x70] sm:$0xff] %v6971
  %7036 = vst [vmem:[%s4 + $0x78] sm:$0xff] %v6972
  %7037 = vst [vmem:[%s4 + $0x80] sm:$0xff] %v6973
  %7038 = vst [vmem:[%s4 + $0x88] sm:$0xff] %v6974
  %7039 = vst [vmem:[%s4 + $0x90] sm:$0xff] %v6975
  %7040 = vst [vmem:[%s4 + $0x98] sm:$0xff] %v6976
  %7041 = vst [vmem:[%s4 + $0xa0] sm:$0xff] %v6977
  %7042 = vst [vmem:[%s4 + $0xa8] sm:$0xff] %v6978
  %7043 = vst [vmem:[%s4 + $0xb0] sm:$0xff] %v6979
  %7044 = vst [vmem:[%s4 + $0xb8] sm:$0xff] %v6980
  %7045 = vst [vmem:[%s4 + $0xc0] sm:$0xff] %v6981
  %7046 = vst [vmem:[%s4 + $0xc8] sm:$0xff] %v6982
  %7047 = vst [vmem:[%s4 + $0xd0] sm:$0xff] %v6983
  %7048 = vst [vmem:[%s4 + $0xd8] sm:$0xff] %v6984
  %7049 = vst [vmem:[%s4 + $0xe0] sm:$0xff] %v6985
  %7050 = vst [vmem:[%s4 + $0xe8] sm:$0xff] %v6986
  %7051 = vst [vmem:[%s4 + $0xf0] sm:$0xff] %v6987
  %7052 = vst [vmem:[%s4 + $0xf8] sm:$0xff] %v6988
  %7053 = vst [vmem:[%s4 + $0x100] sm:$0xff] %v6989
  %7054 = vst [vmem:[%s4 + $0x108] sm:$0xff] %v6990
  %7055 = vst [vmem:[%s4 + $0x110] sm:$0xff] %v6991
  %7056 = vst [vmem:[%s4 + $0x118] sm:$0xff] %v6992
  %7057 = vst [vmem:[%s4 + $0x120] sm:$0xff] %v6993
  %7058 = vst [vmem:[%s4 + $0x128] sm:$0xff] %v6994
  %7059 = vst [vmem:[%s4 + $0x130] sm:$0xff] %v6995
  %7060 = vst [vmem:[%s4 + $0x138] sm:$0xff] %v6996
  %7061 = vst [vmem:[%s4 + $0x140] sm:$0xff] %v6997
  %7062 = vst [vmem:[%s4 + $0x148] sm:$0xff] %v6998
  %7063 = vst [vmem:[%s4 + $0x150] sm:$0xff] %v6999
  %7064 = vst [vmem:[%s4 + $0x158] sm:$0xff] %v7000
  %7065 = vst [vmem:[%s4 + $0x160] sm:$0xff] %v7001
  %7066 = vst [vmem:[%s4 + $0x168] sm:$0xff] %v7002
  %7067 = vst [vmem:[%s4 + $0x170] sm:$0xff] %v7003
  %7068 = vst [vmem:[%s4 + $0x178] sm:$0xff] %v7004
  %7069 = vst [vmem:[%s4 + $0x180] sm:$0xff] %v7005
  %7070 = vst [vmem:[%s4 + $0x188] sm:$0xff] %v7006
  %7071 = vst [vmem:[%s4 + $0x190] sm:$0xff] %v7007
  %7072 = vst [vmem:[%s4 + $0x198] sm:$0xff] %v7008
  %7073 = vst [vmem:[%s4 + $0x1a0] sm:$0xff] %v7009
  %7074 = vst [vmem:[%s4 + $0x1a8] sm:$0xff] %v7010
  %7075 = vst [vmem:[%s4 + $0x1b0] sm:$0xff] %v7011
  %7076 = vst [vmem:[%s4 + $0x1b8] sm:$0xff] %v7012
  %7077 = vst [vmem:[%s4 + $0x1c0] sm:$0xff] %v7013
  %7078 = vst [vmem:[%s4 + $0x1c8] sm:$0xff] %v7014
  %7079 = vst [vmem:[%s4 + $0x1d0] sm:$0xff] %v7015
  %7080 = vst [vmem:[%s4 + $0x1d8] sm:$0xff] %v7016
  %7081 = vst [vmem:[%s4 + $0x1e0] sm:$0xff] %v7017
  %7082 = vst [vmem:[%s4 + $0x1e8] sm:$0xff] %v7018
  %7083 = vst [vmem:[%s4 + $0x1f0] sm:$0xff] %v7019
  %7084 = vst [vmem:[%s4 + $0x1f8] sm:$0xff] %v7020
  // Predicated region
  $region18: #{conv_block.1} parent=0 // pred_check
    _
  $region19: #{conv_block.1} parent=0 // pred_check_branch
    %7086 = sbr.rel (0) target = $region21
  $region20: #{conv_block.1} parent=0 // pred_region
    _
  $region21: #{conv_block.1} parent=0 // pred_fallthru
    _
  // Predicated region
  $region22: #{conv_block.1} parent=0 // pred_check
    _
  $region23: #{conv_block.1} parent=0 // pred_check_branch
    %7088 = sbr.rel (0) target = $region25
  $region24: #{conv_block.1} parent=0 // pred_region
    _
  $region25: #{conv_block.1} parent=0 // pred_fallthru
    _

</llo_original>
